<compile_context>
chip_gen: v5e
topology: v5e:2x2
jax: 0.10.0
libtpu: 0.0.40
codegen_flags: <defaults>
</compile_context>

<pallas_src>
import jax
import jax.numpy as jnp
from jax.experimental import pallas as pl
from jax.experimental.pallas import tpu as pltpu

NOISE_DIM = 64             # noise_dim constructor arg (kept small / lane-friendly)
H1, H2, H3 = 256, 512, 1024
N_OUT = 28 * 28            # 784
N_OUT_PAD = 896            # 7 * 128 -> lane-dense output stores
MAX_BATCH_TILE = 256       # MXU height on v6e/v7x; 2x the v5e MXU height (still fine)

_SELU_ALPHA = 1.6732632423543772
_SELU_SCALE = 1.0507009873554805


def _selu(x):
    # Matches torch.nn.SELU constants; evaluated in f32.
    return _SELU_SCALE * jnp.where(x > 0, x, _SELU_ALPHA * (jnp.exp(x) - 1.0))


def _generator_kernel(x_ref,
                      w1_ref, b1_ref,
                      w2_ref, b2_ref,
                      w3_ref, b3_ref,
                      w4_ref, b4_ref,
                      o_ref):
    """Fused 4-layer MLP: bf16 MXU operands, f32 accumulation, f32 SELU/tanh."""
    h = x_ref[...].astype(jnp.bfloat16)

    a = jnp.dot(h, w1_ref[...], preferred_element_type=jnp.float32) + b1_ref[...]
    h = _selu(a).astype(jnp.bfloat16)

    a = jnp.dot(h, w2_ref[...], preferred_element_type=jnp.float32) + b2_ref[...]
    h = _selu(a).astype(jnp.bfloat16)

    a = jnp.dot(h, w3_ref[...], preferred_element_type=jnp.float32) + b3_ref[...]
    h = _selu(a).astype(jnp.bfloat16)

    a = jnp.dot(h, w4_ref[...], preferred_element_type=jnp.float32) + b4_ref[...]
    o_ref[...] = jnp.tanh(a).astype(o_ref.dtype)


def _round_up(x, m):
    return (x + m - 1) // m * m


def vanilla_generator_forward(noise, params):
    """noise: (B, noise_dim) f32. Returns (B, 1, 28, 28) f32, like the PyTorch module."""
    (w1, b1), (w2, b2), (w3, b3), (w4, b4) = params
    B, nd = noise.shape
    assert nd == NOISE_DIM

    # Weights -> bf16 (MXU native); biases stay f32 (added to the f32 accumulator).
    w1, w2, w3, w4 = (w.astype(jnp.bfloat16) for w in (w1, w2, w3, w4))
    b1, b2, b3, b4 = (b.astype(jnp.float32) for b in (b1, b2, b3, b4))

    # Pad the last layer's output features to a lane-dense 896 (zeros are sliced off).
    w4p = jnp.pad(w4, ((0, 0), (0, N_OUT_PAD - N_OUT)))
    b4p = jnp.pad(b4, ((0, 0), (0, N_OUT_PAD - N_OUT)))

    # Batch tiling: MXU-filling tiles for large batches; small batches are padded
    # up to a sublane multiple and run as a single tile.
    batch_tile = MAX_BATCH_TILE if B >= MAX_BATCH_TILE else _round_up(B, 8)
    B_pad = _round_up(B, batch_tile)
    if B_pad != B:
        noise = jnp.pad(noise, ((0, B_pad - B), (0, 0)))

    grid = (B_pad // batch_tile,)

    # Weights/biases are resident (constant block index every grid step).
    def const_spec(shape):
        return pl.BlockSpec(shape, lambda i: tuple(0 for _ in shape))

    out_flat = pl.pallas_call(
        _generator_kernel,
        out_shape=jax.ShapeDtypeStruct((B_pad, N_OUT_PAD), jnp.float32),
        grid_spec=pltpu.PrefetchScalarGridSpec(
            num_scalar_prefetch=0,
            grid=grid,
            in_specs=[
                pl.BlockSpec((batch_tile, NOISE_DIM), lambda i: (i, 0)),
                const_spec(w1.shape), const_spec(b1.shape),
                const_spec(w2.shape), const_spec(b2.shape),
                const_spec(w3.shape), const_spec(b3.shape),
                const_spec(w4p.shape), const_spec(b4p.shape),
            ],
            out_specs=pl.BlockSpec((batch_tile, N_OUT_PAD), lambda i: (i, 0)),
        ),
        compiler_params=pltpu.CompilerParams(
            dimension_semantics=("parallel",),
            vmem_limit_bytes=40 * 1024 * 1024,
        ),
    )(noise,
      w1, b1, w2, b2, w3, b3, w4p, b4p)

    # Drop batch / output-feature padding; PyTorch: output.view(-1, 1, 28, 28).
    return out_flat[:B, :N_OUT].reshape(-1, 1, 28, 28)


def init_params(key):
    """Deterministic init mimicking torch.nn.Linear default (uniform +/- 1/sqrt(fan_in)).
    Weights stored as (in_features, out_features); biases as (1, out_features); f32."""
    dims = [(NOISE_DIM, H1), (H1, H2), (H2, H3), (H3, N_OUT)]
    params = []
    for (fan_in, fan_out) in dims:
        key, kw, kb = jax.random.split(key, 3)
        bound = 1.0 / jnp.sqrt(fan_in)
        w = jax.random.uniform(kw, (fan_in, fan_out), jnp.float32, -bound, bound)
        b = jax.random.uniform(kb, (1, fan_out), jnp.float32, -bound, bound)
        params.append((w, b))
    return params


def _reference_forward_f32(noise, params):
    """Pure-JAX f32 reference (exact PyTorch math, full precision)."""
    h = noise
    for idx, (w, b) in enumerate(params):
        h = h @ w + b
        h = jnp.tanh(h) if idx == len(params) - 1 else _selu(h)
    return h.reshape(-1, 1, 28, 28)


def _reference_forward_bf16(noise, params):
    """Pure-JAX reference using the same bf16 weights / f32 accumulation as the kernel."""
    h = noise.astype(jnp.bfloat16)
    for idx, (w, b) in enumerate(params):
        a = jnp.dot(h, w.astype(jnp.bfloat16),
                    preferred_element_type=jnp.float32) + b.astype(jnp.float32)
        if idx == len(params) - 1:
            h = jnp.tanh(a)
        else:
            h = _selu(a).astype(jnp.bfloat16)
    return h.reshape(-1, 1, 28, 28)


if __name__ == "__main__":
    key = jax.random.PRNGKey(0)
    key, knoise = jax.random.split(key)
    params = init_params(key)

    # Small-batch check (single 8-row tile).
    B = 8
    noise = jax.random.normal(knoise, (B, NOISE_DIM), dtype=jnp.float32)
    out = jax.block_until_ready(vanilla_generator_forward(noise, params))
    assert out.shape == (B, 1, 28, 28), out.shape
    assert out.dtype == jnp.float32

    ref_q = _reference_forward_bf16(noise, params)
    assert jnp.allclose(out, ref_q, atol=1e-2, rtol=1e-2), \
        float(jnp.max(jnp.abs(out - ref_q)))
    ref_f = _reference_forward_f32(noise, params)
    assert jnp.allclose(out, ref_f, atol=1e-1), \
        float(jnp.max(jnp.abs(out - ref_f)))

    # Larger, non-multiple batch: exercises 256-row MXU tiles + batch padding + grid > 1.
    B2 = 264
    noise2 = jax.random.normal(jax.random.PRNGKey(1), (B2, NOISE_DIM), dtype=jnp.float32)
    out2 = jax.block_until_ready(vanilla_generator_forward(noise2, params))
    assert out2.shape == (B2, 1, 28, 28), out2.shape
    ref2 = _reference_forward_bf16(noise2, params)
    assert jnp.allclose(out2, ref2, atol=1e-2, rtol=1e-2), \
        float(jnp.max(jnp.abs(out2 - ref2)))

    print("KERNEL_OK")
</pallas_src>

<mosaic_0001>
module attributes {stable_mosaic.version = 11 : i64} {
  func.func @_generator_kernel(%arg0: i32, %arg1: memref<8x64xf32, #tpu.memory_space<vmem>>, %arg2: memref<64x256xbf16, #tpu.memory_space<vmem>>, %arg3: memref<1x256xf32, #tpu.memory_space<vmem>>, %arg4: memref<256x512xbf16, #tpu.memory_space<vmem>>, %arg5: memref<1x512xf32, #tpu.memory_space<vmem>>, %arg6: memref<512x1024xbf16, #tpu.memory_space<vmem>>, %arg7: memref<1x1024xf32, #tpu.memory_space<vmem>>, %arg8: memref<1024x896xbf16, #tpu.memory_space<vmem>>, %arg9: memref<1x896xf32, #tpu.memory_space<vmem>>, %arg10: memref<8x896xf32, #tpu.memory_space<vmem>>) attributes {dimension_semantics = [#tpu.dimension_semantics<parallel>], iteration_bounds = array<i64: 1>, scalar_prefetch = 0 : i64, scratch_operands = 0 : i64, tpu.core_type = #tpu.core_type<tc>, window_params = [{transform_indices = @transform_0, window_bounds = array<i64: 8, 64>}, {pipeline_mode = #tpu.pipeline_mode<synchronous>, transform_indices = @transform_1, window_bounds = array<i64: 64, 256>}, {pipeline_mode = #tpu.pipeline_mode<synchronous>, transform_indices = @transform_2, window_bounds = array<i64: 1, 256>}, {pipeline_mode = #tpu.pipeline_mode<synchronous>, transform_indices = @transform_3, window_bounds = array<i64: 256, 512>}, {pipeline_mode = #tpu.pipeline_mode<synchronous>, transform_indices = @transform_4, window_bounds = array<i64: 1, 512>}, {pipeline_mode = #tpu.pipeline_mode<synchronous>, transform_indices = @transform_5, window_bounds = array<i64: 512, 1024>}, {pipeline_mode = #tpu.pipeline_mode<synchronous>, transform_indices = @transform_6, window_bounds = array<i64: 1, 1024>}, {pipeline_mode = #tpu.pipeline_mode<synchronous>, transform_indices = @transform_7, window_bounds = array<i64: 1024, 896>}, {pipeline_mode = #tpu.pipeline_mode<synchronous>, transform_indices = @transform_8, window_bounds = array<i64: 1, 896>}, {transform_indices = @transform_9, window_bounds = array<i64: 8, 896>}]} {
    %c0 = arith.constant 0 : index
    %c0_0 = arith.constant 0 : index
    %0 = vector.load %arg1[%c0, %c0_0] : memref<8x64xf32, #tpu.memory_space<vmem>>, vector<8x64xf32>
    %1 = arith.truncf %0 : vector<8x64xf32> to vector<8x64xbf16>
    %c0_1 = arith.constant 0 : index
    %c0_2 = arith.constant 0 : index
    %2 = vector.load %arg2[%c0_1, %c0_2] : memref<64x256xbf16, #tpu.memory_space<vmem>>, vector<64x256xbf16>
    %cst = arith.constant dense<0.000000e+00> : vector<8x256xf32>
    %3 = tpu.matmul %1, %2, %cst {dimension_numbers = #tpu.dot_dimension_numbers<[1], [0], [0], [1], [0, 0, 1, 1], [], []>} : vector<8x64xbf16>, vector<64x256xbf16>, vector<8x256xf32> -> vector<8x256xf32>
    %c0_3 = arith.constant 0 : index
    %c0_4 = arith.constant 0 : index
    %4 = vector.load %arg3[%c0_3, %c0_4] : memref<1x256xf32, #tpu.memory_space<vmem>>, vector<1x256xf32>
    %5 = vector.broadcast %4 : vector<1x256xf32> to vector<8x256xf32>
    %6 = arith.addf %3, %5 : vector<8x256xf32>
    %cst_5 = arith.constant 0.000000e+00 : f32
    %7 = vector.broadcast %cst_5 : f32 to vector<8x256xf32>
    %8 = arith.cmpf ogt, %6, %7 : vector<8x256xf32>
    %9 = math.exp %6 : vector<8x256xf32>
    %cst_6 = arith.constant 1.000000e+00 : f32
    %10 = vector.broadcast %cst_6 : f32 to vector<8x256xf32>
    %11 = arith.subf %9, %10 : vector<8x256xf32>
    %cst_7 = arith.constant 1.67326319 : f32
    %12 = vector.broadcast %cst_7 : f32 to vector<8x256xf32>
    %13 = arith.mulf %12, %11 : vector<8x256xf32>
    %14 = arith.select %8, %6, %13 : vector<8x256xi1>, vector<8x256xf32>
    %cst_8 = arith.constant 1.05070102 : f32
    %15 = vector.broadcast %cst_8 : f32 to vector<8x256xf32>
    %16 = arith.mulf %15, %14 : vector<8x256xf32>
    %17 = arith.truncf %16 : vector<8x256xf32> to vector<8x256xbf16>
    %c0_9 = arith.constant 0 : index
    %c0_10 = arith.constant 0 : index
    %18 = vector.load %arg4[%c0_9, %c0_10] : memref<256x512xbf16, #tpu.memory_space<vmem>>, vector<256x512xbf16>
    %cst_11 = arith.constant dense<0.000000e+00> : vector<8x512xf32>
    %19 = tpu.matmul %17, %18, %cst_11 {dimension_numbers = #tpu.dot_dimension_numbers<[1], [0], [0], [1], [0, 0, 1, 1], [], []>} : vector<8x256xbf16>, vector<256x512xbf16>, vector<8x512xf32> -> vector<8x512xf32>
    %c0_12 = arith.constant 0 : index
    %c0_13 = arith.constant 0 : index
    %20 = vector.load %arg5[%c0_12, %c0_13] : memref<1x512xf32, #tpu.memory_space<vmem>>, vector<1x512xf32>
    %21 = vector.broadcast %20 : vector<1x512xf32> to vector<8x512xf32>
    %22 = arith.addf %19, %21 : vector<8x512xf32>
    %cst_14 = arith.constant 0.000000e+00 : f32
    %23 = vector.broadcast %cst_14 : f32 to vector<8x512xf32>
    %24 = arith.cmpf ogt, %22, %23 : vector<8x512xf32>
    %25 = math.exp %22 : vector<8x512xf32>
    %cst_15 = arith.constant 1.000000e+00 : f32
    %26 = vector.broadcast %cst_15 : f32 to vector<8x512xf32>
    %27 = arith.subf %25, %26 : vector<8x512xf32>
    %cst_16 = arith.constant 1.67326319 : f32
    %28 = vector.broadcast %cst_16 : f32 to vector<8x512xf32>
    %29 = arith.mulf %28, %27 : vector<8x512xf32>
    %30 = arith.select %24, %22, %29 : vector<8x512xi1>, vector<8x512xf32>
    %cst_17 = arith.constant 1.05070102 : f32
    %31 = vector.broadcast %cst_17 : f32 to vector<8x512xf32>
    %32 = arith.mulf %31, %30 : vector<8x512xf32>
    %33 = arith.truncf %32 : vector<8x512xf32> to vector<8x512xbf16>
    %c0_18 = arith.constant 0 : index
    %c0_19 = arith.constant 0 : index
    %34 = vector.load %arg6[%c0_18, %c0_19] : memref<512x1024xbf16, #tpu.memory_space<vmem>>, vector<512x1024xbf16>
    %cst_20 = arith.constant dense<0.000000e+00> : vector<8x1024xf32>
    %35 = tpu.matmul %33, %34, %cst_20 {dimension_numbers = #tpu.dot_dimension_numbers<[1], [0], [0], [1], [0, 0, 1, 1], [], []>} : vector<8x512xbf16>, vector<512x1024xbf16>, vector<8x1024xf32> -> vector<8x1024xf32>
    %c0_21 = arith.constant 0 : index
    %c0_22 = arith.constant 0 : index
    %36 = vector.load %arg7[%c0_21, %c0_22] : memref<1x1024xf32, #tpu.memory_space<vmem>>, vector<1x1024xf32>
    %37 = vector.broadcast %36 : vector<1x1024xf32> to vector<8x1024xf32>
    %38 = arith.addf %35, %37 : vector<8x1024xf32>
    %cst_23 = arith.constant 0.000000e+00 : f32
    %39 = vector.broadcast %cst_23 : f32 to vector<8x1024xf32>
    %40 = arith.cmpf ogt, %38, %39 : vector<8x1024xf32>
    %41 = math.exp %38 : vector<8x1024xf32>
    %cst_24 = arith.constant 1.000000e+00 : f32
    %42 = vector.broadcast %cst_24 : f32 to vector<8x1024xf32>
    %43 = arith.subf %41, %42 : vector<8x1024xf32>
    %cst_25 = arith.constant 1.67326319 : f32
    %44 = vector.broadcast %cst_25 : f32 to vector<8x1024xf32>
    %45 = arith.mulf %44, %43 : vector<8x1024xf32>
    %46 = arith.select %40, %38, %45 : vector<8x1024xi1>, vector<8x1024xf32>
    %cst_26 = arith.constant 1.05070102 : f32
    %47 = vector.broadcast %cst_26 : f32 to vector<8x1024xf32>
    %48 = arith.mulf %47, %46 : vector<8x1024xf32>
    %49 = arith.truncf %48 : vector<8x1024xf32> to vector<8x1024xbf16>
    %c0_27 = arith.constant 0 : index
    %c0_28 = arith.constant 0 : index
    %50 = vector.load %arg8[%c0_27, %c0_28] : memref<1024x896xbf16, #tpu.memory_space<vmem>>, vector<1024x896xbf16>
    %cst_29 = arith.constant dense<0.000000e+00> : vector<8x896xf32>
    %51 = tpu.matmul %49, %50, %cst_29 {dimension_numbers = #tpu.dot_dimension_numbers<[1], [0], [0], [1], [0, 0, 1, 1], [], []>} : vector<8x1024xbf16>, vector<1024x896xbf16>, vector<8x896xf32> -> vector<8x896xf32>
    %c0_30 = arith.constant 0 : index
    %c0_31 = arith.constant 0 : index
    %52 = vector.load %arg9[%c0_30, %c0_31] : memref<1x896xf32, #tpu.memory_space<vmem>>, vector<1x896xf32>
    %53 = vector.broadcast %52 : vector<1x896xf32> to vector<8x896xf32>
    %54 = arith.addf %51, %53 : vector<8x896xf32>
    %55 = math.tanh %54 : vector<8x896xf32>
    %c0_32 = arith.constant 0 : index
    %c0_33 = arith.constant 0 : index
    %56 = vector.load %arg10[%c0_32, %c0_33] : memref<8x896xf32, #tpu.memory_space<vmem>>, vector<8x896xf32>
    tpu.vector_store %arg10[%c0_32, %c0_33], %55 {strides = array<i32>} : memref<8x896xf32, #tpu.memory_space<vmem>>, vector<8x896xf32>,
    return
  }
  func.func @transform_0(%arg0: i32) -> (i32, i32) {
    %c0_i32 = arith.constant 0 : i32
    %c0_i32_0 = arith.constant 0 : i32
    return %arg0, %c0_i32 : i32, i32
  }
  func.func @transform_1(%arg0: i32) -> (i32, i32) {
    %c0_i32 = arith.constant 0 : i32
    %c0_i32_0 = arith.constant 0 : i32
    %c0_i32_1 = arith.constant 0 : i32
    return %c0_i32, %c0_i32_0 : i32, i32
  }
  func.func @transform_2(%arg0: i32) -> (i32, i32) {
    %c0_i32 = arith.constant 0 : i32
    %c0_i32_0 = arith.constant 0 : i32
    %c0_i32_1 = arith.constant 0 : i32
    return %c0_i32, %c0_i32_0 : i32, i32
  }
  func.func @transform_3(%arg0: i32) -> (i32, i32) {
    %c0_i32 = arith.constant 0 : i32
    %c0_i32_0 = arith.constant 0 : i32
    %c0_i32_1 = arith.constant 0 : i32
    return %c0_i32, %c0_i32_0 : i32, i32
  }
  func.func @transform_4(%arg0: i32) -> (i32, i32) {
    %c0_i32 = arith.constant 0 : i32
    %c0_i32_0 = arith.constant 0 : i32
    %c0_i32_1 = arith.constant 0 : i32
    return %c0_i32, %c0_i32_0 : i32, i32
  }
  func.func @transform_5(%arg0: i32) -> (i32, i32) {
    %c0_i32 = arith.constant 0 : i32
    %c0_i32_0 = arith.constant 0 : i32
    %c0_i32_1 = arith.constant 0 : i32
    return %c0_i32, %c0_i32_0 : i32, i32
  }
  func.func @transform_6(%arg0: i32) -> (i32, i32) {
    %c0_i32 = arith.constant 0 : i32
    %c0_i32_0 = arith.constant 0 : i32
    %c0_i32_1 = arith.constant 0 : i32
    return %c0_i32, %c0_i32_0 : i32, i32
  }
  func.func @transform_7(%arg0: i32) -> (i32, i32) {
    %c0_i32 = arith.constant 0 : i32
    %c0_i32_0 = arith.constant 0 : i32
    %c0_i32_1 = arith.constant 0 : i32
    return %c0_i32, %c0_i32_0 : i32, i32
  }
  func.func @transform_8(%arg0: i32) -> (i32, i32) {
    %c0_i32 = arith.constant 0 : i32
    %c0_i32_0 = arith.constant 0 : i32
    %c0_i32_1 = arith.constant 0 : i32
    return %c0_i32, %c0_i32_0 : i32, i32
  }
  func.func @transform_9(%arg0: i32) -> (i32, i32) {
    %c0_i32 = arith.constant 0 : i32
    %c0_i32_0 = arith.constant 0 : i32
    return %arg0, %c0_i32 : i32, i32
  }
}

</mosaic_0001>

<llo_original>
// kernel: tpu_custom_call.1
$region0: #{tpu_custom_call.1}
  #allocation0 [shape = 'u32[]', space=smem, size = 0x4, offset = 0x4, fixed_abs, tag = 'smem constant byte address 0x4 - core index']
  #allocation1 [shape = 'u32[72,128]{1,0:T(1,128)}', space=vmem, size = 0x9000, scoped, tag = 'internal scratch']
  %s0 = inlined_call_operand.hbm [shape: f32[8,64], index: 0, kind: input, shape index: {}]
  %s1 = inlined_call_operand.hbm [shape: bf16[64,256], index: 1, kind: input, shape index: {}]
  %s2 = inlined_call_operand.hbm [shape: f32[1,256], index: 2, kind: input, shape index: {}]
  %s3 = inlined_call_operand.hbm [shape: bf16[256,512], index: 3, kind: input, shape index: {}]
  %s4 = inlined_call_operand.hbm [shape: f32[1,512], index: 4, kind: input, shape index: {}]
  %s5 = inlined_call_operand.hbm [shape: bf16[512,1024], index: 5, kind: input, shape index: {}]
  %s6 = inlined_call_operand.hbm [shape: f32[1,1024], index: 6, kind: input, shape index: {}]
  %s7 = inlined_call_operand.hbm [shape: bf16[1024,896], index: 7, kind: input, shape index: {}]
  %s8 = inlined_call_operand.hbm [shape: f32[1,896], index: 8, kind: input, shape index: {}]
  %s9 = inlined_call_operand.hbm [shape: f32[8,896], index: 9, kind: output, shape index: {}]
  %s10 = sld [smem:[#allocation0]]
  $region82: #{tpu_custom_call.1} parent=0
    _
  %s12 = ssub.s32 1, %s10
  %s13 = scalar_select 0, %s12, %s10
  $region1: #{tpu_custom_call.1} parent=0
    #allocation2 [shape = 'u8[4096]{0}', space=vmem, size = 0x1000, scoped, tag = 'input window, operand 0, single buffered']
    #allocation3 [shape = 's32[1]{0}', space=sflag, size = 0x4, scoped, tag = 'scoped memory for tpu_custom_call.1']
    #allocation4 [shape = 's32[1]{0}', space=sflag, size = 0x4, scoped, tag = 'scoped memory for tpu_custom_call.1']
    #allocation5 [shape = 'u8[32768]{0}', space=vmem, size = 0x8000, scoped, tag = 'input window, operand 1, single buffered']
    #allocation6 [shape = 's32[1]{0}', space=sflag, size = 0x4, scoped, tag = 'scoped memory for tpu_custom_call.1']
    #allocation7 [shape = 'u8[1024]{0}', space=vmem, size = 0x400, scoped, tag = 'input window, operand 2, single buffered']
    #allocation8 [shape = 'u8[262144]{0}', space=vmem, size = 0x40000, scoped, tag = 'input window, operand 3, single buffered']
    #allocation9 [shape = 's32[1]{0}', space=sflag, size = 0x4, scoped, tag = 'scoped memory for tpu_custom_call.1']
    #allocation10 [shape = 'u8[2048]{0}', space=vmem, size = 0x800, scoped, tag = 'input window, operand 4, single buffered']
    #allocation11 [shape = 'u8[1048576]{0}', space=vmem, size = 0x100000, scoped, tag = 'input window, operand 5, single buffered']
    #allocation12 [shape = 's32[1]{0}', space=sflag, size = 0x4, scoped, tag = 'scoped memory for tpu_custom_call.1']
    #allocation13 [shape = 'u8[4096]{0}', space=vmem, size = 0x1000, scoped, tag = 'input window, operand 6, single buffered']
    #allocation14 [shape = 'u8[1835008]{0}', space=vmem, size = 0x1c0000, scoped, tag = 'input window, operand 7, single buffered']
    #allocation15 [shape = 's32[1]{0}', space=sflag, size = 0x4, scoped, tag = 'scoped memory for tpu_custom_call.1']
    #allocation16 [shape = 'u8[3584]{0}', space=vmem, size = 0x1000, scoped, tag = 'input window, operand 8, single buffered']
    #allocation17 [shape = 'u8[28672]{0}', space=vmem, size = 0x7000, scoped, tag = 'output window, operand 0, single buffered']
    %14 = vsyncpa [#allocation3], 0
    %15 = vsyncpa [#allocation6], 0
    %16 = vsyncpa [#allocation9], 0
    %17 = vsyncpa [#allocation12], 0
    %18 = vsyncpa [#allocation15], 0
    %19 = vsyncpa [#allocation4], 0
    // Predicated region
    $region2: #{tpu_custom_call.1} parent=1 // pred_check
      _
    $region3: #{tpu_custom_call.1} parent=1 // pred_check_branch
      %21 = sbr.rel (0) target = $region5
    $region4: #{tpu_custom_call.1} parent=1 // pred_region
      %23 = vsyncadd [#allocation3], 0
      %s25 = sshll.u32 %s0, 4
      %s26 = int_to_ptr.hbm [resolvable:$true] %s25
      %s27 = sshll.u32 [#allocation2], 4
      %s28 = int_to_ptr.vmem [resolvable:$true] %s27
      %30 = dma.hbm_to_vmem [thread:$0]  %s26, 128, %s28, [#allocation3]
    $region5: #{tpu_custom_call.1} parent=1 // pred_fallthru
      _
    // Predicated region
    $region6: #{tpu_custom_call.1} parent=1 // pred_check
      _
    $region7: #{tpu_custom_call.1} parent=1 // pred_check_branch
      %32 = sbr.rel (0) target = $region9
    $region8: #{tpu_custom_call.1} parent=1 // pred_region
      %34 = vsyncadd [#allocation6], 0
      %s35 = sshll.u32 %s1, 4
      %s36 = int_to_ptr.hbm [resolvable:$true] %s35
      %s37 = sshll.u32 [#allocation5], 4
      %s38 = int_to_ptr.vmem [resolvable:$true] %s37
      %43 = dma.hbm_to_vmem [thread:$0]  %s36, 1024, %s38, [#allocation6], 128, 128, 8
    $region9: #{tpu_custom_call.1} parent=1 // pred_fallthru
      _
    // Predicated region
    $region10: #{tpu_custom_call.1} parent=1 // pred_check
      _
    $region11: #{tpu_custom_call.1} parent=1 // pred_check_branch
      %45 = sbr.rel (0) target = $region13
    $region12: #{tpu_custom_call.1} parent=1 // pred_region
      %47 = vsyncadd [#allocation6], 0
      %s49 = sshll.u32 %s2, 4
      %s50 = int_to_ptr.hbm [resolvable:$true] %s49
      %s51 = sshll.u32 [#allocation7], 4
      %s52 = int_to_ptr.vmem [resolvable:$true] %s51
      %54 = dma.hbm_to_vmem [thread:$0]  %s50, 32, %s52, [#allocation6]
    $region13: #{tpu_custom_call.1} parent=1 // pred_fallthru
      _
    // Predicated region
    $region14: #{tpu_custom_call.1} parent=1 // pred_check
      _
    $region15: #{tpu_custom_call.1} parent=1 // pred_check_branch
      %56 = sbr.rel (0) target = $region17
    $region16: #{tpu_custom_call.1} parent=1 // pred_region
      %58 = vsyncadd [#allocation9], 0
      %s59 = sshll.u32 %s3, 4
      %s60 = int_to_ptr.hbm [resolvable:$true] %s59
      %s61 = sshll.u32 [#allocation8], 4
      %s62 = int_to_ptr.vmem [resolvable:$true] %s61
      %67 = dma.hbm_to_vmem [thread:$0]  %s60, 8192, %s62, [#allocation9], 256, 256, 16
    $region17: #{tpu_custom_call.1} parent=1 // pred_fallthru
      _
    // Predicated region
    $region18: #{tpu_custom_call.1} parent=1 // pred_check
      _
    $region19: #{tpu_custom_call.1} parent=1 // pred_check_branch
      %69 = sbr.rel (0) target = $region21
    $region20: #{tpu_custom_call.1} parent=1 // pred_region
      %71 = vsyncadd [#allocation9], 0
      %s73 = sshll.u32 %s4, 4
      %s74 = int_to_ptr.hbm [resolvable:$true] %s73
      %s75 = sshll.u32 [#allocation10], 4
      %s76 = int_to_ptr.vmem [resolvable:$true] %s75
      %78 = dma.hbm_to_vmem [thread:$0]  %s74, 64, %s76, [#allocation9]
    $region21: #{tpu_custom_call.1} parent=1 // pred_fallthru
      _
    // Predicated region
    $region22: #{tpu_custom_call.1} parent=1 // pred_check
      _
    $region23: #{tpu_custom_call.1} parent=1 // pred_check_branch
      %80 = sbr.rel (0) target = $region25
    $region24: #{tpu_custom_call.1} parent=1 // pred_region
      %82 = vsyncadd [#allocation12], 0
      %s83 = sshll.u32 %s5, 4
      %s84 = int_to_ptr.hbm [resolvable:$true] %s83
      %s85 = sshll.u32 [#allocation11], 4
      %s86 = int_to_ptr.vmem [resolvable:$true] %s85
      %91 = dma.hbm_to_vmem [thread:$0]  %s84, 32768, %s86, [#allocation12], 512, 512, 32
    $region25: #{tpu_custom_call.1} parent=1 // pred_fallthru
      _
    // Predicated region
    $region26: #{tpu_custom_call.1} parent=1 // pred_check
      _
    $region27: #{tpu_custom_call.1} parent=1 // pred_check_branch
      %93 = sbr.rel (0) target = $region29
    $region28: #{tpu_custom_call.1} parent=1 // pred_region
      %95 = vsyncadd [#allocation12], 0
      %s97 = sshll.u32 %s6, 4
      %s98 = int_to_ptr.hbm [resolvable:$true] %s97
      %s99 = sshll.u32 [#allocation13], 4
      %s100 = int_to_ptr.vmem [resolvable:$true] %s99
      %102 = dma.hbm_to_vmem [thread:$0]  %s98, 128, %s100, [#allocation12]
    $region29: #{tpu_custom_call.1} parent=1 // pred_fallthru
      _
    // Predicated region
    $region30: #{tpu_custom_call.1} parent=1 // pred_check
      _
    $region31: #{tpu_custom_call.1} parent=1 // pred_check_branch
      %104 = sbr.rel (0) target = $region33
    $region32: #{tpu_custom_call.1} parent=1 // pred_region
      %106 = vsyncadd [#allocation15], 0
      %s107 = sshll.u32 %s7, 4
      %s108 = int_to_ptr.hbm [resolvable:$true] %s107
      %s109 = sshll.u32 [#allocation14], 4
      %s110 = int_to_ptr.vmem [resolvable:$true] %s109
      %115 = dma.hbm_to_vmem [thread:$0]  %s108, 57344, %s110, [#allocation15], 448, 448, 28
    $region33: #{tpu_custom_call.1} parent=1 // pred_fallthru
      _
    // Predicated region
    $region34: #{tpu_custom_call.1} parent=1 // pred_check
      _
    $region35: #{tpu_custom_call.1} parent=1 // pred_check_branch
      %117 = sbr.rel (0) target = $region37
    $region36: #{tpu_custom_call.1} parent=1 // pred_region
      %119 = vsyncadd [#allocation15], 0
      %s121 = sshll.u32 %s8, 4
      %s122 = int_to_ptr.hbm [resolvable:$true] %s121
      %s123 = sshll.u32 [#allocation16], 4
      %s124 = int_to_ptr.vmem [resolvable:$true] %s123
      %126 = dma.hbm_to_vmem [thread:$0]  %s122, 112, %s124, [#allocation15]
    $region37: #{tpu_custom_call.1} parent=1 // pred_fallthru
      _
    // Predicated region
    $region38: #{tpu_custom_call.1} parent=1 // pred_check
      _
    $region39: #{tpu_custom_call.1} parent=1 // pred_check_branch
      %128 = sbr.rel (0) target = $region41
    $region40: #{tpu_custom_call.1} parent=1 // pred_region
      %130 = dma.done [#allocation3], 128
    $region41: #{tpu_custom_call.1} parent=1 // pred_fallthru
      _
    // Predicated region
    $region42: #{tpu_custom_call.1} parent=1 // pred_check
      _
    $region43: #{tpu_custom_call.1} parent=1 // pred_check_branch
      %132 = sbr.rel (0) target = $region45
    $region44: #{tpu_custom_call.1} parent=1 // pred_region
      %134 = dma.done [#allocation6], 1024
    $region45: #{tpu_custom_call.1} parent=1 // pred_fallthru
      _
    // Predicated region
    $region46: #{tpu_custom_call.1} parent=1 // pred_check
      _
    $region47: #{tpu_custom_call.1} parent=1 // pred_check_branch
      %136 = sbr.rel (0) target = $region49
    $region48: #{tpu_custom_call.1} parent=1 // pred_region
      %138 = dma.done [#allocation6], 32
    $region49: #{tpu_custom_call.1} parent=1 // pred_fallthru
      _
    // Predicated region
    $region50: #{tpu_custom_call.1} parent=1 // pred_check
      _
    $region51: #{tpu_custom_call.1} parent=1 // pred_check_branch
      %140 = sbr.rel (0) target = $region53
    $region52: #{tpu_custom_call.1} parent=1 // pred_region
      %142 = dma.done [#allocation9], 8192
    $region53: #{tpu_custom_call.1} parent=1 // pred_fallthru
      _
    // Predicated region
    $region54: #{tpu_custom_call.1} parent=1 // pred_check
      _
    $region55: #{tpu_custom_call.1} parent=1 // pred_check_branch
      %144 = sbr.rel (0) target = $region57
    $region56: #{tpu_custom_call.1} parent=1 // pred_region
      %146 = dma.done [#allocation9], 64
    $region57: #{tpu_custom_call.1} parent=1 // pred_fallthru
      _
    // Predicated region
    $region58: #{tpu_custom_call.1} parent=1 // pred_check
      _
    $region59: #{tpu_custom_call.1} parent=1 // pred_check_branch
      %148 = sbr.rel (0) target = $region61
    $region60: #{tpu_custom_call.1} parent=1 // pred_region
      %150 = dma.done [#allocation12], 32768
    $region61: #{tpu_custom_call.1} parent=1 // pred_fallthru
      _
    // Predicated region
    $region62: #{tpu_custom_call.1} parent=1 // pred_check
      _
    $region63: #{tpu_custom_call.1} parent=1 // pred_check_branch
      %152 = sbr.rel (0) target = $region65
    $region64: #{tpu_custom_call.1} parent=1 // pred_region
      %154 = dma.done [#allocation12], 128
    $region65: #{tpu_custom_call.1} parent=1 // pred_fallthru
      _
    // Predicated region
    $region66: #{tpu_custom_call.1} parent=1 // pred_check
      _
    $region67: #{tpu_custom_call.1} parent=1 // pred_check_branch
      %156 = sbr.rel (0) target = $region69
    $region68: #{tpu_custom_call.1} parent=1 // pred_region
      %158 = dma.done [#allocation15], 57344
    $region69: #{tpu_custom_call.1} parent=1 // pred_fallthru
      _
    // Predicated region
    $region70: #{tpu_custom_call.1} parent=1 // pred_check
      _
    $region71: #{tpu_custom_call.1} parent=1 // pred_check_branch
      %160 = sbr.rel (0) target = $region73
    $region72: #{tpu_custom_call.1} parent=1 // pred_region
      %162 = dma.done [#allocation15], 112
    $region73: #{tpu_custom_call.1} parent=1 // pred_fallthru
      _
    %v164 = vld [vmem:[#allocation2] sm:$0xff]
    %v165 = vpack.c.bf16 %v164, %v164
    %v166 = vld [vmem:[#allocation5] sm:$0xff]
    %v167 = vld [vmem:[#allocation5 + $0x8] sm:$0xff]
    %v168 = vld [vmem:[#allocation5 + $0x10] sm:$0xff]
    %v169 = vld [vmem:[#allocation5 + $0x18] sm:$0xff]
    %v170 = vld [vmem:[#allocation5 + $0x20] sm:$0xff]
    %v171 = vld [vmem:[#allocation5 + $0x28] sm:$0xff]
    %v172 = vld [vmem:[#allocation5 + $0x30] sm:$0xff]
    %v173 = vld [vmem:[#allocation5 + $0x38] sm:$0xff]
    %v174 = vld [vmem:[#allocation7] sm:$0x3]
    %v176 = vperm.slane %v174, 0
    %v177 = vperm.slane %v174, 1
    %v188 = vunpack.c.l.b16 %v166
    %v189 = vunpack.c.h.b16 %v166
    %v190 = vunpack.c.l.b16 %v167
    %v191 = vunpack.c.h.b16 %v167
    %v192 = vunpack.c.l.b16 %v168
    %v193 = vunpack.c.h.b16 %v168
    %v194 = vunpack.c.l.b16 %v169
    %v195 = vunpack.c.h.b16 %v169
    %v196 = vunpack.c.l.b16 %v170
    %v197 = vunpack.c.h.b16 %v170
    %v198 = vunpack.c.l.b16 %v171
    %v199 = vunpack.c.h.b16 %v171
    %v200 = vunpack.c.l.b16 %v172
    %v201 = vunpack.c.h.b16 %v172
    %v202 = vunpack.c.l.b16 %v173
    %v203 = vunpack.c.h.b16 %v173
    %v204 = vpack.c.b16 %v190, %v188
    %v205 = vpack.c.b16 %v191, %v189
    %v206 = vpack.c.b16 %v194, %v192
    %v207 = vpack.c.b16 %v195, %v193
    %v208 = vpack.c.b16 %v198, %v196
    %v209 = vpack.c.b16 %v199, %v197
    %v210 = vpack.c.b16 %v202, %v200
    %v211 = vpack.c.b16 %v203, %v201
    %vm220 = vcmask 523264
    %v222 = vsel %vm220, %v165, 0
    %224 = vmatpush.bf16.msra.mxu0 0
    %225 = vmatpush.bf16.msra.mxu0 0
    %226 = vmatpush.bf16.msra.mxu0 0
    %227 = vmatpush.bf16.msra.mxu0 0
    %228 = vmatpush.bf16.msra.mxu0 %v210
    %229 = vmatpush.bf16.msra.mxu0 %v208
    %230 = vmatpush.bf16.msra.mxu0 %v206
    %231 = vmatpush.bf16.msra.mxu0 %v204
    %232 = vmatmul.bf16.gmra.mxu0 %v222
    %v233 = vpop.f32.mrf.mxu0
    %v234 = vadd.f32 %v176, %v233
    %v235 = vpop.f32.mrf.mxu0
    %236 = vdwg.mxu0
    %237 = vmatpush.bf16.msra.mxu0 0
    %238 = vmatpush.bf16.msra.mxu0 0
    %239 = vmatpush.bf16.msra.mxu0 0
    %240 = vmatpush.bf16.msra.mxu0 0
    %241 = vmatpush.bf16.msra.mxu0 %v211
    %242 = vmatpush.bf16.msra.mxu0 %v209
    %243 = vmatpush.bf16.msra.mxu0 %v207
    %244 = vmatpush.bf16.msra.mxu0 %v205
    %245 = vmatmul.bf16.gmra.mxu0 %v222
    %v246 = vpop.f32.mrf.mxu0
    %v247 = vadd.f32 %v177, %v246
    %v248 = vpop.f32.mrf.mxu0
    %249 = vdwg.mxu0
    %vm250 = vcmp.gt.f32.partialorder %v234, 0.0
    %vm251 = vcmp.gt.f32.partialorder %v247, 0.0
    %v252 = vmul.f32 %v234, 1.442695
    %v253 = vpow.pop %v252
    %v254 = vmul.f32 %v247, 1.442695
    %v255 = vpow.pop %v254
    %v256 = vsub.f32 %v253, 1.0
    %v257 = vsub.f32 %v255, 1.0
    %v258 = vmul.f32 %v256, 1.6732632
    %v259 = vmul.f32 %v257, 1.6732632
    %v260 = vsel %vm250, %v234, %v258
    %v261 = vsel %vm251, %v247, %v259
    %v262 = vmul.f32 %v260, 1.050701
    %v263 = vmul.f32 %v261, 1.050701
    %v264 = vpack.c.bf16 %v262, %v262
    %v265 = vpack.c.bf16 %v263, %v263
    %v266 = vld [vmem:[#allocation8] sm:$0xff]
    %v267 = vld [vmem:[#allocation8 + $0x8] sm:$0xff]
    %v268 = vld [vmem:[#allocation8 + $0x10] sm:$0xff]
    %v269 = vld [vmem:[#allocation8 + $0x18] sm:$0xff]
    %v270 = vld [vmem:[#allocation8 + $0x20] sm:$0xff]
    %v271 = vld [vmem:[#allocation8 + $0x28] sm:$0xff]
    %v272 = vld [vmem:[#allocation8 + $0x30] sm:$0xff]
    %v273 = vld [vmem:[#allocation8 + $0x38] sm:$0xff]
    %v274 = vld [vmem:[#allocation8 + $0x40] sm:$0xff]
    %v275 = vld [vmem:[#allocation8 + $0x48] sm:$0xff]
    %v276 = vld [vmem:[#allocation8 + $0x50] sm:$0xff]
    %v277 = vld [vmem:[#allocation8 + $0x58] sm:$0xff]
    %v278 = vld [vmem:[#allocation8 + $0x60] sm:$0xff]
    %v279 = vld [vmem:[#allocation8 + $0x68] sm:$0xff]
    %v280 = vld [vmem:[#allocation8 + $0x70] sm:$0xff]
    %v281 = vld [vmem:[#allocation8 + $0x78] sm:$0xff]
    %v282 = vld [vmem:[#allocation8 + $0x80] sm:$0xff]
    %v283 = vld [vmem:[#allocation8 + $0x88] sm:$0xff]
    %v284 = vld [vmem:[#allocation8 + $0x90] sm:$0xff]
    %v285 = vld [vmem:[#allocation8 + $0x98] sm:$0xff]
    %v286 = vld [vmem:[#allocation8 + $0xa0] sm:$0xff]
    %v287 = vld [vmem:[#allocation8 + $0xa8] sm:$0xff]
    %v288 = vld [vmem:[#allocation8 + $0xb0] sm:$0xff]
    %v289 = vld [vmem:[#allocation8 + $0xb8] sm:$0xff]
    %v290 = vld [vmem:[#allocation8 + $0xc0] sm:$0xff]
    %v291 = vld [vmem:[#allocation8 + $0xc8] sm:$0xff]
    %v292 = vld [vmem:[#allocation8 + $0xd0] sm:$0xff]
    %v293 = vld [vmem:[#allocation8 + $0xd8] sm:$0xff]
    %v294 = vld [vmem:[#allocation8 + $0xe0] sm:$0xff]
    %v295 = vld [vmem:[#allocation8 + $0xe8] sm:$0xff]
    %v296 = vld [vmem:[#allocation8 + $0xf0] sm:$0xff]
    %v297 = vld [vmem:[#allocation8 + $0xf8] sm:$0xff]
    %v298 = vld [vmem:[#allocation8 + $0x100] sm:$0xff]
    %v299 = vld [vmem:[#allocation8 + $0x108] sm:$0xff]
    %v300 = vld [vmem:[#allocation8 + $0x110] sm:$0xff]
    %v301 = vld [vmem:[#allocation8 + $0x118] sm:$0xff]
    %v302 = vld [vmem:[#allocation8 + $0x120] sm:$0xff]
    %v303 = vld [vmem:[#allocation8 + $0x128] sm:$0xff]
    %v304 = vld [vmem:[#allocation8 + $0x130] sm:$0xff]
    %v305 = vld [vmem:[#allocation8 + $0x138] sm:$0xff]
    %v306 = vld [vmem:[#allocation8 + $0x140] sm:$0xff]
    %v307 = vld [vmem:[#allocation8 + $0x148] sm:$0xff]
    %v308 = vld [vmem:[#allocation8 + $0x150] sm:$0xff]
    %v309 = vld [vmem:[#allocation8 + $0x158] sm:$0xff]
    %v310 = vld [vmem:[#allocation8 + $0x160] sm:$0xff]
    %v311 = vld [vmem:[#allocation8 + $0x168] sm:$0xff]
    %v312 = vld [vmem:[#allocation8 + $0x170] sm:$0xff]
    %v313 = vld [vmem:[#allocation8 + $0x178] sm:$0xff]
    %v314 = vld [vmem:[#allocation8 + $0x180] sm:$0xff]
    %v315 = vld [vmem:[#allocation8 + $0x188] sm:$0xff]
    %v316 = vld [vmem:[#allocation8 + $0x190] sm:$0xff]
    %v317 = vld [vmem:[#allocation8 + $0x198] sm:$0xff]
    %v318 = vld [vmem:[#allocation8 + $0x1a0] sm:$0xff]
    %v319 = vld [vmem:[#allocation8 + $0x1a8] sm:$0xff]
    %v320 = vld [vmem:[#allocation8 + $0x1b0] sm:$0xff]
    %v321 = vld [vmem:[#allocation8 + $0x1b8] sm:$0xff]
    %v322 = vld [vmem:[#allocation8 + $0x1c0] sm:$0xff]
    %v323 = vld [vmem:[#allocation8 + $0x1c8] sm:$0xff]
    %v324 = vld [vmem:[#allocation8 + $0x1d0] sm:$0xff]
    %v325 = vld [vmem:[#allocation8 + $0x1d8] sm:$0xff]
    %v326 = vld [vmem:[#allocation8 + $0x1e0] sm:$0xff]
    %v327 = vld [vmem:[#allocation8 + $0x1e8] sm:$0xff]
    %v328 = vld [vmem:[#allocation8 + $0x1f0] sm:$0xff]
    %v329 = vld [vmem:[#allocation8 + $0x1f8] sm:$0xff]
    %v330 = vld [vmem:[#allocation10] sm:$0xf]
    %v332 = vperm.slane %v330, 0
    %v333 = vperm.slane %v330, 1
    %v334 = vperm.slane %v330, 2
    %v335 = vperm.slane %v330, 3
    %v404 = vunpack.c.l.b16 %v266
    %v405 = vunpack.c.h.b16 %v266
    %v406 = vunpack.c.l.b16 %v267
    %v407 = vunpack.c.h.b16 %v267
    %v408 = vunpack.c.l.b16 %v268
    %v409 = vunpack.c.h.b16 %v268
    %v410 = vunpack.c.l.b16 %v269
    %v411 = vunpack.c.h.b16 %v269
    %v412 = vunpack.c.l.b16 %v270
    %v413 = vunpack.c.h.b16 %v270
    %v414 = vunpack.c.l.b16 %v271
    %v415 = vunpack.c.h.b16 %v271
    %v416 = vunpack.c.l.b16 %v272
    %v417 = vunpack.c.h.b16 %v272
    %v418 = vunpack.c.l.b16 %v273
    %v419 = vunpack.c.h.b16 %v273
    %v420 = vunpack.c.l.b16 %v274
    %v421 = vunpack.c.h.b16 %v274
    %v422 = vunpack.c.l.b16 %v275
    %v423 = vunpack.c.h.b16 %v275
    %v424 = vunpack.c.l.b16 %v276
    %v425 = vunpack.c.h.b16 %v276
    %v426 = vunpack.c.l.b16 %v277
    %v427 = vunpack.c.h.b16 %v277
    %v428 = vunpack.c.l.b16 %v278
    %v429 = vunpack.c.h.b16 %v278
    %v430 = vunpack.c.l.b16 %v279
    %v431 = vunpack.c.h.b16 %v279
    %v432 = vunpack.c.l.b16 %v280
    %v433 = vunpack.c.h.b16 %v280
    %v434 = vunpack.c.l.b16 %v281
    %v435 = vunpack.c.h.b16 %v281
    %v436 = vunpack.c.l.b16 %v282
    %v437 = vunpack.c.h.b16 %v282
    %v438 = vunpack.c.l.b16 %v283
    %v439 = vunpack.c.h.b16 %v283
    %v440 = vunpack.c.l.b16 %v284
    %v441 = vunpack.c.h.b16 %v284
    %v442 = vunpack.c.l.b16 %v285
    %v443 = vunpack.c.h.b16 %v285
    %v444 = vunpack.c.l.b16 %v286
    %v445 = vunpack.c.h.b16 %v286
    %v446 = vunpack.c.l.b16 %v287
    %v447 = vunpack.c.h.b16 %v287
    %v448 = vunpack.c.l.b16 %v288
    %v449 = vunpack.c.h.b16 %v288
    %v450 = vunpack.c.l.b16 %v289
    %v451 = vunpack.c.h.b16 %v289
    %v452 = vunpack.c.l.b16 %v290
    %v453 = vunpack.c.h.b16 %v290
    %v454 = vunpack.c.l.b16 %v291
    %v455 = vunpack.c.h.b16 %v291
    %v456 = vunpack.c.l.b16 %v292
    %v457 = vunpack.c.h.b16 %v292
    %v458 = vunpack.c.l.b16 %v293
    %v459 = vunpack.c.h.b16 %v293
    %v460 = vunpack.c.l.b16 %v294
    %v461 = vunpack.c.h.b16 %v294
    %v462 = vunpack.c.l.b16 %v295
    %v463 = vunpack.c.h.b16 %v295
    %v464 = vunpack.c.l.b16 %v296
    %v465 = vunpack.c.h.b16 %v296
    %v466 = vunpack.c.l.b16 %v297
    %v467 = vunpack.c.h.b16 %v297
    %v468 = vunpack.c.l.b16 %v298
    %v469 = vunpack.c.h.b16 %v298
    %v470 = vunpack.c.l.b16 %v299
    %v471 = vunpack.c.h.b16 %v299
    %v472 = vunpack.c.l.b16 %v300
    %v473 = vunpack.c.h.b16 %v300
    %v474 = vunpack.c.l.b16 %v301
    %v475 = vunpack.c.h.b16 %v301
    %v476 = vunpack.c.l.b16 %v302
    %v477 = vunpack.c.h.b16 %v302
    %v478 = vunpack.c.l.b16 %v303
    %v479 = vunpack.c.h.b16 %v303
    %v480 = vunpack.c.l.b16 %v304
    %v481 = vunpack.c.h.b16 %v304
    %v482 = vunpack.c.l.b16 %v305
    %v483 = vunpack.c.h.b16 %v305
    %v484 = vunpack.c.l.b16 %v306
    %v485 = vunpack.c.h.b16 %v306
    %v486 = vunpack.c.l.b16 %v307
    %v487 = vunpack.c.h.b16 %v307
    %v488 = vunpack.c.l.b16 %v308
    %v489 = vunpack.c.h.b16 %v308
    %v490 = vunpack.c.l.b16 %v309
    %v491 = vunpack.c.h.b16 %v309
    %v492 = vunpack.c.l.b16 %v310
    %v493 = vunpack.c.h.b16 %v310
    %v494 = vunpack.c.l.b16 %v311
    %v495 = vunpack.c.h.b16 %v311
    %v496 = vunpack.c.l.b16 %v312
    %v497 = vunpack.c.h.b16 %v312
    %v498 = vunpack.c.l.b16 %v313
    %v499 = vunpack.c.h.b16 %v313
    %v500 = vunpack.c.l.b16 %v314
    %v501 = vunpack.c.h.b16 %v314
    %v502 = vunpack.c.l.b16 %v315
    %v503 = vunpack.c.h.b16 %v315
    %v504 = vunpack.c.l.b16 %v316
    %v505 = vunpack.c.h.b16 %v316
    %v506 = vunpack.c.l.b16 %v317
    %v507 = vunpack.c.h.b16 %v317
    %v508 = vunpack.c.l.b16 %v318
    %v509 = vunpack.c.h.b16 %v318
    %v510 = vunpack.c.l.b16 %v319
    %v511 = vunpack.c.h.b16 %v319
    %v512 = vunpack.c.l.b16 %v320
    %v513 = vunpack.c.h.b16 %v320
    %v514 = vunpack.c.l.b16 %v321
    %v515 = vunpack.c.h.b16 %v321
    %v516 = vunpack.c.l.b16 %v322
    %v517 = vunpack.c.h.b16 %v322
    %v518 = vunpack.c.l.b16 %v323
    %v519 = vunpack.c.h.b16 %v323
    %v520 = vunpack.c.l.b16 %v324
    %v521 = vunpack.c.h.b16 %v324
    %v522 = vunpack.c.l.b16 %v325
    %v523 = vunpack.c.h.b16 %v325
    %v524 = vunpack.c.l.b16 %v326
    %v525 = vunpack.c.h.b16 %v326
    %v526 = vunpack.c.l.b16 %v327
    %v527 = vunpack.c.h.b16 %v327
    %v528 = vunpack.c.l.b16 %v328
    %v529 = vunpack.c.h.b16 %v328
    %v530 = vunpack.c.l.b16 %v329
    %v531 = vunpack.c.h.b16 %v329
    %v532 = vpack.c.b16 %v408, %v404
    %v533 = vpack.c.b16 %v409, %v405
    %v534 = vpack.c.b16 %v410, %v406
    %v535 = vpack.c.b16 %v411, %v407
    %v536 = vpack.c.b16 %v416, %v412
    %v537 = vpack.c.b16 %v417, %v413
    %v538 = vpack.c.b16 %v418, %v414
    %v539 = vpack.c.b16 %v419, %v415
    %v540 = vpack.c.b16 %v424, %v420
    %v541 = vpack.c.b16 %v425, %v421
    %v542 = vpack.c.b16 %v426, %v422
    %v543 = vpack.c.b16 %v427, %v423
    %v544 = vpack.c.b16 %v432, %v428
    %v545 = vpack.c.b16 %v433, %v429
    %v546 = vpack.c.b16 %v434, %v430
    %v547 = vpack.c.b16 %v435, %v431
    %v548 = vpack.c.b16 %v440, %v436
    %v549 = vpack.c.b16 %v441, %v437
    %v550 = vpack.c.b16 %v442, %v438
    %v551 = vpack.c.b16 %v443, %v439
    %v552 = vpack.c.b16 %v448, %v444
    %v553 = vpack.c.b16 %v449, %v445
    %v554 = vpack.c.b16 %v450, %v446
    %v555 = vpack.c.b16 %v451, %v447
    %v556 = vpack.c.b16 %v456, %v452
    %v557 = vpack.c.b16 %v457, %v453
    %v558 = vpack.c.b16 %v458, %v454
    %v559 = vpack.c.b16 %v459, %v455
    %v560 = vpack.c.b16 %v464, %v460
    %v561 = vpack.c.b16 %v465, %v461
    %v562 = vpack.c.b16 %v466, %v462
    %v563 = vpack.c.b16 %v467, %v463
    %v564 = vpack.c.b16 %v472, %v468
    %v565 = vpack.c.b16 %v473, %v469
    %v566 = vpack.c.b16 %v474, %v470
    %v567 = vpack.c.b16 %v475, %v471
    %v568 = vpack.c.b16 %v480, %v476
    %v569 = vpack.c.b16 %v481, %v477
    %v570 = vpack.c.b16 %v482, %v478
    %v571 = vpack.c.b16 %v483, %v479
    %v572 = vpack.c.b16 %v488, %v484
    %v573 = vpack.c.b16 %v489, %v485
    %v574 = vpack.c.b16 %v490, %v486
    %v575 = vpack.c.b16 %v491, %v487
    %v576 = vpack.c.b16 %v496, %v492
    %v577 = vpack.c.b16 %v497, %v493
    %v578 = vpack.c.b16 %v498, %v494
    %v579 = vpack.c.b16 %v499, %v495
    %v580 = vpack.c.b16 %v504, %v500
    %v581 = vpack.c.b16 %v505, %v501
    %v582 = vpack.c.b16 %v506, %v502
    %v583 = vpack.c.b16 %v507, %v503
    %v584 = vpack.c.b16 %v512, %v508
    %v585 = vpack.c.b16 %v513, %v509
    %v586 = vpack.c.b16 %v514, %v510
    %v587 = vpack.c.b16 %v515, %v511
    %v588 = vpack.c.b16 %v520, %v516
    %v589 = vpack.c.b16 %v521, %v517
    %v590 = vpack.c.b16 %v522, %v518
    %v591 = vpack.c.b16 %v523, %v519
    %v592 = vpack.c.b16 %v528, %v524
    %v593 = vpack.c.b16 %v529, %v525
    %v594 = vpack.c.b16 %v530, %v526
    %v595 = vpack.c.b16 %v531, %v527
    %660 = vmatpush.bf16.msra.mxu0 %v560
    %661 = vmatpush.bf16.msra.mxu0 %v556
    %662 = vmatpush.bf16.msra.mxu0 %v552
    %663 = vmatpush.bf16.msra.mxu0 %v548
    %664 = vmatpush.bf16.msra.mxu0 %v544
    %665 = vmatpush.bf16.msra.mxu0 %v540
    %666 = vmatpush.bf16.msra.mxu0 %v536
    %667 = vmatpush.bf16.msra.mxu0 %v532
    %668 = vmatmul.bf16.gmra.mxu0 %v264
    %v669 = vpop.f32.mrf.mxu0
    %v670 = vadd.f32 %v332, %v669
    %v671 = vpop.f32.mrf.mxu0
    %672 = vdwg.mxu0
    %673 = vmatpush.bf16.msra.mxu0 %v592
    %674 = vmatpush.bf16.msra.mxu0 %v588
    %675 = vmatpush.bf16.msra.mxu0 %v584
    %676 = vmatpush.bf16.msra.mxu0 %v580
    %677 = vmatpush.bf16.msra.mxu0 %v576
    %678 = vmatpush.bf16.msra.mxu0 %v572
    %679 = vmatpush.bf16.msra.mxu0 %v568
    %680 = vmatpush.bf16.msra.mxu0 %v564
    %681 = vmatmul.bf16.gmra.mxu0 %v265
    %v682 = vpop.f32.mrf.mxu0
    %v683 = vadd.f32 %v670, %v682
    %v684 = vpop.f32.mrf.mxu0
    %685 = vdwg.mxu0
    %686 = vmatpush.bf16.msra.mxu0 %v561
    %687 = vmatpush.bf16.msra.mxu0 %v557
    %688 = vmatpush.bf16.msra.mxu0 %v553
    %689 = vmatpush.bf16.msra.mxu0 %v549
    %690 = vmatpush.bf16.msra.mxu0 %v545
    %691 = vmatpush.bf16.msra.mxu0 %v541
    %692 = vmatpush.bf16.msra.mxu0 %v537
    %693 = vmatpush.bf16.msra.mxu0 %v533
    %694 = vmatmul.bf16.gmra.mxu0 %v264
    %v695 = vpop.f32.mrf.mxu0
    %v696 = vadd.f32 %v333, %v695
    %v697 = vpop.f32.mrf.mxu0
    %698 = vdwg.mxu0
    %699 = vmatpush.bf16.msra.mxu0 %v593
    %700 = vmatpush.bf16.msra.mxu0 %v589
    %701 = vmatpush.bf16.msra.mxu0 %v585
    %702 = vmatpush.bf16.msra.mxu0 %v581
    %703 = vmatpush.bf16.msra.mxu0 %v577
    %704 = vmatpush.bf16.msra.mxu0 %v573
    %705 = vmatpush.bf16.msra.mxu0 %v569
    %706 = vmatpush.bf16.msra.mxu0 %v565
    %707 = vmatmul.bf16.gmra.mxu0 %v265
    %v708 = vpop.f32.mrf.mxu0
    %v709 = vadd.f32 %v696, %v708
    %v710 = vpop.f32.mrf.mxu0
    %711 = vdwg.mxu0
    %712 = vmatpush.bf16.msra.mxu0 %v562
    %713 = vmatpush.bf16.msra.mxu0 %v558
    %714 = vmatpush.bf16.msra.mxu0 %v554
    %715 = vmatpush.bf16.msra.mxu0 %v550
    %716 = vmatpush.bf16.msra.mxu0 %v546
    %717 = vmatpush.bf16.msra.mxu0 %v542
    %718 = vmatpush.bf16.msra.mxu0 %v538
    %719 = vmatpush.bf16.msra.mxu0 %v534
    %720 = vmatmul.bf16.gmra.mxu0 %v264
    %v721 = vpop.f32.mrf.mxu0
    %v722 = vadd.f32 %v334, %v721
    %v723 = vpop.f32.mrf.mxu0
    %724 = vdwg.mxu0
    %725 = vmatpush.bf16.msra.mxu0 %v594
    %726 = vmatpush.bf16.msra.mxu0 %v590
    %727 = vmatpush.bf16.msra.mxu0 %v586
    %728 = vmatpush.bf16.msra.mxu0 %v582
    %729 = vmatpush.bf16.msra.mxu0 %v578
    %730 = vmatpush.bf16.msra.mxu0 %v574
    %731 = vmatpush.bf16.msra.mxu0 %v570
    %732 = vmatpush.bf16.msra.mxu0 %v566
    %733 = vmatmul.bf16.gmra.mxu0 %v265
    %v734 = vpop.f32.mrf.mxu0
    %v735 = vadd.f32 %v722, %v734
    %v736 = vpop.f32.mrf.mxu0
    %737 = vdwg.mxu0
    %738 = vmatpush.bf16.msra.mxu0 %v563
    %739 = vmatpush.bf16.msra.mxu0 %v559
    %740 = vmatpush.bf16.msra.mxu0 %v555
    %741 = vmatpush.bf16.msra.mxu0 %v551
    %742 = vmatpush.bf16.msra.mxu0 %v547
    %743 = vmatpush.bf16.msra.mxu0 %v543
    %744 = vmatpush.bf16.msra.mxu0 %v539
    %745 = vmatpush.bf16.msra.mxu0 %v535
    %746 = vmatmul.bf16.gmra.mxu0 %v264
    %v747 = vpop.f32.mrf.mxu0
    %v748 = vadd.f32 %v335, %v747
    %v749 = vpop.f32.mrf.mxu0
    %750 = vdwg.mxu0
    %751 = vmatpush.bf16.msra.mxu0 %v595
    %752 = vmatpush.bf16.msra.mxu0 %v591
    %753 = vmatpush.bf16.msra.mxu0 %v587
    %754 = vmatpush.bf16.msra.mxu0 %v583
    %755 = vmatpush.bf16.msra.mxu0 %v579
    %756 = vmatpush.bf16.msra.mxu0 %v575
    %757 = vmatpush.bf16.msra.mxu0 %v571
    %758 = vmatpush.bf16.msra.mxu0 %v567
    %759 = vmatmul.bf16.gmra.mxu0 %v265
    %v760 = vpop.f32.mrf.mxu0
    %v761 = vadd.f32 %v748, %v760
    %v762 = vpop.f32.mrf.mxu0
    %763 = vdwg.mxu0
    %vm764 = vcmp.gt.f32.partialorder %v683, 0.0
    %vm765 = vcmp.gt.f32.partialorder %v709, 0.0
    %vm766 = vcmp.gt.f32.partialorder %v735, 0.0
    %vm767 = vcmp.gt.f32.partialorder %v761, 0.0
    %v768 = vmul.f32 %v683, 1.442695
    %v769 = vpow.pop %v768
    %v770 = vmul.f32 %v709, 1.442695
    %v771 = vpow.pop %v770
    %v772 = vmul.f32 %v735, 1.442695
    %v773 = vpow.pop %v772
    %v774 = vmul.f32 %v761, 1.442695
    %v775 = vpow.pop %v774
    %v776 = vsub.f32 %v769, 1.0
    %v777 = vsub.f32 %v771, 1.0
    %v778 = vsub.f32 %v773, 1.0
    %v779 = vsub.f32 %v775, 1.0
    %v780 = vmul.f32 %v776, 1.6732632
    %v781 = vmul.f32 %v777, 1.6732632
    %v782 = vmul.f32 %v778, 1.6732632
    %v783 = vmul.f32 %v779, 1.6732632
    %v784 = vsel %vm764, %v683, %v780
    %v785 = vsel %vm765, %v709, %v781
    %v786 = vsel %vm766, %v735, %v782
    %v787 = vsel %vm767, %v761, %v783
    %v788 = vmul.f32 %v784, 1.050701
    %v789 = vmul.f32 %v785, 1.050701
    %v790 = vmul.f32 %v786, 1.050701
    %v791 = vmul.f32 %v787, 1.050701
    %v792 = vpack.c.bf16 %v788, %v788
    %v793 = vpack.c.bf16 %v789, %v789
    %v794 = vpack.c.bf16 %v790, %v790
    %v795 = vpack.c.bf16 %v791, %v791
    %v796 = vld [vmem:[#allocation11] sm:$0xff]
    %v797 = vld [vmem:[#allocation11 + $0x8] sm:$0xff]
    %v798 = vld [vmem:[#allocation11 + $0x10] sm:$0xff]
    %v799 = vld [vmem:[#allocation11 + $0x18] sm:$0xff]
    %v800 = vld [vmem:[#allocation11 + $0x20] sm:$0xff]
    %v801 = vld [vmem:[#allocation11 + $0x28] sm:$0xff]
    %v802 = vld [vmem:[#allocation11 + $0x30] sm:$0xff]
    %v803 = vld [vmem:[#allocation11 + $0x38] sm:$0xff]
    %v804 = vld [vmem:[#allocation11 + $0x40] sm:$0xff]
    %v805 = vld [vmem:[#allocation11 + $0x48] sm:$0xff]
    %v806 = vld [vmem:[#allocation11 + $0x50] sm:$0xff]
    %v807 = vld [vmem:[#allocation11 + $0x58] sm:$0xff]
    %v808 = vld [vmem:[#allocation11 + $0x60] sm:$0xff]
    %v809 = vld [vmem:[#allocation11 + $0x68] sm:$0xff]
    %v810 = vld [vmem:[#allocation11 + $0x70] sm:$0xff]
    %v811 = vld [vmem:[#allocation11 + $0x78] sm:$0xff]
    %v812 = vld [vmem:[#allocation11 + $0x80] sm:$0xff]
    %v813 = vld [vmem:[#allocation11 + $0x88] sm:$0xff]
    %v814 = vld [vmem:[#allocation11 + $0x90] sm:$0xff]
    %v815 = vld [vmem:[#allocation11 + $0x98] sm:$0xff]
    %v816 = vld [vmem:[#allocation11 + $0xa0] sm:$0xff]
    %v817 = vld [vmem:[#allocation11 + $0xa8] sm:$0xff]
    %v818 = vld [vmem:[#allocation11 + $0xb0] sm:$0xff]
    %v819 = vld [vmem:[#allocation11 + $0xb8] sm:$0xff]
    %v820 = vld [vmem:[#allocation11 + $0xc0] sm:$0xff]
    %v821 = vld [vmem:[#allocation11 + $0xc8] sm:$0xff]
    %v822 = vld [vmem:[#allocation11 + $0xd0] sm:$0xff]
    %v823 = vld [vmem:[#allocation11 + $0xd8] sm:$0xff]
    %v824 = vld [vmem:[#allocation11 + $0xe0] sm:$0xff]
    %v825 = vld [vmem:[#allocation11 + $0xe8] sm:$0xff]
    %v826 = vld [vmem:[#allocation11 + $0xf0] sm:$0xff]
    %v827 = vld [vmem:[#allocation11 + $0xf8] sm:$0xff]
    %v828 = vld [vmem:[#allocation11 + $0x100] sm:$0xff]
    %v829 = vld [vmem:[#allocation11 + $0x108] sm:$0xff]
    %v830 = vld [vmem:[#allocation11 + $0x110] sm:$0xff]
    %v831 = vld [vmem:[#allocation11 + $0x118] sm:$0xff]
    %v832 = vld [vmem:[#allocation11 + $0x120] sm:$0xff]
    %v833 = vld [vmem:[#allocation11 + $0x128] sm:$0xff]
    %v834 = vld [vmem:[#allocation11 + $0x130] sm:$0xff]
    %v835 = vld [vmem:[#allocation11 + $0x138] sm:$0xff]
    %v836 = vld [vmem:[#allocation11 + $0x140] sm:$0xff]
    %v837 = vld [vmem:[#allocation11 + $0x148] sm:$0xff]
    %v838 = vld [vmem:[#allocation11 + $0x150] sm:$0xff]
    %v839 = vld [vmem:[#allocation11 + $0x158] sm:$0xff]
    %v840 = vld [vmem:[#allocation11 + $0x160] sm:$0xff]
    %v841 = vld [vmem:[#allocation11 + $0x168] sm:$0xff]
    %v842 = vld [vmem:[#allocation11 + $0x170] sm:$0xff]
    %v843 = vld [vmem:[#allocation11 + $0x178] sm:$0xff]
    %v844 = vld [vmem:[#allocation11 + $0x180] sm:$0xff]
    %v845 = vld [vmem:[#allocation11 + $0x188] sm:$0xff]
    %v846 = vld [vmem:[#allocation11 + $0x190] sm:$0xff]
    %v847 = vld [vmem:[#allocation11 + $0x198] sm:$0xff]
    %v848 = vld [vmem:[#allocation11 + $0x1a0] sm:$0xff]
    %v849 = vld [vmem:[#allocation11 + $0x1a8] sm:$0xff]
    %v850 = vld [vmem:[#allocation11 + $0x1b0] sm:$0xff]
    %v851 = vld [vmem:[#allocation11 + $0x1b8] sm:$0xff]
    %v852 = vld [vmem:[#allocation11 + $0x1c0] sm:$0xff]
    %v853 = vld [vmem:[#allocation11 + $0x1c8] sm:$0xff]
    %v854 = vld [vmem:[#allocation11 + $0x1d0] sm:$0xff]
    %v855 = vld [vmem:[#allocation11 + $0x1d8] sm:$0xff]
    %v856 = vld [vmem:[#allocation11 + $0x1e0] sm:$0xff]
    %v857 = vld [vmem:[#allocation11 + $0x1e8] sm:$0xff]
    %v858 = vld [vmem:[#allocation11 + $0x1f0] sm:$0xff]
    %v859 = vld [vmem:[#allocation11 + $0x1f8] sm:$0xff]
    %v860 = vld [vmem:[#allocation11 + $0x200] sm:$0xff]
    %v861 = vld [vmem:[#allocation11 + $0x208] sm:$0xff]
    %v862 = vld [vmem:[#allocation11 + $0x210] sm:$0xff]
    %v863 = vld [vmem:[#allocation11 + $0x218] sm:$0xff]
    %v864 = vld [vmem:[#allocation11 + $0x220] sm:$0xff]
    %v865 = vld [vmem:[#allocation11 + $0x228] sm:$0xff]
    %v866 = vld [vmem:[#allocation11 + $0x230] sm:$0xff]
    %v867 = vld [vmem:[#allocation11 + $0x238] sm:$0xff]
    %v868 = vld [vmem:[#allocation11 + $0x240] sm:$0xff]
    %v869 = vld [vmem:[#allocation11 + $0x248] sm:$0xff]
    %v870 = vld [vmem:[#allocation11 + $0x250] sm:$0xff]
    %v871 = vld [vmem:[#allocation11 + $0x258] sm:$0xff]
    %v872 = vld [vmem:[#allocation11 + $0x260] sm:$0xff]
    %v873 = vld [vmem:[#allocation11 + $0x268] sm:$0xff]
    %v874 = vld [vmem:[#allocation11 + $0x270] sm:$0xff]
    %v875 = vld [vmem:[#allocation11 + $0x278] sm:$0xff]
    %v876 = vld [vmem:[#allocation11 + $0x280] sm:$0xff]
    %v877 = vld [vmem:[#allocation11 + $0x288] sm:$0xff]
    %v878 = vld [vmem:[#allocation11 + $0x290] sm:$0xff]
    %v879 = vld [vmem:[#allocation11 + $0x298] sm:$0xff]
    %v880 = vld [vmem:[#allocation11 + $0x2a0] sm:$0xff]
    %v881 = vld [vmem:[#allocation11 + $0x2a8] sm:$0xff]
    %v882 = vld [vmem:[#allocation11 + $0x2b0] sm:$0xff]
    %v883 = vld [vmem:[#allocation11 + $0x2b8] sm:$0xff]
    %v884 = vld [vmem:[#allocation11 + $0x2c0] sm:$0xff]
    %v885 = vld [vmem:[#allocation11 + $0x2c8] sm:$0xff]
    %v886 = vld [vmem:[#allocation11 + $0x2d0] sm:$0xff]
    %v887 = vld [vmem:[#allocation11 + $0x2d8] sm:$0xff]
    %v888 = vld [vmem:[#allocation11 + $0x2e0] sm:$0xff]
    %v889 = vld [vmem:[#allocation11 + $0x2e8] sm:$0xff]
    %v890 = vld [vmem:[#allocation11 + $0x2f0] sm:$0xff]
    %v891 = vld [vmem:[#allocation11 + $0x2f8] sm:$0xff]
    %v892 = vld [vmem:[#allocation11 + $0x300] sm:$0xff]
    %v893 = vld [vmem:[#allocation11 + $0x308] sm:$0xff]
    %v894 = vld [vmem:[#allocation11 + $0x310] sm:$0xff]
    %v895 = vld [vmem:[#allocation11 + $0x318] sm:$0xff]
    %v896 = vld [vmem:[#allocation11 + $0x320] sm:$0xff]
    %v897 = vld [vmem:[#allocation11 + $0x328] sm:$0xff]
    %v898 = vld [vmem:[#allocation11 + $0x330] sm:$0xff]
    %v899 = vld [vmem:[#allocation11 + $0x338] sm:$0xff]
    %v900 = vld [vmem:[#allocation11 + $0x340] sm:$0xff]
    %v901 = vld [vmem:[#allocation11 + $0x348] sm:$0xff]
    %v902 = vld [vmem:[#allocation11 + $0x350] sm:$0xff]
    %v903 = vld [vmem:[#allocation11 + $0x358] sm:$0xff]
    %v904 = vld [vmem:[#allocation11 + $0x360] sm:$0xff]
    %v905 = vld [vmem:[#allocation11 + $0x368] sm:$0xff]
    %v906 = vld [vmem:[#allocation11 + $0x370] sm:$0xff]
    %v907 = vld [vmem:[#allocation11 + $0x378] sm:$0xff]
    %v908 = vld [vmem:[#allocation11 + $0x380] sm:$0xff]
    %v909 = vld [vmem:[#allocation11 + $0x388] sm:$0xff]
    %v910 = vld [vmem:[#allocation11 + $0x390] sm:$0xff]
    %v911 = vld [vmem:[#allocation11 + $0x398] sm:$0xff]
    %v912 = vld [vmem:[#allocation11 + $0x3a0] sm:$0xff]
    %v913 = vld [vmem:[#allocation11 + $0x3a8] sm:$0xff]
    %v914 = vld [vmem:[#allocation11 + $0x3b0] sm:$0xff]
    %v915 = vld [vmem:[#allocation11 + $0x3b8] sm:$0xff]
    %v916 = vld [vmem:[#allocation11 + $0x3c0] sm:$0xff]
    %v917 = vld [vmem:[#allocation11 + $0x3c8] sm:$0xff]
    %v918 = vld [vmem:[#allocation11 + $0x3d0] sm:$0xff]
    %v919 = vld [vmem:[#allocation11 + $0x3d8] sm:$0xff]
    %v920 = vld [vmem:[#allocation11 + $0x3e0] sm:$0xff]
    %v921 = vld [vmem:[#allocation11 + $0x3e8] sm:$0xff]
    %v922 = vld [vmem:[#allocation11 + $0x3f0] sm:$0xff]
    %v923 = vld [vmem:[#allocation11 + $0x3f8] sm:$0xff]
    %v924 = vld [vmem:[#allocation11 + $0x400] sm:$0xff]
    %v925 = vld [vmem:[#allocation11 + $0x408] sm:$0xff]
    %v926 = vld [vmem:[#allocation11 + $0x410] sm:$0xff]
    %v927 = vld [vmem:[#allocation11 + $0x418] sm:$0xff]
    %v928 = vld [vmem:[#allocation11 + $0x420] sm:$0xff]
    %v929 = vld [vmem:[#allocation11 + $0x428] sm:$0xff]
    %v930 = vld [vmem:[#allocation11 + $0x430] sm:$0xff]
    %v931 = vld [vmem:[#allocation11 + $0x438] sm:$0xff]
    %v932 = vld [vmem:[#allocation11 + $0x440] sm:$0xff]
    %v933 = vld [vmem:[#allocation11 + $0x448] sm:$0xff]
    %v934 = vld [vmem:[#allocation11 + $0x450] sm:$0xff]
    %v935 = vld [vmem:[#allocation11 + $0x458] sm:$0xff]
    %v936 = vld [vmem:[#allocation11 + $0x460] sm:$0xff]
    %v937 = vld [vmem:[#allocation11 + $0x468] sm:$0xff]
    %v938 = vld [vmem:[#allocation11 + $0x470] sm:$0xff]
    %v939 = vld [vmem:[#allocation11 + $0x478] sm:$0xff]
    %v940 = vld [vmem:[#allocation11 + $0x480] sm:$0xff]
    %v941 = vld [vmem:[#allocation11 + $0x488] sm:$0xff]
    %v942 = vld [vmem:[#allocation11 + $0x490] sm:$0xff]
    %v943 = vld [vmem:[#allocation11 + $0x498] sm:$0xff]
    %v944 = vld [vmem:[#allocation11 + $0x4a0] sm:$0xff]
    %v945 = vld [vmem:[#allocation11 + $0x4a8] sm:$0xff]
    %v946 = vld [vmem:[#allocation11 + $0x4b0] sm:$0xff]
    %v947 = vld [vmem:[#allocation11 + $0x4b8] sm:$0xff]
    %v948 = vld [vmem:[#allocation11 + $0x4c0] sm:$0xff]
    %v949 = vld [vmem:[#allocation11 + $0x4c8] sm:$0xff]
    %v950 = vld [vmem:[#allocation11 + $0x4d0] sm:$0xff]
    %v951 = vld [vmem:[#allocation11 + $0x4d8] sm:$0xff]
    %v952 = vld [vmem:[#allocation11 + $0x4e0] sm:$0xff]
    %v953 = vld [vmem:[#allocation11 + $0x4e8] sm:$0xff]
    %v954 = vld [vmem:[#allocation11 + $0x4f0] sm:$0xff]
    %v955 = vld [vmem:[#allocation11 + $0x4f8] sm:$0xff]
    %v956 = vld [vmem:[#allocation11 + $0x500] sm:$0xff]
    %v957 = vld [vmem:[#allocation11 + $0x508] sm:$0xff]
    %v958 = vld [vmem:[#allocation11 + $0x510] sm:$0xff]
    %v959 = vld [vmem:[#allocation11 + $0x518] sm:$0xff]
    %v960 = vld [vmem:[#allocation11 + $0x520] sm:$0xff]
    %v961 = vld [vmem:[#allocation11 + $0x528] sm:$0xff]
    %v962 = vld [vmem:[#allocation11 + $0x530] sm:$0xff]
    %v963 = vld [vmem:[#allocation11 + $0x538] sm:$0xff]
    %v964 = vld [vmem:[#allocation11 + $0x540] sm:$0xff]
    %v965 = vld [vmem:[#allocation11 + $0x548] sm:$0xff]
    %v966 = vld [vmem:[#allocation11 + $0x550] sm:$0xff]
    %v967 = vld [vmem:[#allocation11 + $0x558] sm:$0xff]
    %v968 = vld [vmem:[#allocation11 + $0x560] sm:$0xff]
    %v969 = vld [vmem:[#allocation11 + $0x568] sm:$0xff]
    %v970 = vld [vmem:[#allocation11 + $0x570] sm:$0xff]
    %v971 = vld [vmem:[#allocation11 + $0x578] sm:$0xff]
    %v972 = vld [vmem:[#allocation11 + $0x580] sm:$0xff]
    %v973 = vld [vmem:[#allocation11 + $0x588] sm:$0xff]
    %v974 = vld [vmem:[#allocation11 + $0x590] sm:$0xff]
    %v975 = vld [vmem:[#allocation11 + $0x598] sm:$0xff]
    %v976 = vld [vmem:[#allocation11 + $0x5a0] sm:$0xff]
    %v977 = vld [vmem:[#allocation11 + $0x5a8] sm:$0xff]
    %v978 = vld [vmem:[#allocation11 + $0x5b0] sm:$0xff]
    %v979 = vld [vmem:[#allocation11 + $0x5b8] sm:$0xff]
    %v980 = vld [vmem:[#allocation11 + $0x5c0] sm:$0xff]
    %v981 = vld [vmem:[#allocation11 + $0x5c8] sm:$0xff]
    %v982 = vld [vmem:[#allocation11 + $0x5d0] sm:$0xff]
    %v983 = vld [vmem:[#allocation11 + $0x5d8] sm:$0xff]
    %v984 = vld [vmem:[#allocation11 + $0x5e0] sm:$0xff]
    %v985 = vld [vmem:[#allocation11 + $0x5e8] sm:$0xff]
    %v986 = vld [vmem:[#allocation11 + $0x5f0] sm:$0xff]
    %v987 = vld [vmem:[#allocation11 + $0x5f8] sm:$0xff]
    %v988 = vld [vmem:[#allocation11 + $0x600] sm:$0xff]
    %v989 = vld [vmem:[#allocation11 + $0x608] sm:$0xff]
    %v990 = vld [vmem:[#allocation11 + $0x610] sm:$0xff]
    %v991 = vld [vmem:[#allocation11 + $0x618] sm:$0xff]
    %v992 = vld [vmem:[#allocation11 + $0x620] sm:$0xff]
    %v993 = vld [vmem:[#allocation11 + $0x628] sm:$0xff]
    %v994 = vld [vmem:[#allocation11 + $0x630] sm:$0xff]
    %v995 = vld [vmem:[#allocation11 + $0x638] sm:$0xff]
    %v996 = vld [vmem:[#allocation11 + $0x640] sm:$0xff]
    %v997 = vld [vmem:[#allocation11 + $0x648] sm:$0xff]
    %v998 = vld [vmem:[#allocation11 + $0x650] sm:$0xff]
    %v999 = vld [vmem:[#allocation11 + $0x658] sm:$0xff]
    %v1000 = vld [vmem:[#allocation11 + $0x660] sm:$0xff]
    %v1001 = vld [vmem:[#allocation11 + $0x668] sm:$0xff]
    %v1002 = vld [vmem:[#allocation11 + $0x670] sm:$0xff]
    %v1003 = vld [vmem:[#allocation11 + $0x678] sm:$0xff]
    %v1004 = vld [vmem:[#allocation11 + $0x680] sm:$0xff]
    %v1005 = vld [vmem:[#allocation11 + $0x688] sm:$0xff]
    %v1006 = vld [vmem:[#allocation11 + $0x690] sm:$0xff]
    %v1007 = vld [vmem:[#allocation11 + $0x698] sm:$0xff]
    %v1008 = vld [vmem:[#allocation11 + $0x6a0] sm:$0xff]
    %v1009 = vld [vmem:[#allocation11 + $0x6a8] sm:$0xff]
    %v1010 = vld [vmem:[#allocation11 + $0x6b0] sm:$0xff]
    %v1011 = vld [vmem:[#allocation11 + $0x6b8] sm:$0xff]
    %v1012 = vld [vmem:[#allocation11 + $0x6c0] sm:$0xff]
    %v1013 = vld [vmem:[#allocation11 + $0x6c8] sm:$0xff]
    %v1014 = vld [vmem:[#allocation11 + $0x6d0] sm:$0xff]
    %v1015 = vld [vmem:[#allocation11 + $0x6d8] sm:$0xff]
    %v1016 = vld [vmem:[#allocation11 + $0x6e0] sm:$0xff]
    %v1017 = vld [vmem:[#allocation11 + $0x6e8] sm:$0xff]
    %v1018 = vld [vmem:[#allocation11 + $0x6f0] sm:$0xff]
    %v1019 = vld [vmem:[#allocation11 + $0x6f8] sm:$0xff]
    %v1020 = vld [vmem:[#allocation11 + $0x700] sm:$0xff]
    %v1021 = vld [vmem:[#allocation11 + $0x708] sm:$0xff]
    %v1022 = vld [vmem:[#allocation11 + $0x710] sm:$0xff]
    %v1023 = vld [vmem:[#allocation11 + $0x718] sm:$0xff]
    %v1024 = vld [vmem:[#allocation11 + $0x720] sm:$0xff]
    %v1025 = vld [vmem:[#allocation11 + $0x728] sm:$0xff]
    %v1026 = vld [vmem:[#allocation11 + $0x730] sm:$0xff]
    %v1027 = vld [vmem:[#allocation11 + $0x738] sm:$0xff]
    %v1028 = vld [vmem:[#allocation11 + $0x740] sm:$0xff]
    %v1029 = vld [vmem:[#allocation11 + $0x748] sm:$0xff]
    %v1030 = vld [vmem:[#allocation11 + $0x750] sm:$0xff]
    %v1031 = vld [vmem:[#allocation11 + $0x758] sm:$0xff]
    %v1032 = vld [vmem:[#allocation11 + $0x760] sm:$0xff]
    %v1033 = vld [vmem:[#allocation11 + $0x768] sm:$0xff]
    %v1034 = vld [vmem:[#allocation11 + $0x770] sm:$0xff]
    %v1035 = vld [vmem:[#allocation11 + $0x778] sm:$0xff]
    %v1036 = vld [vmem:[#allocation11 + $0x780] sm:$0xff]
    %v1037 = vld [vmem:[#allocation11 + $0x788] sm:$0xff]
    %v1038 = vld [vmem:[#allocation11 + $0x790] sm:$0xff]
    %v1039 = vld [vmem:[#allocation11 + $0x798] sm:$0xff]
    %v1040 = vld [vmem:[#allocation11 + $0x7a0] sm:$0xff]
    %v1041 = vld [vmem:[#allocation11 + $0x7a8] sm:$0xff]
    %v1042 = vld [vmem:[#allocation11 + $0x7b0] sm:$0xff]
    %v1043 = vld [vmem:[#allocation11 + $0x7b8] sm:$0xff]
    %v1044 = vld [vmem:[#allocation11 + $0x7c0] sm:$0xff]
    %v1045 = vld [vmem:[#allocation11 + $0x7c8] sm:$0xff]
    %v1046 = vld [vmem:[#allocation11 + $0x7d0] sm:$0xff]
    %v1047 = vld [vmem:[#allocation11 + $0x7d8] sm:$0xff]
    %v1048 = vld [vmem:[#allocation11 + $0x7e0] sm:$0xff]
    %v1049 = vld [vmem:[#allocation11 + $0x7e8] sm:$0xff]
    %v1050 = vld [vmem:[#allocation11 + $0x7f0] sm:$0xff]
    %v1051 = vld [vmem:[#allocation11 + $0x7f8] sm:$0xff]
    %v1052 = vld [vmem:[#allocation13] sm:$0xff]
    %v1054 = vperm.slane %v1052, 0
    %v1055 = vperm.slane %v1052, 1
    %v1056 = vperm.slane %v1052, 2
    %v1057 = vperm.slane %v1052, 3
    %v1058 = vperm.slane %v1052, 4
    %v1059 = vperm.slane %v1052, 5
    %v1060 = vperm.slane %v1052, 6
    %v1061 = vperm.slane %v1052, 7
    %v1326 = vunpack.c.l.b16 %v796
    %v1327 = vunpack.c.h.b16 %v796
    %v1328 = vunpack.c.l.b16 %v797
    %v1329 = vunpack.c.h.b16 %v797
    %v1330 = vunpack.c.l.b16 %v798
    %v1331 = vunpack.c.h.b16 %v798
    %v1332 = vunpack.c.l.b16 %v799
    %v1333 = vunpack.c.h.b16 %v799
    %v1334 = vunpack.c.l.b16 %v800
    %v1335 = vunpack.c.h.b16 %v800
    %v1336 = vunpack.c.l.b16 %v801
    %v1337 = vunpack.c.h.b16 %v801
    %v1338 = vunpack.c.l.b16 %v802
    %v1339 = vunpack.c.h.b16 %v802
    %v1340 = vunpack.c.l.b16 %v803
    %v1341 = vunpack.c.h.b16 %v803
    %v1342 = vunpack.c.l.b16 %v804
    %v1343 = vunpack.c.h.b16 %v804
    %v1344 = vunpack.c.l.b16 %v805
    %v1345 = vunpack.c.h.b16 %v805
    %v1346 = vunpack.c.l.b16 %v806
    %v1347 = vunpack.c.h.b16 %v806
    %v1348 = vunpack.c.l.b16 %v807
    %v1349 = vunpack.c.h.b16 %v807
    %v1350 = vunpack.c.l.b16 %v808
    %v1351 = vunpack.c.h.b16 %v808
    %v1352 = vunpack.c.l.b16 %v809
    %v1353 = vunpack.c.h.b16 %v809
    %v1354 = vunpack.c.l.b16 %v810
    %v1355 = vunpack.c.h.b16 %v810
    %v1356 = vunpack.c.l.b16 %v811
    %v1357 = vunpack.c.h.b16 %v811
    %v1358 = vunpack.c.l.b16 %v812
    %v1359 = vunpack.c.h.b16 %v812
    %v1360 = vunpack.c.l.b16 %v813
    %v1361 = vunpack.c.h.b16 %v813
    %v1362 = vunpack.c.l.b16 %v814
    %v1363 = vunpack.c.h.b16 %v814
    %v1364 = vunpack.c.l.b16 %v815
    %v1365 = vunpack.c.h.b16 %v815
    %v1366 = vunpack.c.l.b16 %v816
    %v1367 = vunpack.c.h.b16 %v816
    %v1368 = vunpack.c.l.b16 %v817
    %v1369 = vunpack.c.h.b16 %v817
    %v1370 = vunpack.c.l.b16 %v818
    %v1371 = vunpack.c.h.b16 %v818
    %v1372 = vunpack.c.l.b16 %v819
    %v1373 = vunpack.c.h.b16 %v819
    %v1374 = vunpack.c.l.b16 %v820
    %v1375 = vunpack.c.h.b16 %v820
    %v1376 = vunpack.c.l.b16 %v821
    %v1377 = vunpack.c.h.b16 %v821
    %v1378 = vunpack.c.l.b16 %v822
    %v1379 = vunpack.c.h.b16 %v822
    %v1380 = vunpack.c.l.b16 %v823
    %v1381 = vunpack.c.h.b16 %v823
    %v1382 = vunpack.c.l.b16 %v824
    %v1383 = vunpack.c.h.b16 %v824
    %v1384 = vunpack.c.l.b16 %v825
    %v1385 = vunpack.c.h.b16 %v825
    %v1386 = vunpack.c.l.b16 %v826
    %v1387 = vunpack.c.h.b16 %v826
    %v1388 = vunpack.c.l.b16 %v827
    %v1389 = vunpack.c.h.b16 %v827
    %v1390 = vunpack.c.l.b16 %v828
    %v1391 = vunpack.c.h.b16 %v828
    %v1392 = vunpack.c.l.b16 %v829
    %v1393 = vunpack.c.h.b16 %v829
    %v1394 = vunpack.c.l.b16 %v830
    %v1395 = vunpack.c.h.b16 %v830
    %v1396 = vunpack.c.l.b16 %v831
    %v1397 = vunpack.c.h.b16 %v831
    %v1398 = vunpack.c.l.b16 %v832
    %v1399 = vunpack.c.h.b16 %v832
    %v1400 = vunpack.c.l.b16 %v833
    %v1401 = vunpack.c.h.b16 %v833
    %v1402 = vunpack.c.l.b16 %v834
    %v1403 = vunpack.c.h.b16 %v834
    %v1404 = vunpack.c.l.b16 %v835
    %v1405 = vunpack.c.h.b16 %v835
    %v1406 = vunpack.c.l.b16 %v836
    %v1407 = vunpack.c.h.b16 %v836
    %v1408 = vunpack.c.l.b16 %v837
    %v1409 = vunpack.c.h.b16 %v837
    %v1410 = vunpack.c.l.b16 %v838
    %v1411 = vunpack.c.h.b16 %v838
    %v1412 = vunpack.c.l.b16 %v839
    %v1413 = vunpack.c.h.b16 %v839
    %v1414 = vunpack.c.l.b16 %v840
    %v1415 = vunpack.c.h.b16 %v840
    %v1416 = vunpack.c.l.b16 %v841
    %v1417 = vunpack.c.h.b16 %v841
    %v1418 = vunpack.c.l.b16 %v842
    %v1419 = vunpack.c.h.b16 %v842
    %v1420 = vunpack.c.l.b16 %v843
    %v1421 = vunpack.c.h.b16 %v843
    %v1422 = vunpack.c.l.b16 %v844
    %v1423 = vunpack.c.h.b16 %v844
    %v1424 = vunpack.c.l.b16 %v845
    %v1425 = vunpack.c.h.b16 %v845
    %v1426 = vunpack.c.l.b16 %v846
    %v1427 = vunpack.c.h.b16 %v846
    %v1428 = vunpack.c.l.b16 %v847
    %v1429 = vunpack.c.h.b16 %v847
    %v1430 = vunpack.c.l.b16 %v848
    %v1431 = vunpack.c.h.b16 %v848
    %v1432 = vunpack.c.l.b16 %v849
    %v1433 = vunpack.c.h.b16 %v849
    %v1434 = vunpack.c.l.b16 %v850
    %v1435 = vunpack.c.h.b16 %v850
    %v1436 = vunpack.c.l.b16 %v851
    %v1437 = vunpack.c.h.b16 %v851
    %v1438 = vunpack.c.l.b16 %v852
    %v1439 = vunpack.c.h.b16 %v852
    %v1440 = vunpack.c.l.b16 %v853
    %v1441 = vunpack.c.h.b16 %v853
    %v1442 = vunpack.c.l.b16 %v854
    %v1443 = vunpack.c.h.b16 %v854
    %v1444 = vunpack.c.l.b16 %v855
    %v1445 = vunpack.c.h.b16 %v855
    %v1446 = vunpack.c.l.b16 %v856
    %v1447 = vunpack.c.h.b16 %v856
    %v1448 = vunpack.c.l.b16 %v857
    %v1449 = vunpack.c.h.b16 %v857
    %v1450 = vunpack.c.l.b16 %v858
    %v1451 = vunpack.c.h.b16 %v858
    %v1452 = vunpack.c.l.b16 %v859
    %v1453 = vunpack.c.h.b16 %v859
    %v1454 = vunpack.c.l.b16 %v860
    %v1455 = vunpack.c.h.b16 %v860
    %v1456 = vunpack.c.l.b16 %v861
    %v1457 = vunpack.c.h.b16 %v861
    %v1458 = vunpack.c.l.b16 %v862
    %v1459 = vunpack.c.h.b16 %v862
    %v1460 = vunpack.c.l.b16 %v863
    %v1461 = vunpack.c.h.b16 %v863
    %v1462 = vunpack.c.l.b16 %v864
    %v1463 = vunpack.c.h.b16 %v864
    %v1464 = vunpack.c.l.b16 %v865
    %v1465 = vunpack.c.h.b16 %v865
    %v1466 = vunpack.c.l.b16 %v866
    %v1467 = vunpack.c.h.b16 %v866
    %v1468 = vunpack.c.l.b16 %v867
    %v1469 = vunpack.c.h.b16 %v867
    %v1470 = vunpack.c.l.b16 %v868
    %v1471 = vunpack.c.h.b16 %v868
    %v1472 = vunpack.c.l.b16 %v869
    %v1473 = vunpack.c.h.b16 %v869
    %v1474 = vunpack.c.l.b16 %v870
    %v1475 = vunpack.c.h.b16 %v870
    %v1476 = vunpack.c.l.b16 %v871
    %v1477 = vunpack.c.h.b16 %v871
    %v1478 = vunpack.c.l.b16 %v872
    %v1479 = vunpack.c.h.b16 %v872
    %v1480 = vunpack.c.l.b16 %v873
    %v1481 = vunpack.c.h.b16 %v873
    %v1482 = vunpack.c.l.b16 %v874
    %v1483 = vunpack.c.h.b16 %v874
    %v1484 = vunpack.c.l.b16 %v875
    %v1485 = vunpack.c.h.b16 %v875
    %v1486 = vunpack.c.l.b16 %v876
    %v1487 = vunpack.c.h.b16 %v876
    %v1488 = vunpack.c.l.b16 %v877
    %v1489 = vunpack.c.h.b16 %v877
    %v1490 = vunpack.c.l.b16 %v878
    %v1491 = vunpack.c.h.b16 %v878
    %v1492 = vunpack.c.l.b16 %v879
    %v1493 = vunpack.c.h.b16 %v879
    %v1494 = vunpack.c.l.b16 %v880
    %v1495 = vunpack.c.h.b16 %v880
    %v1496 = vunpack.c.l.b16 %v881
    %v1497 = vunpack.c.h.b16 %v881
    %v1498 = vunpack.c.l.b16 %v882
    %v1499 = vunpack.c.h.b16 %v882
    %v1500 = vunpack.c.l.b16 %v883
    %v1501 = vunpack.c.h.b16 %v883
    %v1502 = vunpack.c.l.b16 %v884
    %v1503 = vunpack.c.h.b16 %v884
    %v1504 = vunpack.c.l.b16 %v885
    %v1505 = vunpack.c.h.b16 %v885
    %v1506 = vunpack.c.l.b16 %v886
    %v1507 = vunpack.c.h.b16 %v886
    %v1508 = vunpack.c.l.b16 %v887
    %v1509 = vunpack.c.h.b16 %v887
    %v1510 = vunpack.c.l.b16 %v888
    %v1511 = vunpack.c.h.b16 %v888
    %v1512 = vunpack.c.l.b16 %v889
    %v1513 = vunpack.c.h.b16 %v889
    %v1514 = vunpack.c.l.b16 %v890
    %v1515 = vunpack.c.h.b16 %v890
    %v1516 = vunpack.c.l.b16 %v891
    %v1517 = vunpack.c.h.b16 %v891
    %v1518 = vunpack.c.l.b16 %v892
    %v1519 = vunpack.c.h.b16 %v892
    %v1520 = vunpack.c.l.b16 %v893
    %v1521 = vunpack.c.h.b16 %v893
    %v1522 = vunpack.c.l.b16 %v894
    %v1523 = vunpack.c.h.b16 %v894
    %v1524 = vunpack.c.l.b16 %v895
    %v1525 = vunpack.c.h.b16 %v895
    %v1526 = vunpack.c.l.b16 %v896
    %v1527 = vunpack.c.h.b16 %v896
    %v1528 = vunpack.c.l.b16 %v897
    %v1529 = vunpack.c.h.b16 %v897
    %v1530 = vunpack.c.l.b16 %v898
    %v1531 = vunpack.c.h.b16 %v898
    %v1532 = vunpack.c.l.b16 %v899
    %v1533 = vunpack.c.h.b16 %v899
    %v1534 = vunpack.c.l.b16 %v900
    %v1535 = vunpack.c.h.b16 %v900
    %v1536 = vunpack.c.l.b16 %v901
    %v1537 = vunpack.c.h.b16 %v901
    %v1538 = vunpack.c.l.b16 %v902
    %v1539 = vunpack.c.h.b16 %v902
    %v1540 = vunpack.c.l.b16 %v903
    %v1541 = vunpack.c.h.b16 %v903
    %v1542 = vunpack.c.l.b16 %v904
    %v1543 = vunpack.c.h.b16 %v904
    %v1544 = vunpack.c.l.b16 %v905
    %v1545 = vunpack.c.h.b16 %v905
    %v1546 = vunpack.c.l.b16 %v906
    %v1547 = vunpack.c.h.b16 %v906
    %v1548 = vunpack.c.l.b16 %v907
    %v1549 = vunpack.c.h.b16 %v907
    %v1550 = vunpack.c.l.b16 %v908
    %v1551 = vunpack.c.h.b16 %v908
    %v1552 = vunpack.c.l.b16 %v909
    %v1553 = vunpack.c.h.b16 %v909
    %v1554 = vunpack.c.l.b16 %v910
    %v1555 = vunpack.c.h.b16 %v910
    %v1556 = vunpack.c.l.b16 %v911
    %v1557 = vunpack.c.h.b16 %v911
    %v1558 = vunpack.c.l.b16 %v912
    %v1559 = vunpack.c.h.b16 %v912
    %v1560 = vunpack.c.l.b16 %v913
    %v1561 = vunpack.c.h.b16 %v913
    %v1562 = vunpack.c.l.b16 %v914
    %v1563 = vunpack.c.h.b16 %v914
    %v1564 = vunpack.c.l.b16 %v915
    %v1565 = vunpack.c.h.b16 %v915
    %v1566 = vunpack.c.l.b16 %v916
    %v1567 = vunpack.c.h.b16 %v916
    %v1568 = vunpack.c.l.b16 %v917
    %v1569 = vunpack.c.h.b16 %v917
    %v1570 = vunpack.c.l.b16 %v918
    %v1571 = vunpack.c.h.b16 %v918
    %v1572 = vunpack.c.l.b16 %v919
    %v1573 = vunpack.c.h.b16 %v919
    %v1574 = vunpack.c.l.b16 %v920
    %v1575 = vunpack.c.h.b16 %v920
    %v1576 = vunpack.c.l.b16 %v921
    %v1577 = vunpack.c.h.b16 %v921
    %v1578 = vunpack.c.l.b16 %v922
    %v1579 = vunpack.c.h.b16 %v922
    %v1580 = vunpack.c.l.b16 %v923
    %v1581 = vunpack.c.h.b16 %v923
    %v1582 = vunpack.c.l.b16 %v924
    %v1583 = vunpack.c.h.b16 %v924
    %v1584 = vunpack.c.l.b16 %v925
    %v1585 = vunpack.c.h.b16 %v925
    %v1586 = vunpack.c.l.b16 %v926
    %v1587 = vunpack.c.h.b16 %v926
    %v1588 = vunpack.c.l.b16 %v927
    %v1589 = vunpack.c.h.b16 %v927
    %v1590 = vunpack.c.l.b16 %v928
    %v1591 = vunpack.c.h.b16 %v928
    %v1592 = vunpack.c.l.b16 %v929
    %v1593 = vunpack.c.h.b16 %v929
    %v1594 = vunpack.c.l.b16 %v930
    %v1595 = vunpack.c.h.b16 %v930
    %v1596 = vunpack.c.l.b16 %v931
    %v1597 = vunpack.c.h.b16 %v931
    %v1598 = vunpack.c.l.b16 %v932
    %v1599 = vunpack.c.h.b16 %v932
    %v1600 = vunpack.c.l.b16 %v933
    %v1601 = vunpack.c.h.b16 %v933
    %v1602 = vunpack.c.l.b16 %v934
    %v1603 = vunpack.c.h.b16 %v934
    %v1604 = vunpack.c.l.b16 %v935
    %v1605 = vunpack.c.h.b16 %v935
    %v1606 = vunpack.c.l.b16 %v936
    %v1607 = vunpack.c.h.b16 %v936
    %v1608 = vunpack.c.l.b16 %v937
    %v1609 = vunpack.c.h.b16 %v937
    %v1610 = vunpack.c.l.b16 %v938
    %v1611 = vunpack.c.h.b16 %v938
    %v1612 = vunpack.c.l.b16 %v939
    %v1613 = vunpack.c.h.b16 %v939
    %v1614 = vunpack.c.l.b16 %v940
    %v1615 = vunpack.c.h.b16 %v940
    %v1616 = vunpack.c.l.b16 %v941
    %v1617 = vunpack.c.h.b16 %v941
    %v1618 = vunpack.c.l.b16 %v942
    %v1619 = vunpack.c.h.b16 %v942
    %v1620 = vunpack.c.l.b16 %v943
    %v1621 = vunpack.c.h.b16 %v943
    %v1622 = vunpack.c.l.b16 %v944
    %v1623 = vunpack.c.h.b16 %v944
    %v1624 = vunpack.c.l.b16 %v945
    %v1625 = vunpack.c.h.b16 %v945
    %v1626 = vunpack.c.l.b16 %v946
    %v1627 = vunpack.c.h.b16 %v946
    %v1628 = vunpack.c.l.b16 %v947
    %v1629 = vunpack.c.h.b16 %v947
    %v1630 = vunpack.c.l.b16 %v948
    %v1631 = vunpack.c.h.b16 %v948
    %v1632 = vunpack.c.l.b16 %v949
    %v1633 = vunpack.c.h.b16 %v949
    %v1634 = vunpack.c.l.b16 %v950
    %v1635 = vunpack.c.h.b16 %v950
    %v1636 = vunpack.c.l.b16 %v951
    %v1637 = vunpack.c.h.b16 %v951
    %v1638 = vunpack.c.l.b16 %v952
    %v1639 = vunpack.c.h.b16 %v952
    %v1640 = vunpack.c.l.b16 %v953
    %v1641 = vunpack.c.h.b16 %v953
    %v1642 = vunpack.c.l.b16 %v954
    %v1643 = vunpack.c.h.b16 %v954
    %v1644 = vunpack.c.l.b16 %v955
    %v1645 = vunpack.c.h.b16 %v955
    %v1646 = vunpack.c.l.b16 %v956
    %v1647 = vunpack.c.h.b16 %v956
    %v1648 = vunpack.c.l.b16 %v957
    %v1649 = vunpack.c.h.b16 %v957
    %v1650 = vunpack.c.l.b16 %v958
    %v1651 = vunpack.c.h.b16 %v958
    %v1652 = vunpack.c.l.b16 %v959
    %v1653 = vunpack.c.h.b16 %v959
    %v1654 = vunpack.c.l.b16 %v960
    %v1655 = vunpack.c.h.b16 %v960
    %v1656 = vunpack.c.l.b16 %v961
    %v1657 = vunpack.c.h.b16 %v961
    %v1658 = vunpack.c.l.b16 %v962
    %v1659 = vunpack.c.h.b16 %v962
    %v1660 = vunpack.c.l.b16 %v963
    %v1661 = vunpack.c.h.b16 %v963
    %v1662 = vunpack.c.l.b16 %v964
    %v1663 = vunpack.c.h.b16 %v964
    %v1664 = vunpack.c.l.b16 %v965
    %v1665 = vunpack.c.h.b16 %v965
    %v1666 = vunpack.c.l.b16 %v966
    %v1667 = vunpack.c.h.b16 %v966
    %v1668 = vunpack.c.l.b16 %v967
    %v1669 = vunpack.c.h.b16 %v967
    %v1670 = vunpack.c.l.b16 %v968
    %v1671 = vunpack.c.h.b16 %v968
    %v1672 = vunpack.c.l.b16 %v969
    %v1673 = vunpack.c.h.b16 %v969
    %v1674 = vunpack.c.l.b16 %v970
    %v1675 = vunpack.c.h.b16 %v970
    %v1676 = vunpack.c.l.b16 %v971
    %v1677 = vunpack.c.h.b16 %v971
    %v1678 = vunpack.c.l.b16 %v972
    %v1679 = vunpack.c.h.b16 %v972
    %v1680 = vunpack.c.l.b16 %v973
    %v1681 = vunpack.c.h.b16 %v973
    %v1682 = vunpack.c.l.b16 %v974
    %v1683 = vunpack.c.h.b16 %v974
    %v1684 = vunpack.c.l.b16 %v975
    %v1685 = vunpack.c.h.b16 %v975
    %v1686 = vunpack.c.l.b16 %v976
    %v1687 = vunpack.c.h.b16 %v976
    %v1688 = vunpack.c.l.b16 %v977
    %v1689 = vunpack.c.h.b16 %v977
    %v1690 = vunpack.c.l.b16 %v978
    %v1691 = vunpack.c.h.b16 %v978
    %v1692 = vunpack.c.l.b16 %v979
    %v1693 = vunpack.c.h.b16 %v979
    %v1694 = vunpack.c.l.b16 %v980
    %v1695 = vunpack.c.h.b16 %v980
    %v1696 = vunpack.c.l.b16 %v981
    %v1697 = vunpack.c.h.b16 %v981
    %v1698 = vunpack.c.l.b16 %v982
    %v1699 = vunpack.c.h.b16 %v982
    %v1700 = vunpack.c.l.b16 %v983
    %v1701 = vunpack.c.h.b16 %v983
    %v1702 = vunpack.c.l.b16 %v984
    %v1703 = vunpack.c.h.b16 %v984
    %v1704 = vunpack.c.l.b16 %v985
    %v1705 = vunpack.c.h.b16 %v985
    %v1706 = vunpack.c.l.b16 %v986
    %v1707 = vunpack.c.h.b16 %v986
    %v1708 = vunpack.c.l.b16 %v987
    %v1709 = vunpack.c.h.b16 %v987
    %v1710 = vunpack.c.l.b16 %v988
    %v1711 = vunpack.c.h.b16 %v988
    %v1712 = vunpack.c.l.b16 %v989
    %v1713 = vunpack.c.h.b16 %v989
    %v1714 = vunpack.c.l.b16 %v990
    %v1715 = vunpack.c.h.b16 %v990
    %v1716 = vunpack.c.l.b16 %v991
    %v1717 = vunpack.c.h.b16 %v991
    %v1718 = vunpack.c.l.b16 %v992
    %v1719 = vunpack.c.h.b16 %v992
    %v1720 = vunpack.c.l.b16 %v993
    %v1721 = vunpack.c.h.b16 %v993
    %v1722 = vunpack.c.l.b16 %v994
    %v1723 = vunpack.c.h.b16 %v994
    %v1724 = vunpack.c.l.b16 %v995
    %v1725 = vunpack.c.h.b16 %v995
    %v1726 = vunpack.c.l.b16 %v996
    %v1727 = vunpack.c.h.b16 %v996
    %v1728 = vunpack.c.l.b16 %v997
    %v1729 = vunpack.c.h.b16 %v997
    %v1730 = vunpack.c.l.b16 %v998
    %v1731 = vunpack.c.h.b16 %v998
    %v1732 = vunpack.c.l.b16 %v999
    %v1733 = vunpack.c.h.b16 %v999
    %v1734 = vunpack.c.l.b16 %v1000
    %v1735 = vunpack.c.h.b16 %v1000
    %v1736 = vunpack.c.l.b16 %v1001
    %v1737 = vunpack.c.h.b16 %v1001
    %v1738 = vunpack.c.l.b16 %v1002
    %v1739 = vunpack.c.h.b16 %v1002
    %v1740 = vunpack.c.l.b16 %v1003
    %v1741 = vunpack.c.h.b16 %v1003
    %v1742 = vunpack.c.l.b16 %v1004
    %v1743 = vunpack.c.h.b16 %v1004
    %v1744 = vunpack.c.l.b16 %v1005
    %v1745 = vunpack.c.h.b16 %v1005
    %v1746 = vunpack.c.l.b16 %v1006
    %v1747 = vunpack.c.h.b16 %v1006
    %v1748 = vunpack.c.l.b16 %v1007
    %v1749 = vunpack.c.h.b16 %v1007
    %v1750 = vunpack.c.l.b16 %v1008
    %v1751 = vunpack.c.h.b16 %v1008
    %v1752 = vunpack.c.l.b16 %v1009
    %v1753 = vunpack.c.h.b16 %v1009
    %v1754 = vunpack.c.l.b16 %v1010
    %v1755 = vunpack.c.h.b16 %v1010
    %v1756 = vunpack.c.l.b16 %v1011
    %v1757 = vunpack.c.h.b16 %v1011
    %v1758 = vunpack.c.l.b16 %v1012
    %v1759 = vunpack.c.h.b16 %v1012
    %v1760 = vunpack.c.l.b16 %v1013
    %v1761 = vunpack.c.h.b16 %v1013
    %v1762 = vunpack.c.l.b16 %v1014
    %v1763 = vunpack.c.h.b16 %v1014
    %v1764 = vunpack.c.l.b16 %v1015
    %v1765 = vunpack.c.h.b16 %v1015
    %v1766 = vunpack.c.l.b16 %v1016
    %v1767 = vunpack.c.h.b16 %v1016
    %v1768 = vunpack.c.l.b16 %v1017
    %v1769 = vunpack.c.h.b16 %v1017
    %v1770 = vunpack.c.l.b16 %v1018
    %v1771 = vunpack.c.h.b16 %v1018
    %v1772 = vunpack.c.l.b16 %v1019
    %v1773 = vunpack.c.h.b16 %v1019
    %v1774 = vunpack.c.l.b16 %v1020
    %v1775 = vunpack.c.h.b16 %v1020
    %v1776 = vunpack.c.l.b16 %v1021
    %v1777 = vunpack.c.h.b16 %v1021
    %v1778 = vunpack.c.l.b16 %v1022
    %v1779 = vunpack.c.h.b16 %v1022
    %v1780 = vunpack.c.l.b16 %v1023
    %v1781 = vunpack.c.h.b16 %v1023
    %v1782 = vunpack.c.l.b16 %v1024
    %v1783 = vunpack.c.h.b16 %v1024
    %v1784 = vunpack.c.l.b16 %v1025
    %v1785 = vunpack.c.h.b16 %v1025
    %v1786 = vunpack.c.l.b16 %v1026
    %v1787 = vunpack.c.h.b16 %v1026
    %v1788 = vunpack.c.l.b16 %v1027
    %v1789 = vunpack.c.h.b16 %v1027
    %v1790 = vunpack.c.l.b16 %v1028
    %v1791 = vunpack.c.h.b16 %v1028
    %v1792 = vunpack.c.l.b16 %v1029
    %v1793 = vunpack.c.h.b16 %v1029
    %v1794 = vunpack.c.l.b16 %v1030
    %v1795 = vunpack.c.h.b16 %v1030
    %v1796 = vunpack.c.l.b16 %v1031
    %v1797 = vunpack.c.h.b16 %v1031
    %v1798 = vunpack.c.l.b16 %v1032
    %v1799 = vunpack.c.h.b16 %v1032
    %v1800 = vunpack.c.l.b16 %v1033
    %v1801 = vunpack.c.h.b16 %v1033
    %v1802 = vunpack.c.l.b16 %v1034
    %v1803 = vunpack.c.h.b16 %v1034
    %v1804 = vunpack.c.l.b16 %v1035
    %v1805 = vunpack.c.h.b16 %v1035
    %v1806 = vunpack.c.l.b16 %v1036
    %v1807 = vunpack.c.h.b16 %v1036
    %v1808 = vunpack.c.l.b16 %v1037
    %v1809 = vunpack.c.h.b16 %v1037
    %v1810 = vunpack.c.l.b16 %v1038
    %v1811 = vunpack.c.h.b16 %v1038
    %v1812 = vunpack.c.l.b16 %v1039
    %v1813 = vunpack.c.h.b16 %v1039
    %v1814 = vunpack.c.l.b16 %v1040
    %v1815 = vunpack.c.h.b16 %v1040
    %v1816 = vunpack.c.l.b16 %v1041
    %v1817 = vunpack.c.h.b16 %v1041
    %v1818 = vunpack.c.l.b16 %v1042
    %v1819 = vunpack.c.h.b16 %v1042
    %v1820 = vunpack.c.l.b16 %v1043
    %v1821 = vunpack.c.h.b16 %v1043
    %v1822 = vunpack.c.l.b16 %v1044
    %v1823 = vunpack.c.h.b16 %v1044
    %v1824 = vunpack.c.l.b16 %v1045
    %v1825 = vunpack.c.h.b16 %v1045
    %v1826 = vunpack.c.l.b16 %v1046
    %v1827 = vunpack.c.h.b16 %v1046
    %v1828 = vunpack.c.l.b16 %v1047
    %v1829 = vunpack.c.h.b16 %v1047
    %v1830 = vunpack.c.l.b16 %v1048
    %v1831 = vunpack.c.h.b16 %v1048
    %v1832 = vunpack.c.l.b16 %v1049
    %v1833 = vunpack.c.h.b16 %v1049
    %v1834 = vunpack.c.l.b16 %v1050
    %v1835 = vunpack.c.h.b16 %v1050
    %v1836 = vunpack.c.l.b16 %v1051
    %v1837 = vunpack.c.h.b16 %v1051
    %v1838 = vpack.c.b16 %v1334, %v1326
    %v1839 = vpack.c.b16 %v1335, %v1327
    %v1840 = vpack.c.b16 %v1336, %v1328
    %v1841 = vpack.c.b16 %v1337, %v1329
    %v1842 = vpack.c.b16 %v1338, %v1330
    %v1843 = vpack.c.b16 %v1339, %v1331
    %v1844 = vpack.c.b16 %v1340, %v1332
    %v1845 = vpack.c.b16 %v1341, %v1333
    %v1846 = vpack.c.b16 %v1350, %v1342
    %v1847 = vpack.c.b16 %v1351, %v1343
    %v1848 = vpack.c.b16 %v1352, %v1344
    %v1849 = vpack.c.b16 %v1353, %v1345
    %v1850 = vpack.c.b16 %v1354, %v1346
    %v1851 = vpack.c.b16 %v1355, %v1347
    %v1852 = vpack.c.b16 %v1356, %v1348
    %v1853 = vpack.c.b16 %v1357, %v1349
    %v1854 = vpack.c.b16 %v1366, %v1358
    %v1855 = vpack.c.b16 %v1367, %v1359
    %v1856 = vpack.c.b16 %v1368, %v1360
    %v1857 = vpack.c.b16 %v1369, %v1361
    %v1858 = vpack.c.b16 %v1370, %v1362
    %v1859 = vpack.c.b16 %v1371, %v1363
    %v1860 = vpack.c.b16 %v1372, %v1364
    %v1861 = vpack.c.b16 %v1373, %v1365
    %v1862 = vpack.c.b16 %v1382, %v1374
    %v1863 = vpack.c.b16 %v1383, %v1375
    %v1864 = vpack.c.b16 %v1384, %v1376
    %v1865 = vpack.c.b16 %v1385, %v1377
    %v1866 = vpack.c.b16 %v1386, %v1378
    %v1867 = vpack.c.b16 %v1387, %v1379
    %v1868 = vpack.c.b16 %v1388, %v1380
    %v1869 = vpack.c.b16 %v1389, %v1381
    %v1870 = vpack.c.b16 %v1398, %v1390
    %v1871 = vpack.c.b16 %v1399, %v1391
    %v1872 = vpack.c.b16 %v1400, %v1392
    %v1873 = vpack.c.b16 %v1401, %v1393
    %v1874 = vpack.c.b16 %v1402, %v1394
    %v1875 = vpack.c.b16 %v1403, %v1395
    %v1876 = vpack.c.b16 %v1404, %v1396
    %v1877 = vpack.c.b16 %v1405, %v1397
    %v1878 = vpack.c.b16 %v1414, %v1406
    %v1879 = vpack.c.b16 %v1415, %v1407
    %v1880 = vpack.c.b16 %v1416, %v1408
    %v1881 = vpack.c.b16 %v1417, %v1409
    %v1882 = vpack.c.b16 %v1418, %v1410
    %v1883 = vpack.c.b16 %v1419, %v1411
    %v1884 = vpack.c.b16 %v1420, %v1412
    %v1885 = vpack.c.b16 %v1421, %v1413
    %v1886 = vpack.c.b16 %v1430, %v1422
    %v1887 = vpack.c.b16 %v1431, %v1423
    %v1888 = vpack.c.b16 %v1432, %v1424
    %v1889 = vpack.c.b16 %v1433, %v1425
    %v1890 = vpack.c.b16 %v1434, %v1426
    %v1891 = vpack.c.b16 %v1435, %v1427
    %v1892 = vpack.c.b16 %v1436, %v1428
    %v1893 = vpack.c.b16 %v1437, %v1429
    %v1894 = vpack.c.b16 %v1446, %v1438
    %v1895 = vpack.c.b16 %v1447, %v1439
    %v1896 = vpack.c.b16 %v1448, %v1440
    %v1897 = vpack.c.b16 %v1449, %v1441
    %v1898 = vpack.c.b16 %v1450, %v1442
    %v1899 = vpack.c.b16 %v1451, %v1443
    %v1900 = vpack.c.b16 %v1452, %v1444
    %v1901 = vpack.c.b16 %v1453, %v1445
    %v1902 = vpack.c.b16 %v1462, %v1454
    %v1903 = vpack.c.b16 %v1463, %v1455
    %v1904 = vpack.c.b16 %v1464, %v1456
    %v1905 = vpack.c.b16 %v1465, %v1457
    %v1906 = vpack.c.b16 %v1466, %v1458
    %v1907 = vpack.c.b16 %v1467, %v1459
    %v1908 = vpack.c.b16 %v1468, %v1460
    %v1909 = vpack.c.b16 %v1469, %v1461
    %v1910 = vpack.c.b16 %v1478, %v1470
    %v1911 = vpack.c.b16 %v1479, %v1471
    %v1912 = vpack.c.b16 %v1480, %v1472
    %v1913 = vpack.c.b16 %v1481, %v1473
    %v1914 = vpack.c.b16 %v1482, %v1474
    %v1915 = vpack.c.b16 %v1483, %v1475
    %v1916 = vpack.c.b16 %v1484, %v1476
    %v1917 = vpack.c.b16 %v1485, %v1477
    %v1918 = vpack.c.b16 %v1494, %v1486
    %v1919 = vpack.c.b16 %v1495, %v1487
    %v1920 = vpack.c.b16 %v1496, %v1488
    %v1921 = vpack.c.b16 %v1497, %v1489
    %v1922 = vpack.c.b16 %v1498, %v1490
    %v1923 = vpack.c.b16 %v1499, %v1491
    %v1924 = vpack.c.b16 %v1500, %v1492
    %v1925 = vpack.c.b16 %v1501, %v1493
    %v1926 = vpack.c.b16 %v1510, %v1502
    %v1927 = vpack.c.b16 %v1511, %v1503
    %v1928 = vpack.c.b16 %v1512, %v1504
    %v1929 = vpack.c.b16 %v1513, %v1505
    %v1930 = vpack.c.b16 %v1514, %v1506
    %v1931 = vpack.c.b16 %v1515, %v1507
    %v1932 = vpack.c.b16 %v1516, %v1508
    %v1933 = vpack.c.b16 %v1517, %v1509
    %v1934 = vpack.c.b16 %v1526, %v1518
    %v1935 = vpack.c.b16 %v1527, %v1519
    %v1936 = vpack.c.b16 %v1528, %v1520
    %v1937 = vpack.c.b16 %v1529, %v1521
    %v1938 = vpack.c.b16 %v1530, %v1522
    %v1939 = vpack.c.b16 %v1531, %v1523
    %v1940 = vpack.c.b16 %v1532, %v1524
    %v1941 = vpack.c.b16 %v1533, %v1525
    %v1942 = vpack.c.b16 %v1542, %v1534
    %v1943 = vpack.c.b16 %v1543, %v1535
    %v1944 = vpack.c.b16 %v1544, %v1536
    %v1945 = vpack.c.b16 %v1545, %v1537
    %v1946 = vpack.c.b16 %v1546, %v1538
    %v1947 = vpack.c.b16 %v1547, %v1539
    %v1948 = vpack.c.b16 %v1548, %v1540
    %v1949 = vpack.c.b16 %v1549, %v1541
    %v1950 = vpack.c.b16 %v1558, %v1550
    %v1951 = vpack.c.b16 %v1559, %v1551
    %v1952 = vpack.c.b16 %v1560, %v1552
    %v1953 = vpack.c.b16 %v1561, %v1553
    %v1954 = vpack.c.b16 %v1562, %v1554
    %v1955 = vpack.c.b16 %v1563, %v1555
    %v1956 = vpack.c.b16 %v1564, %v1556
    %v1957 = vpack.c.b16 %v1565, %v1557
    %v1958 = vpack.c.b16 %v1574, %v1566
    %v1959 = vpack.c.b16 %v1575, %v1567
    %v1960 = vpack.c.b16 %v1576, %v1568
    %v1961 = vpack.c.b16 %v1577, %v1569
    %v1962 = vpack.c.b16 %v1578, %v1570
    %v1963 = vpack.c.b16 %v1579, %v1571
    %v1964 = vpack.c.b16 %v1580, %v1572
    %v1965 = vpack.c.b16 %v1581, %v1573
    %v1966 = vpack.c.b16 %v1590, %v1582
    %v1967 = vpack.c.b16 %v1591, %v1583
    %v1968 = vpack.c.b16 %v1592, %v1584
    %v1969 = vpack.c.b16 %v1593, %v1585
    %v1970 = vpack.c.b16 %v1594, %v1586
    %v1971 = vpack.c.b16 %v1595, %v1587
    %v1972 = vpack.c.b16 %v1596, %v1588
    %v1973 = vpack.c.b16 %v1597, %v1589
    %v1974 = vpack.c.b16 %v1606, %v1598
    %v1975 = vpack.c.b16 %v1607, %v1599
    %v1976 = vpack.c.b16 %v1608, %v1600
    %v1977 = vpack.c.b16 %v1609, %v1601
    %v1978 = vpack.c.b16 %v1610, %v1602
    %v1979 = vpack.c.b16 %v1611, %v1603
    %v1980 = vpack.c.b16 %v1612, %v1604
    %v1981 = vpack.c.b16 %v1613, %v1605
    %v1982 = vpack.c.b16 %v1622, %v1614
    %v1983 = vpack.c.b16 %v1623, %v1615
    %v1984 = vpack.c.b16 %v1624, %v1616
    %v1985 = vpack.c.b16 %v1625, %v1617
    %v1986 = vpack.c.b16 %v1626, %v1618
    %v1987 = vpack.c.b16 %v1627, %v1619
    %v1988 = vpack.c.b16 %v1628, %v1620
    %v1989 = vpack.c.b16 %v1629, %v1621
    %v1990 = vpack.c.b16 %v1638, %v1630
    %v1991 = vpack.c.b16 %v1639, %v1631
    %v1992 = vpack.c.b16 %v1640, %v1632
    %v1993 = vpack.c.b16 %v1641, %v1633
    %v1994 = vpack.c.b16 %v1642, %v1634
    %v1995 = vpack.c.b16 %v1643, %v1635
    %v1996 = vpack.c.b16 %v1644, %v1636
    %v1997 = vpack.c.b16 %v1645, %v1637
    %v1998 = vpack.c.b16 %v1654, %v1646
    %v1999 = vpack.c.b16 %v1655, %v1647
    %v2000 = vpack.c.b16 %v1656, %v1648
    %v2001 = vpack.c.b16 %v1657, %v1649
    %v2002 = vpack.c.b16 %v1658, %v1650
    %v2003 = vpack.c.b16 %v1659, %v1651
    %v2004 = vpack.c.b16 %v1660, %v1652
    %v2005 = vpack.c.b16 %v1661, %v1653
    %v2006 = vpack.c.b16 %v1670, %v1662
    %v2007 = vpack.c.b16 %v1671, %v1663
    %v2008 = vpack.c.b16 %v1672, %v1664
    %v2009 = vpack.c.b16 %v1673, %v1665
    %v2010 = vpack.c.b16 %v1674, %v1666
    %v2011 = vpack.c.b16 %v1675, %v1667
    %v2012 = vpack.c.b16 %v1676, %v1668
    %v2013 = vpack.c.b16 %v1677, %v1669
    %v2014 = vpack.c.b16 %v1686, %v1678
    %v2015 = vpack.c.b16 %v1687, %v1679
    %v2016 = vpack.c.b16 %v1688, %v1680
    %v2017 = vpack.c.b16 %v1689, %v1681
    %v2018 = vpack.c.b16 %v1690, %v1682
    %v2019 = vpack.c.b16 %v1691, %v1683
    %v2020 = vpack.c.b16 %v1692, %v1684
    %v2021 = vpack.c.b16 %v1693, %v1685
    %v2022 = vpack.c.b16 %v1702, %v1694
    %v2023 = vpack.c.b16 %v1703, %v1695
    %v2024 = vpack.c.b16 %v1704, %v1696
    %v2025 = vpack.c.b16 %v1705, %v1697
    %v2026 = vpack.c.b16 %v1706, %v1698
    %v2027 = vpack.c.b16 %v1707, %v1699
    %v2028 = vpack.c.b16 %v1708, %v1700
    %v2029 = vpack.c.b16 %v1709, %v1701
    %v2030 = vpack.c.b16 %v1718, %v1710
    %v2031 = vpack.c.b16 %v1719, %v1711
    %v2032 = vpack.c.b16 %v1720, %v1712
    %v2033 = vpack.c.b16 %v1721, %v1713
    %v2034 = vpack.c.b16 %v1722, %v1714
    %v2035 = vpack.c.b16 %v1723, %v1715
    %v2036 = vpack.c.b16 %v1724, %v1716
    %v2037 = vpack.c.b16 %v1725, %v1717
    %v2038 = vpack.c.b16 %v1734, %v1726
    %v2039 = vpack.c.b16 %v1735, %v1727
    %v2040 = vpack.c.b16 %v1736, %v1728
    %v2041 = vpack.c.b16 %v1737, %v1729
    %v2042 = vpack.c.b16 %v1738, %v1730
    %v2043 = vpack.c.b16 %v1739, %v1731
    %v2044 = vpack.c.b16 %v1740, %v1732
    %v2045 = vpack.c.b16 %v1741, %v1733
    %v2046 = vpack.c.b16 %v1750, %v1742
    %v2047 = vpack.c.b16 %v1751, %v1743
    %v2048 = vpack.c.b16 %v1752, %v1744
    %v2049 = vpack.c.b16 %v1753, %v1745
    %v2050 = vpack.c.b16 %v1754, %v1746
    %v2051 = vpack.c.b16 %v1755, %v1747
    %v2052 = vpack.c.b16 %v1756, %v1748
    %v2053 = vpack.c.b16 %v1757, %v1749
    %v2054 = vpack.c.b16 %v1766, %v1758
    %v2055 = vpack.c.b16 %v1767, %v1759
    %v2056 = vpack.c.b16 %v1768, %v1760
    %v2057 = vpack.c.b16 %v1769, %v1761
    %v2058 = vpack.c.b16 %v1770, %v1762
    %v2059 = vpack.c.b16 %v1771, %v1763
    %v2060 = vpack.c.b16 %v1772, %v1764
    %v2061 = vpack.c.b16 %v1773, %v1765
    %v2062 = vpack.c.b16 %v1782, %v1774
    %v2063 = vpack.c.b16 %v1783, %v1775
    %v2064 = vpack.c.b16 %v1784, %v1776
    %v2065 = vpack.c.b16 %v1785, %v1777
    %v2066 = vpack.c.b16 %v1786, %v1778
    %v2067 = vpack.c.b16 %v1787, %v1779
    %v2068 = vpack.c.b16 %v1788, %v1780
    %v2069 = vpack.c.b16 %v1789, %v1781
    %v2070 = vpack.c.b16 %v1798, %v1790
    %v2071 = vpack.c.b16 %v1799, %v1791
    %v2072 = vpack.c.b16 %v1800, %v1792
    %v2073 = vpack.c.b16 %v1801, %v1793
    %v2074 = vpack.c.b16 %v1802, %v1794
    %v2075 = vpack.c.b16 %v1803, %v1795
    %v2076 = vpack.c.b16 %v1804, %v1796
    %v2077 = vpack.c.b16 %v1805, %v1797
    %v2078 = vpack.c.b16 %v1814, %v1806
    %v2079 = vpack.c.b16 %v1815, %v1807
    %v2080 = vpack.c.b16 %v1816, %v1808
    %v2081 = vpack.c.b16 %v1817, %v1809
    %v2082 = vpack.c.b16 %v1818, %v1810
    %v2083 = vpack.c.b16 %v1819, %v1811
    %v2084 = vpack.c.b16 %v1820, %v1812
    %v2085 = vpack.c.b16 %v1821, %v1813
    %v2086 = vpack.c.b16 %v1830, %v1822
    %v2087 = vpack.c.b16 %v1831, %v1823
    %v2088 = vpack.c.b16 %v1832, %v1824
    %v2089 = vpack.c.b16 %v1833, %v1825
    %v2090 = vpack.c.b16 %v1834, %v1826
    %v2091 = vpack.c.b16 %v1835, %v1827
    %v2092 = vpack.c.b16 %v1836, %v1828
    %v2093 = vpack.c.b16 %v1837, %v1829
    %2350 = vmatpush.bf16.msra.mxu0 %v1894
    %2351 = vmatpush.bf16.msra.mxu0 %v1886
    %2352 = vmatpush.bf16.msra.mxu0 %v1878
    %2353 = vmatpush.bf16.msra.mxu0 %v1870
    %2354 = vmatpush.bf16.msra.mxu0 %v1862
    %2355 = vmatpush.bf16.msra.mxu0 %v1854
    %2356 = vmatpush.bf16.msra.mxu0 %v1846
    %2357 = vmatpush.bf16.msra.mxu0 %v1838
    %2358 = vmatmul.bf16.gmra.mxu0 %v792
    %v2359 = vpop.f32.mrf.mxu0
    %v2360 = vadd.f32 %v1054, %v2359
    %v2361 = vpop.f32.mrf.mxu0
    %2362 = vdwg.mxu0
    %2363 = vmatpush.bf16.msra.mxu0 %v1958
    %2364 = vmatpush.bf16.msra.mxu0 %v1950
    %2365 = vmatpush.bf16.msra.mxu0 %v1942
    %2366 = vmatpush.bf16.msra.mxu0 %v1934
    %2367 = vmatpush.bf16.msra.mxu0 %v1926
    %2368 = vmatpush.bf16.msra.mxu0 %v1918
    %2369 = vmatpush.bf16.msra.mxu0 %v1910
    %2370 = vmatpush.bf16.msra.mxu0 %v1902
    %2371 = vmatmul.bf16.gmra.mxu0 %v793
    %v2372 = vpop.f32.mrf.mxu0
    %v2373 = vadd.f32 %v2360, %v2372
    %v2374 = vpop.f32.mrf.mxu0
    %2375 = vdwg.mxu0
    %2376 = vmatpush.bf16.msra.mxu0 %v2022
    %2377 = vmatpush.bf16.msra.mxu0 %v2014
    %2378 = vmatpush.bf16.msra.mxu0 %v2006
    %2379 = vmatpush.bf16.msra.mxu0 %v1998
    %2380 = vmatpush.bf16.msra.mxu0 %v1990
    %2381 = vmatpush.bf16.msra.mxu0 %v1982
    %2382 = vmatpush.bf16.msra.mxu0 %v1974
    %2383 = vmatpush.bf16.msra.mxu0 %v1966
    %2384 = vmatmul.bf16.gmra.mxu0 %v794
    %v2385 = vpop.f32.mrf.mxu0
    %v2386 = vadd.f32 %v2373, %v2385
    %v2387 = vpop.f32.mrf.mxu0
    %2388 = vdwg.mxu0
    %2389 = vmatpush.bf16.msra.mxu0 %v2086
    %2390 = vmatpush.bf16.msra.mxu0 %v2078
    %2391 = vmatpush.bf16.msra.mxu0 %v2070
    %2392 = vmatpush.bf16.msra.mxu0 %v2062
    %2393 = vmatpush.bf16.msra.mxu0 %v2054
    %2394 = vmatpush.bf16.msra.mxu0 %v2046
    %2395 = vmatpush.bf16.msra.mxu0 %v2038
    %2396 = vmatpush.bf16.msra.mxu0 %v2030
    %2397 = vmatmul.bf16.gmra.mxu0 %v795
    %v2398 = vpop.f32.mrf.mxu0
    %v2399 = vadd.f32 %v2386, %v2398
    %v2400 = vpop.f32.mrf.mxu0
    %2401 = vdwg.mxu0
    %2402 = vmatpush.bf16.msra.mxu0 %v1895
    %2403 = vmatpush.bf16.msra.mxu0 %v1887
    %2404 = vmatpush.bf16.msra.mxu0 %v1879
    %2405 = vmatpush.bf16.msra.mxu0 %v1871
    %2406 = vmatpush.bf16.msra.mxu0 %v1863
    %2407 = vmatpush.bf16.msra.mxu0 %v1855
    %2408 = vmatpush.bf16.msra.mxu0 %v1847
    %2409 = vmatpush.bf16.msra.mxu0 %v1839
    %2410 = vmatmul.bf16.gmra.mxu0 %v792
    %v2411 = vpop.f32.mrf.mxu0
    %v2412 = vadd.f32 %v1055, %v2411
    %v2413 = vpop.f32.mrf.mxu0
    %2414 = vdwg.mxu0
    %2415 = vmatpush.bf16.msra.mxu0 %v1959
    %2416 = vmatpush.bf16.msra.mxu0 %v1951
    %2417 = vmatpush.bf16.msra.mxu0 %v1943
    %2418 = vmatpush.bf16.msra.mxu0 %v1935
    %2419 = vmatpush.bf16.msra.mxu0 %v1927
    %2420 = vmatpush.bf16.msra.mxu0 %v1919
    %2421 = vmatpush.bf16.msra.mxu0 %v1911
    %2422 = vmatpush.bf16.msra.mxu0 %v1903
    %2423 = vmatmul.bf16.gmra.mxu0 %v793
    %v2424 = vpop.f32.mrf.mxu0
    %v2425 = vadd.f32 %v2412, %v2424
    %v2426 = vpop.f32.mrf.mxu0
    %2427 = vdwg.mxu0
    %2428 = vmatpush.bf16.msra.mxu0 %v2023
    %2429 = vmatpush.bf16.msra.mxu0 %v2015
    %2430 = vmatpush.bf16.msra.mxu0 %v2007
    %2431 = vmatpush.bf16.msra.mxu0 %v1999
    %2432 = vmatpush.bf16.msra.mxu0 %v1991
    %2433 = vmatpush.bf16.msra.mxu0 %v1983
    %2434 = vmatpush.bf16.msra.mxu0 %v1975
    %2435 = vmatpush.bf16.msra.mxu0 %v1967
    %2436 = vmatmul.bf16.gmra.mxu0 %v794
    %v2437 = vpop.f32.mrf.mxu0
    %v2438 = vadd.f32 %v2425, %v2437
    %v2439 = vpop.f32.mrf.mxu0
    %2440 = vdwg.mxu0
    %2441 = vmatpush.bf16.msra.mxu0 %v2087
    %2442 = vmatpush.bf16.msra.mxu0 %v2079
    %2443 = vmatpush.bf16.msra.mxu0 %v2071
    %2444 = vmatpush.bf16.msra.mxu0 %v2063
    %2445 = vmatpush.bf16.msra.mxu0 %v2055
    %2446 = vmatpush.bf16.msra.mxu0 %v2047
    %2447 = vmatpush.bf16.msra.mxu0 %v2039
    %2448 = vmatpush.bf16.msra.mxu0 %v2031
    %2449 = vmatmul.bf16.gmra.mxu0 %v795
    %v2450 = vpop.f32.mrf.mxu0
    %v2451 = vadd.f32 %v2438, %v2450
    %v2452 = vpop.f32.mrf.mxu0
    %2453 = vdwg.mxu0
    %2454 = vmatpush.bf16.msra.mxu0 %v1896
    %2455 = vmatpush.bf16.msra.mxu0 %v1888
    %2456 = vmatpush.bf16.msra.mxu0 %v1880
    %2457 = vmatpush.bf16.msra.mxu0 %v1872
    %2458 = vmatpush.bf16.msra.mxu0 %v1864
    %2459 = vmatpush.bf16.msra.mxu0 %v1856
    %2460 = vmatpush.bf16.msra.mxu0 %v1848
    %2461 = vmatpush.bf16.msra.mxu0 %v1840
    %2462 = vmatmul.bf16.gmra.mxu0 %v792
    %v2463 = vpop.f32.mrf.mxu0
    %v2464 = vadd.f32 %v1056, %v2463
    %v2465 = vpop.f32.mrf.mxu0
    %2466 = vdwg.mxu0
    %2467 = vmatpush.bf16.msra.mxu0 %v1960
    %2468 = vmatpush.bf16.msra.mxu0 %v1952
    %2469 = vmatpush.bf16.msra.mxu0 %v1944
    %2470 = vmatpush.bf16.msra.mxu0 %v1936
    %2471 = vmatpush.bf16.msra.mxu0 %v1928
    %2472 = vmatpush.bf16.msra.mxu0 %v1920
    %2473 = vmatpush.bf16.msra.mxu0 %v1912
    %2474 = vmatpush.bf16.msra.mxu0 %v1904
    %2475 = vmatmul.bf16.gmra.mxu0 %v793
    %v2476 = vpop.f32.mrf.mxu0
    %v2477 = vadd.f32 %v2464, %v2476
    %v2478 = vpop.f32.mrf.mxu0
    %2479 = vdwg.mxu0
    %2480 = vmatpush.bf16.msra.mxu0 %v2024
    %2481 = vmatpush.bf16.msra.mxu0 %v2016
    %2482 = vmatpush.bf16.msra.mxu0 %v2008
    %2483 = vmatpush.bf16.msra.mxu0 %v2000
    %2484 = vmatpush.bf16.msra.mxu0 %v1992
    %2485 = vmatpush.bf16.msra.mxu0 %v1984
    %2486 = vmatpush.bf16.msra.mxu0 %v1976
    %2487 = vmatpush.bf16.msra.mxu0 %v1968
    %2488 = vmatmul.bf16.gmra.mxu0 %v794
    %v2489 = vpop.f32.mrf.mxu0
    %v2490 = vadd.f32 %v2477, %v2489
    %v2491 = vpop.f32.mrf.mxu0
    %2492 = vdwg.mxu0
    %2493 = vmatpush.bf16.msra.mxu0 %v2088
    %2494 = vmatpush.bf16.msra.mxu0 %v2080
    %2495 = vmatpush.bf16.msra.mxu0 %v2072
    %2496 = vmatpush.bf16.msra.mxu0 %v2064
    %2497 = vmatpush.bf16.msra.mxu0 %v2056
    %2498 = vmatpush.bf16.msra.mxu0 %v2048
    %2499 = vmatpush.bf16.msra.mxu0 %v2040
    %2500 = vmatpush.bf16.msra.mxu0 %v2032
    %2501 = vmatmul.bf16.gmra.mxu0 %v795
    %v2502 = vpop.f32.mrf.mxu0
    %v2503 = vadd.f32 %v2490, %v2502
    %v2504 = vpop.f32.mrf.mxu0
    %2505 = vdwg.mxu0
    %2506 = vmatpush.bf16.msra.mxu0 %v1897
    %2507 = vmatpush.bf16.msra.mxu0 %v1889
    %2508 = vmatpush.bf16.msra.mxu0 %v1881
    %2509 = vmatpush.bf16.msra.mxu0 %v1873
    %2510 = vmatpush.bf16.msra.mxu0 %v1865
    %2511 = vmatpush.bf16.msra.mxu0 %v1857
    %2512 = vmatpush.bf16.msra.mxu0 %v1849
    %2513 = vmatpush.bf16.msra.mxu0 %v1841
    %2514 = vmatmul.bf16.gmra.mxu0 %v792
    %v2515 = vpop.f32.mrf.mxu0
    %v2516 = vadd.f32 %v1057, %v2515
    %v2517 = vpop.f32.mrf.mxu0
    %2518 = vdwg.mxu0
    %2519 = vmatpush.bf16.msra.mxu0 %v1961
    %2520 = vmatpush.bf16.msra.mxu0 %v1953
    %2521 = vmatpush.bf16.msra.mxu0 %v1945
    %2522 = vmatpush.bf16.msra.mxu0 %v1937
    %2523 = vmatpush.bf16.msra.mxu0 %v1929
    %2524 = vmatpush.bf16.msra.mxu0 %v1921
    %2525 = vmatpush.bf16.msra.mxu0 %v1913
    %2526 = vmatpush.bf16.msra.mxu0 %v1905
    %2527 = vmatmul.bf16.gmra.mxu0 %v793
    %v2528 = vpop.f32.mrf.mxu0
    %v2529 = vadd.f32 %v2516, %v2528
    %v2530 = vpop.f32.mrf.mxu0
    %2531 = vdwg.mxu0
    %2532 = vmatpush.bf16.msra.mxu0 %v2025
    %2533 = vmatpush.bf16.msra.mxu0 %v2017
    %2534 = vmatpush.bf16.msra.mxu0 %v2009
    %2535 = vmatpush.bf16.msra.mxu0 %v2001
    %2536 = vmatpush.bf16.msra.mxu0 %v1993
    %2537 = vmatpush.bf16.msra.mxu0 %v1985
    %2538 = vmatpush.bf16.msra.mxu0 %v1977
    %2539 = vmatpush.bf16.msra.mxu0 %v1969
    %2540 = vmatmul.bf16.gmra.mxu0 %v794
    %v2541 = vpop.f32.mrf.mxu0
    %v2542 = vadd.f32 %v2529, %v2541
    %v2543 = vpop.f32.mrf.mxu0
    %2544 = vdwg.mxu0
    %2545 = vmatpush.bf16.msra.mxu0 %v2089
    %2546 = vmatpush.bf16.msra.mxu0 %v2081
    %2547 = vmatpush.bf16.msra.mxu0 %v2073
    %2548 = vmatpush.bf16.msra.mxu0 %v2065
    %2549 = vmatpush.bf16.msra.mxu0 %v2057
    %2550 = vmatpush.bf16.msra.mxu0 %v2049
    %2551 = vmatpush.bf16.msra.mxu0 %v2041
    %2552 = vmatpush.bf16.msra.mxu0 %v2033
    %2553 = vmatmul.bf16.gmra.mxu0 %v795
    %v2554 = vpop.f32.mrf.mxu0
    %v2555 = vadd.f32 %v2542, %v2554
    %v2556 = vpop.f32.mrf.mxu0
    %2557 = vdwg.mxu0
    %2558 = vmatpush.bf16.msra.mxu0 %v1898
    %2559 = vmatpush.bf16.msra.mxu0 %v1890
    %2560 = vmatpush.bf16.msra.mxu0 %v1882
    %2561 = vmatpush.bf16.msra.mxu0 %v1874
    %2562 = vmatpush.bf16.msra.mxu0 %v1866
    %2563 = vmatpush.bf16.msra.mxu0 %v1858
    %2564 = vmatpush.bf16.msra.mxu0 %v1850
    %2565 = vmatpush.bf16.msra.mxu0 %v1842
    %2566 = vmatmul.bf16.gmra.mxu0 %v792
    %v2567 = vpop.f32.mrf.mxu0
    %v2568 = vadd.f32 %v1058, %v2567
    %v2569 = vpop.f32.mrf.mxu0
    %2570 = vdwg.mxu0
    %2571 = vmatpush.bf16.msra.mxu0 %v1962
    %2572 = vmatpush.bf16.msra.mxu0 %v1954
    %2573 = vmatpush.bf16.msra.mxu0 %v1946
    %2574 = vmatpush.bf16.msra.mxu0 %v1938
    %2575 = vmatpush.bf16.msra.mxu0 %v1930
    %2576 = vmatpush.bf16.msra.mxu0 %v1922
    %2577 = vmatpush.bf16.msra.mxu0 %v1914
    %2578 = vmatpush.bf16.msra.mxu0 %v1906
    %2579 = vmatmul.bf16.gmra.mxu0 %v793
    %v2580 = vpop.f32.mrf.mxu0
    %v2581 = vadd.f32 %v2568, %v2580
    %v2582 = vpop.f32.mrf.mxu0
    %2583 = vdwg.mxu0
    %2584 = vmatpush.bf16.msra.mxu0 %v2026
    %2585 = vmatpush.bf16.msra.mxu0 %v2018
    %2586 = vmatpush.bf16.msra.mxu0 %v2010
    %2587 = vmatpush.bf16.msra.mxu0 %v2002
    %2588 = vmatpush.bf16.msra.mxu0 %v1994
    %2589 = vmatpush.bf16.msra.mxu0 %v1986
    %2590 = vmatpush.bf16.msra.mxu0 %v1978
    %2591 = vmatpush.bf16.msra.mxu0 %v1970
    %2592 = vmatmul.bf16.gmra.mxu0 %v794
    %v2593 = vpop.f32.mrf.mxu0
    %v2594 = vadd.f32 %v2581, %v2593
    %v2595 = vpop.f32.mrf.mxu0
    %2596 = vdwg.mxu0
    %2597 = vmatpush.bf16.msra.mxu0 %v2090
    %2598 = vmatpush.bf16.msra.mxu0 %v2082
    %2599 = vmatpush.bf16.msra.mxu0 %v2074
    %2600 = vmatpush.bf16.msra.mxu0 %v2066
    %2601 = vmatpush.bf16.msra.mxu0 %v2058
    %2602 = vmatpush.bf16.msra.mxu0 %v2050
    %2603 = vmatpush.bf16.msra.mxu0 %v2042
    %2604 = vmatpush.bf16.msra.mxu0 %v2034
    %2605 = vmatmul.bf16.gmra.mxu0 %v795
    %v2606 = vpop.f32.mrf.mxu0
    %v2607 = vadd.f32 %v2594, %v2606
    %v2608 = vpop.f32.mrf.mxu0
    %2609 = vdwg.mxu0
    %2610 = vmatpush.bf16.msra.mxu0 %v1899
    %2611 = vmatpush.bf16.msra.mxu0 %v1891
    %2612 = vmatpush.bf16.msra.mxu0 %v1883
    %2613 = vmatpush.bf16.msra.mxu0 %v1875
    %2614 = vmatpush.bf16.msra.mxu0 %v1867
    %2615 = vmatpush.bf16.msra.mxu0 %v1859
    %2616 = vmatpush.bf16.msra.mxu0 %v1851
    %2617 = vmatpush.bf16.msra.mxu0 %v1843
    %2618 = vmatmul.bf16.gmra.mxu0 %v792
    %v2619 = vpop.f32.mrf.mxu0
    %v2620 = vadd.f32 %v1059, %v2619
    %v2621 = vpop.f32.mrf.mxu0
    %2622 = vdwg.mxu0
    %2623 = vmatpush.bf16.msra.mxu0 %v1963
    %2624 = vmatpush.bf16.msra.mxu0 %v1955
    %2625 = vmatpush.bf16.msra.mxu0 %v1947
    %2626 = vmatpush.bf16.msra.mxu0 %v1939
    %2627 = vmatpush.bf16.msra.mxu0 %v1931
    %2628 = vmatpush.bf16.msra.mxu0 %v1923
    %2629 = vmatpush.bf16.msra.mxu0 %v1915
    %2630 = vmatpush.bf16.msra.mxu0 %v1907
    %2631 = vmatmul.bf16.gmra.mxu0 %v793
    %v2632 = vpop.f32.mrf.mxu0
    %v2633 = vadd.f32 %v2620, %v2632
    %v2634 = vpop.f32.mrf.mxu0
    %2635 = vdwg.mxu0
    %2636 = vmatpush.bf16.msra.mxu0 %v2027
    %2637 = vmatpush.bf16.msra.mxu0 %v2019
    %2638 = vmatpush.bf16.msra.mxu0 %v2011
    %2639 = vmatpush.bf16.msra.mxu0 %v2003
    %2640 = vmatpush.bf16.msra.mxu0 %v1995
    %2641 = vmatpush.bf16.msra.mxu0 %v1987
    %2642 = vmatpush.bf16.msra.mxu0 %v1979
    %2643 = vmatpush.bf16.msra.mxu0 %v1971
    %2644 = vmatmul.bf16.gmra.mxu0 %v794
    %v2645 = vpop.f32.mrf.mxu0
    %v2646 = vadd.f32 %v2633, %v2645
    %v2647 = vpop.f32.mrf.mxu0
    %2648 = vdwg.mxu0
    %2649 = vmatpush.bf16.msra.mxu0 %v2091
    %2650 = vmatpush.bf16.msra.mxu0 %v2083
    %2651 = vmatpush.bf16.msra.mxu0 %v2075
    %2652 = vmatpush.bf16.msra.mxu0 %v2067
    %2653 = vmatpush.bf16.msra.mxu0 %v2059
    %2654 = vmatpush.bf16.msra.mxu0 %v2051
    %2655 = vmatpush.bf16.msra.mxu0 %v2043
    %2656 = vmatpush.bf16.msra.mxu0 %v2035
    %2657 = vmatmul.bf16.gmra.mxu0 %v795
    %v2658 = vpop.f32.mrf.mxu0
    %v2659 = vadd.f32 %v2646, %v2658
    %v2660 = vpop.f32.mrf.mxu0
    %2661 = vdwg.mxu0
    %2662 = vmatpush.bf16.msra.mxu0 %v1900
    %2663 = vmatpush.bf16.msra.mxu0 %v1892
    %2664 = vmatpush.bf16.msra.mxu0 %v1884
    %2665 = vmatpush.bf16.msra.mxu0 %v1876
    %2666 = vmatpush.bf16.msra.mxu0 %v1868
    %2667 = vmatpush.bf16.msra.mxu0 %v1860
    %2668 = vmatpush.bf16.msra.mxu0 %v1852
    %2669 = vmatpush.bf16.msra.mxu0 %v1844
    %2670 = vmatmul.bf16.gmra.mxu0 %v792
    %v2671 = vpop.f32.mrf.mxu0
    %v2672 = vadd.f32 %v1060, %v2671
    %v2673 = vpop.f32.mrf.mxu0
    %2674 = vdwg.mxu0
    %2675 = vmatpush.bf16.msra.mxu0 %v1964
    %2676 = vmatpush.bf16.msra.mxu0 %v1956
    %2677 = vmatpush.bf16.msra.mxu0 %v1948
    %2678 = vmatpush.bf16.msra.mxu0 %v1940
    %2679 = vmatpush.bf16.msra.mxu0 %v1932
    %2680 = vmatpush.bf16.msra.mxu0 %v1924
    %2681 = vmatpush.bf16.msra.mxu0 %v1916
    %2682 = vmatpush.bf16.msra.mxu0 %v1908
    %2683 = vmatmul.bf16.gmra.mxu0 %v793
    %v2684 = vpop.f32.mrf.mxu0
    %v2685 = vadd.f32 %v2672, %v2684
    %v2686 = vpop.f32.mrf.mxu0
    %2687 = vdwg.mxu0
    %2688 = vmatpush.bf16.msra.mxu0 %v2028
    %2689 = vmatpush.bf16.msra.mxu0 %v2020
    %2690 = vmatpush.bf16.msra.mxu0 %v2012
    %2691 = vmatpush.bf16.msra.mxu0 %v2004
    %2692 = vmatpush.bf16.msra.mxu0 %v1996
    %2693 = vmatpush.bf16.msra.mxu0 %v1988
    %2694 = vmatpush.bf16.msra.mxu0 %v1980
    %2695 = vmatpush.bf16.msra.mxu0 %v1972
    %2696 = vmatmul.bf16.gmra.mxu0 %v794
    %v2697 = vpop.f32.mrf.mxu0
    %v2698 = vadd.f32 %v2685, %v2697
    %v2699 = vpop.f32.mrf.mxu0
    %2700 = vdwg.mxu0
    %2701 = vmatpush.bf16.msra.mxu0 %v2092
    %2702 = vmatpush.bf16.msra.mxu0 %v2084
    %2703 = vmatpush.bf16.msra.mxu0 %v2076
    %2704 = vmatpush.bf16.msra.mxu0 %v2068
    %2705 = vmatpush.bf16.msra.mxu0 %v2060
    %2706 = vmatpush.bf16.msra.mxu0 %v2052
    %2707 = vmatpush.bf16.msra.mxu0 %v2044
    %2708 = vmatpush.bf16.msra.mxu0 %v2036
    %2709 = vmatmul.bf16.gmra.mxu0 %v795
    %v2710 = vpop.f32.mrf.mxu0
    %v2711 = vadd.f32 %v2698, %v2710
    %v2712 = vpop.f32.mrf.mxu0
    %2713 = vdwg.mxu0
    %2714 = vmatpush.bf16.msra.mxu0 %v1901
    %2715 = vmatpush.bf16.msra.mxu0 %v1893
    %2716 = vmatpush.bf16.msra.mxu0 %v1885
    %2717 = vmatpush.bf16.msra.mxu0 %v1877
    %2718 = vmatpush.bf16.msra.mxu0 %v1869
    %2719 = vmatpush.bf16.msra.mxu0 %v1861
    %2720 = vmatpush.bf16.msra.mxu0 %v1853
    %2721 = vmatpush.bf16.msra.mxu0 %v1845
    %2722 = vmatmul.bf16.gmra.mxu0 %v792
    %v2723 = vpop.f32.mrf.mxu0
    %v2724 = vadd.f32 %v1061, %v2723
    %v2725 = vpop.f32.mrf.mxu0
    %2726 = vdwg.mxu0
    %2727 = vmatpush.bf16.msra.mxu0 %v1965
    %2728 = vmatpush.bf16.msra.mxu0 %v1957
    %2729 = vmatpush.bf16.msra.mxu0 %v1949
    %2730 = vmatpush.bf16.msra.mxu0 %v1941
    %2731 = vmatpush.bf16.msra.mxu0 %v1933
    %2732 = vmatpush.bf16.msra.mxu0 %v1925
    %2733 = vmatpush.bf16.msra.mxu0 %v1917
    %2734 = vmatpush.bf16.msra.mxu0 %v1909
    %2735 = vmatmul.bf16.gmra.mxu0 %v793
    %v2736 = vpop.f32.mrf.mxu0
    %v2737 = vadd.f32 %v2724, %v2736
    %v2738 = vpop.f32.mrf.mxu0
    %2739 = vdwg.mxu0
    %2740 = vmatpush.bf16.msra.mxu0 %v2029
    %2741 = vmatpush.bf16.msra.mxu0 %v2021
    %2742 = vmatpush.bf16.msra.mxu0 %v2013
    %2743 = vmatpush.bf16.msra.mxu0 %v2005
    %2744 = vmatpush.bf16.msra.mxu0 %v1997
    %2745 = vmatpush.bf16.msra.mxu0 %v1989
    %2746 = vmatpush.bf16.msra.mxu0 %v1981
    %2747 = vmatpush.bf16.msra.mxu0 %v1973
    %2748 = vmatmul.bf16.gmra.mxu0 %v794
    %v2749 = vpop.f32.mrf.mxu0
    %v2750 = vadd.f32 %v2737, %v2749
    %v2751 = vpop.f32.mrf.mxu0
    %2752 = vdwg.mxu0
    %2753 = vmatpush.bf16.msra.mxu0 %v2093
    %2754 = vmatpush.bf16.msra.mxu0 %v2085
    %2755 = vmatpush.bf16.msra.mxu0 %v2077
    %2756 = vmatpush.bf16.msra.mxu0 %v2069
    %2757 = vmatpush.bf16.msra.mxu0 %v2061
    %2758 = vmatpush.bf16.msra.mxu0 %v2053
    %2759 = vmatpush.bf16.msra.mxu0 %v2045
    %2760 = vmatpush.bf16.msra.mxu0 %v2037
    %2761 = vmatmul.bf16.gmra.mxu0 %v795
    %v2762 = vpop.f32.mrf.mxu0
    %v2763 = vadd.f32 %v2750, %v2762
    %v2764 = vpop.f32.mrf.mxu0
    %2765 = vdwg.mxu0
    %vm2766 = vcmp.gt.f32.partialorder %v2399, 0.0
    %vm2767 = vcmp.gt.f32.partialorder %v2451, 0.0
    %vm2768 = vcmp.gt.f32.partialorder %v2503, 0.0
    %vm2769 = vcmp.gt.f32.partialorder %v2555, 0.0
    %vm2770 = vcmp.gt.f32.partialorder %v2607, 0.0
    %vm2771 = vcmp.gt.f32.partialorder %v2659, 0.0
    %vm2772 = vcmp.gt.f32.partialorder %v2711, 0.0
    %vm2773 = vcmp.gt.f32.partialorder %v2763, 0.0
    %v2774 = vmul.f32 %v2399, 1.442695
    %v2775 = vpow.pop %v2774
    %v2776 = vmul.f32 %v2451, 1.442695
    %v2777 = vpow.pop %v2776
    %v2778 = vmul.f32 %v2503, 1.442695
    %v2779 = vpow.pop %v2778
    %v2780 = vmul.f32 %v2555, 1.442695
    %v2781 = vpow.pop %v2780
    %v2782 = vmul.f32 %v2607, 1.442695
    %v2783 = vpow.pop %v2782
    %v2784 = vmul.f32 %v2659, 1.442695
    %v2785 = vpow.pop %v2784
    %v2786 = vmul.f32 %v2711, 1.442695
    %v2787 = vpow.pop %v2786
    %v2788 = vmul.f32 %v2763, 1.442695
    %v2789 = vpow.pop %v2788
    %v2790 = vsub.f32 %v2775, 1.0
    %v2791 = vsub.f32 %v2777, 1.0
    %v2792 = vsub.f32 %v2779, 1.0
    %v2793 = vsub.f32 %v2781, 1.0
    %v2794 = vsub.f32 %v2783, 1.0
    %v2795 = vsub.f32 %v2785, 1.0
    %v2796 = vsub.f32 %v2787, 1.0
    %v2797 = vsub.f32 %v2789, 1.0
    %v2798 = vmul.f32 %v2790, 1.6732632
    %v2799 = vmul.f32 %v2791, 1.6732632
    %v2800 = vmul.f32 %v2792, 1.6732632
    %v2801 = vmul.f32 %v2793, 1.6732632
    %v2802 = vmul.f32 %v2794, 1.6732632
    %v2803 = vmul.f32 %v2795, 1.6732632
    %v2804 = vmul.f32 %v2796, 1.6732632
    %v2805 = vmul.f32 %v2797, 1.6732632
    %v2806 = vsel %vm2766, %v2399, %v2798
    %v2807 = vsel %vm2767, %v2451, %v2799
    %v2808 = vsel %vm2768, %v2503, %v2800
    %v2809 = vsel %vm2769, %v2555, %v2801
    %v2810 = vsel %vm2770, %v2607, %v2802
    %v2811 = vsel %vm2771, %v2659, %v2803
    %v2812 = vsel %vm2772, %v2711, %v2804
    %v2813 = vsel %vm2773, %v2763, %v2805
    %v2814 = vmul.f32 %v2806, 1.050701
    %v2815 = vmul.f32 %v2807, 1.050701
    %v2816 = vmul.f32 %v2808, 1.050701
    %v2817 = vmul.f32 %v2809, 1.050701
    %v2818 = vmul.f32 %v2810, 1.050701
    %v2819 = vmul.f32 %v2811, 1.050701
    %v2820 = vmul.f32 %v2812, 1.050701
    %v2821 = vmul.f32 %v2813, 1.050701
    %v2822 = vpack.c.bf16 %v2814, %v2814
    %v2823 = vpack.c.bf16 %v2815, %v2815
    %v2824 = vpack.c.bf16 %v2816, %v2816
    %v2825 = vpack.c.bf16 %v2817, %v2817
    %v2826 = vpack.c.bf16 %v2818, %v2818
    %v2827 = vpack.c.bf16 %v2819, %v2819
    %v2828 = vpack.c.bf16 %v2820, %v2820
    %v2829 = vpack.c.bf16 %v2821, %v2821
    %v2830 = vld [vmem:[#allocation14] sm:$0xff]
    %v2831 = vld [vmem:[#allocation14 + $0x8] sm:$0xff]
    %v2832 = vld [vmem:[#allocation14 + $0x10] sm:$0xff]
    %v2833 = vld [vmem:[#allocation14 + $0x18] sm:$0xf]
    %v2834 = vld [vmem:[#allocation14 + $0x1c] sm:$0xff]
    %v2835 = vld [vmem:[#allocation14 + $0x24] sm:$0xff]
    %v2836 = vld [vmem:[#allocation14 + $0x2c] sm:$0xff]
    %v2837 = vld [vmem:[#allocation14 + $0x34] sm:$0xf]
    %v2838 = vld [vmem:[#allocation14 + $0x38] sm:$0xff]
    %v2839 = vld [vmem:[#allocation14 + $0x40] sm:$0xff]
    %v2840 = vld [vmem:[#allocation14 + $0x48] sm:$0xff]
    %v2841 = vld [vmem:[#allocation14 + $0x50] sm:$0xf]
    %v2842 = vld [vmem:[#allocation14 + $0x54] sm:$0xff]
    %v2843 = vld [vmem:[#allocation14 + $0x5c] sm:$0xff]
    %v2844 = vld [vmem:[#allocation14 + $0x64] sm:$0xff]
    %v2845 = vld [vmem:[#allocation14 + $0x6c] sm:$0xf]
    %v2846 = vld [vmem:[#allocation14 + $0x70] sm:$0xff]
    %v2847 = vld [vmem:[#allocation14 + $0x78] sm:$0xff]
    %v2848 = vld [vmem:[#allocation14 + $0x80] sm:$0xff]
    %v2849 = vld [vmem:[#allocation14 + $0x88] sm:$0xf]
    %v2850 = vld [vmem:[#allocation14 + $0x8c] sm:$0xff]
    %v2851 = vld [vmem:[#allocation14 + $0x94] sm:$0xff]
    %v2852 = vld [vmem:[#allocation14 + $0x9c] sm:$0xff]
    %v2853 = vld [vmem:[#allocation14 + $0xa4] sm:$0xf]
    %v2854 = vld [vmem:[#allocation14 + $0xa8] sm:$0xff]
    %v2855 = vld [vmem:[#allocation14 + $0xb0] sm:$0xff]
    %v2856 = vld [vmem:[#allocation14 + $0xb8] sm:$0xff]
    %v2857 = vld [vmem:[#allocation14 + $0xc0] sm:$0xf]
    %v2858 = vld [vmem:[#allocation14 + $0xc4] sm:$0xff]
    %v2859 = vld [vmem:[#allocation14 + $0xcc] sm:$0xff]
    %v2860 = vld [vmem:[#allocation14 + $0xd4] sm:$0xff]
    %v2861 = vld [vmem:[#allocation14 + $0xdc] sm:$0xf]
    %v2862 = vld [vmem:[#allocation14 + $0xe0] sm:$0xff]
    %v2863 = vld [vmem:[#allocation14 + $0xe8] sm:$0xff]
    %v2864 = vld [vmem:[#allocation14 + $0xf0] sm:$0xff]
    %v2865 = vld [vmem:[#allocation14 + $0xf8] sm:$0xf]
    %v2866 = vld [vmem:[#allocation14 + $0xfc] sm:$0xff]
    %v2867 = vld [vmem:[#allocation14 + $0x104] sm:$0xff]
    %v2868 = vld [vmem:[#allocation14 + $0x10c] sm:$0xff]
    %v2869 = vld [vmem:[#allocation14 + $0x114] sm:$0xf]
    %v2870 = vld [vmem:[#allocation14 + $0x118] sm:$0xff]
    %v2871 = vld [vmem:[#allocation14 + $0x120] sm:$0xff]
    %v2872 = vld [vmem:[#allocation14 + $0x128] sm:$0xff]
    %v2873 = vld [vmem:[#allocation14 + $0x130] sm:$0xf]
    %v2874 = vld [vmem:[#allocation14 + $0x134] sm:$0xff]
    %v2875 = vld [vmem:[#allocation14 + $0x13c] sm:$0xff]
    %v2876 = vld [vmem:[#allocation14 + $0x144] sm:$0xff]
    %v2877 = vld [vmem:[#allocation14 + $0x14c] sm:$0xf]
    %v2878 = vld [vmem:[#allocation14 + $0x150] sm:$0xff]
    %v2879 = vld [vmem:[#allocation14 + $0x158] sm:$0xff]
    %v2880 = vld [vmem:[#allocation14 + $0x160] sm:$0xff]
    %v2881 = vld [vmem:[#allocation14 + $0x168] sm:$0xf]
    %v2882 = vld [vmem:[#allocation14 + $0x16c] sm:$0xff]
    %v2883 = vld [vmem:[#allocation14 + $0x174] sm:$0xff]
    %v2884 = vld [vmem:[#allocation14 + $0x17c] sm:$0xff]
    %v2885 = vld [vmem:[#allocation14 + $0x184] sm:$0xf]
    %v2886 = vld [vmem:[#allocation14 + $0x188] sm:$0xff]
    %v2887 = vld [vmem:[#allocation14 + $0x190] sm:$0xff]
    %v2888 = vld [vmem:[#allocation14 + $0x198] sm:$0xff]
    %v2889 = vld [vmem:[#allocation14 + $0x1a0] sm:$0xf]
    %v2890 = vld [vmem:[#allocation14 + $0x1a4] sm:$0xff]
    %v2891 = vld [vmem:[#allocation14 + $0x1ac] sm:$0xff]
    %v2892 = vld [vmem:[#allocation14 + $0x1b4] sm:$0xff]
    %v2893 = vld [vmem:[#allocation14 + $0x1bc] sm:$0xf]
    %v2894 = vld [vmem:[#allocation14 + $0x1c0] sm:$0xff]
    %v2895 = vld [vmem:[#allocation14 + $0x1c8] sm:$0xff]
    %v2896 = vld [vmem:[#allocation14 + $0x1d0] sm:$0xff]
    %v2897 = vld [vmem:[#allocation14 + $0x1d8] sm:$0xf]
    %v2898 = vld [vmem:[#allocation14 + $0x1dc] sm:$0xff]
    %v2899 = vld [vmem:[#allocation14 + $0x1e4] sm:$0xff]
    %v2900 = vld [vmem:[#allocation14 + $0x1ec] sm:$0xff]
    %v2901 = vld [vmem:[#allocation14 + $0x1f4] sm:$0xf]
    %v2902 = vld [vmem:[#allocation14 + $0x1f8] sm:$0xff]
    %v2903 = vld [vmem:[#allocation14 + $0x200] sm:$0xff]
    %v2904 = vld [vmem:[#allocation14 + $0x208] sm:$0xff]
    %v2905 = vld [vmem:[#allocation14 + $0x210] sm:$0xf]
    %v2906 = vld [vmem:[#allocation14 + $0x214] sm:$0xff]
    %v2907 = vld [vmem:[#allocation14 + $0x21c] sm:$0xff]
    %v2908 = vld [vmem:[#allocation14 + $0x224] sm:$0xff]
    %v2909 = vld [vmem:[#allocation14 + $0x22c] sm:$0xf]
    %v2910 = vld [vmem:[#allocation14 + $0x230] sm:$0xff]
    %v2911 = vld [vmem:[#allocation14 + $0x238] sm:$0xff]
    %v2912 = vld [vmem:[#allocation14 + $0x240] sm:$0xff]
    %v2913 = vld [vmem:[#allocation14 + $0x248] sm:$0xf]
    %v2914 = vld [vmem:[#allocation14 + $0x24c] sm:$0xff]
    %v2915 = vld [vmem:[#allocation14 + $0x254] sm:$0xff]
    %v2916 = vld [vmem:[#allocation14 + $0x25c] sm:$0xff]
    %v2917 = vld [vmem:[#allocation14 + $0x264] sm:$0xf]
    %v2918 = vld [vmem:[#allocation14 + $0x268] sm:$0xff]
    %v2919 = vld [vmem:[#allocation14 + $0x270] sm:$0xff]
    %v2920 = vld [vmem:[#allocation14 + $0x278] sm:$0xff]
    %v2921 = vld [vmem:[#allocation14 + $0x280] sm:$0xf]
    %v2922 = vld [vmem:[#allocation14 + $0x284] sm:$0xff]
    %v2923 = vld [vmem:[#allocation14 + $0x28c] sm:$0xff]
    %v2924 = vld [vmem:[#allocation14 + $0x294] sm:$0xff]
    %v2925 = vld [vmem:[#allocation14 + $0x29c] sm:$0xf]
    %v2926 = vld [vmem:[#allocation14 + $0x2a0] sm:$0xff]
    %v2927 = vld [vmem:[#allocation14 + $0x2a8] sm:$0xff]
    %v2928 = vld [vmem:[#allocation14 + $0x2b0] sm:$0xff]
    %v2929 = vld [vmem:[#allocation14 + $0x2b8] sm:$0xf]
    %v2930 = vld [vmem:[#allocation14 + $0x2bc] sm:$0xff]
    %v2931 = vld [vmem:[#allocation14 + $0x2c4] sm:$0xff]
    %v2932 = vld [vmem:[#allocation14 + $0x2cc] sm:$0xff]
    %v2933 = vld [vmem:[#allocation14 + $0x2d4] sm:$0xf]
    %v2934 = vld [vmem:[#allocation14 + $0x2d8] sm:$0xff]
    %v2935 = vld [vmem:[#allocation14 + $0x2e0] sm:$0xff]
    %v2936 = vld [vmem:[#allocation14 + $0x2e8] sm:$0xff]
    %v2937 = vld [vmem:[#allocation14 + $0x2f0] sm:$0xf]
    %v2938 = vld [vmem:[#allocation14 + $0x2f4] sm:$0xff]
    %v2939 = vld [vmem:[#allocation14 + $0x2fc] sm:$0xff]
    %v2940 = vld [vmem:[#allocation14 + $0x304] sm:$0xff]
    %v2941 = vld [vmem:[#allocation14 + $0x30c] sm:$0xf]
    %v2942 = vld [vmem:[#allocation14 + $0x310] sm:$0xff]
    %v2943 = vld [vmem:[#allocation14 + $0x318] sm:$0xff]
    %v2944 = vld [vmem:[#allocation14 + $0x320] sm:$0xff]
    %v2945 = vld [vmem:[#allocation14 + $0x328] sm:$0xf]
    %v2946 = vld [vmem:[#allocation14 + $0x32c] sm:$0xff]
    %v2947 = vld [vmem:[#allocation14 + $0x334] sm:$0xff]
    %v2948 = vld [vmem:[#allocation14 + $0x33c] sm:$0xff]
    %v2949 = vld [vmem:[#allocation14 + $0x344] sm:$0xf]
    %v2950 = vld [vmem:[#allocation14 + $0x348] sm:$0xff]
    %v2951 = vld [vmem:[#allocation14 + $0x350] sm:$0xff]
    %v2952 = vld [vmem:[#allocation14 + $0x358] sm:$0xff]
    %v2953 = vld [vmem:[#allocation14 + $0x360] sm:$0xf]
    %v2954 = vld [vmem:[#allocation14 + $0x364] sm:$0xff]
    %v2955 = vld [vmem:[#allocation14 + $0x36c] sm:$0xff]
    %v2956 = vld [vmem:[#allocation14 + $0x374] sm:$0xff]
    %v2957 = vld [vmem:[#allocation14 + $0x37c] sm:$0xf]
    %v2958 = vld [vmem:[#allocation14 + $0x380] sm:$0xff]
    %v2959 = vld [vmem:[#allocation14 + $0x388] sm:$0xff]
    %v2960 = vld [vmem:[#allocation14 + $0x390] sm:$0xff]
    %v2961 = vld [vmem:[#allocation14 + $0x398] sm:$0xf]
    %v2962 = vld [vmem:[#allocation14 + $0x39c] sm:$0xff]
    %v2963 = vld [vmem:[#allocation14 + $0x3a4] sm:$0xff]
    %v2964 = vld [vmem:[#allocation14 + $0x3ac] sm:$0xff]
    %v2965 = vld [vmem:[#allocation14 + $0x3b4] sm:$0xf]
    %v2966 = vld [vmem:[#allocation14 + $0x3b8] sm:$0xff]
    %v2967 = vld [vmem:[#allocation14 + $0x3c0] sm:$0xff]
    %v2968 = vld [vmem:[#allocation14 + $0x3c8] sm:$0xff]
    %v2969 = vld [vmem:[#allocation14 + $0x3d0] sm:$0xf]
    %v2970 = vld [vmem:[#allocation14 + $0x3d4] sm:$0xff]
    %v2971 = vld [vmem:[#allocation14 + $0x3dc] sm:$0xff]
    %v2972 = vld [vmem:[#allocation14 + $0x3e4] sm:$0xff]
    %v2973 = vld [vmem:[#allocation14 + $0x3ec] sm:$0xf]
    %v2974 = vld [vmem:[#allocation14 + $0x3f0] sm:$0xff]
    %v2975 = vld [vmem:[#allocation14 + $0x3f8] sm:$0xff]
    %v2976 = vld [vmem:[#allocation14 + $0x400] sm:$0xff]
    %v2977 = vld [vmem:[#allocation14 + $0x408] sm:$0xf]
    %v2978 = vld [vmem:[#allocation14 + $0x40c] sm:$0xff]
    %v2979 = vld [vmem:[#allocation14 + $0x414] sm:$0xff]
    %v2980 = vld [vmem:[#allocation14 + $0x41c] sm:$0xff]
    %v2981 = vld [vmem:[#allocation14 + $0x424] sm:$0xf]
    %v2982 = vld [vmem:[#allocation14 + $0x428] sm:$0xff]
    %v2983 = vld [vmem:[#allocation14 + $0x430] sm:$0xff]
    %v2984 = vld [vmem:[#allocation14 + $0x438] sm:$0xff]
    %v2985 = vld [vmem:[#allocation14 + $0x440] sm:$0xf]
    %v2986 = vld [vmem:[#allocation14 + $0x444] sm:$0xff]
    %v2987 = vld [vmem:[#allocation14 + $0x44c] sm:$0xff]
    %v2988 = vld [vmem:[#allocation14 + $0x454] sm:$0xff]
    %v2989 = vld [vmem:[#allocation14 + $0x45c] sm:$0xf]
    %v2990 = vld [vmem:[#allocation14 + $0x460] sm:$0xff]
    %v2991 = vld [vmem:[#allocation14 + $0x468] sm:$0xff]
    %v2992 = vld [vmem:[#allocation14 + $0x470] sm:$0xff]
    %v2993 = vld [vmem:[#allocation14 + $0x478] sm:$0xf]
    %v2994 = vld [vmem:[#allocation14 + $0x47c] sm:$0xff]
    %v2995 = vld [vmem:[#allocation14 + $0x484] sm:$0xff]
    %v2996 = vld [vmem:[#allocation14 + $0x48c] sm:$0xff]
    %v2997 = vld [vmem:[#allocation14 + $0x494] sm:$0xf]
    %v2998 = vld [vmem:[#allocation14 + $0x498] sm:$0xff]
    %v2999 = vld [vmem:[#allocation14 + $0x4a0] sm:$0xff]
    %v3000 = vld [vmem:[#allocation14 + $0x4a8] sm:$0xff]
    %v3001 = vld [vmem:[#allocation14 + $0x4b0] sm:$0xf]
    %v3002 = vld [vmem:[#allocation14 + $0x4b4] sm:$0xff]
    %v3003 = vld [vmem:[#allocation14 + $0x4bc] sm:$0xff]
    %v3004 = vld [vmem:[#allocation14 + $0x4c4] sm:$0xff]
    %v3005 = vld [vmem:[#allocation14 + $0x4cc] sm:$0xf]
    %v3006 = vld [vmem:[#allocation14 + $0x4d0] sm:$0xff]
    %v3007 = vld [vmem:[#allocation14 + $0x4d8] sm:$0xff]
    %v3008 = vld [vmem:[#allocation14 + $0x4e0] sm:$0xff]
    %v3009 = vld [vmem:[#allocation14 + $0x4e8] sm:$0xf]
    %v3010 = vld [vmem:[#allocation14 + $0x4ec] sm:$0xff]
    %v3011 = vld [vmem:[#allocation14 + $0x4f4] sm:$0xff]
    %v3012 = vld [vmem:[#allocation14 + $0x4fc] sm:$0xff]
    %v3013 = vld [vmem:[#allocation14 + $0x504] sm:$0xf]
    %v3014 = vld [vmem:[#allocation14 + $0x508] sm:$0xff]
    %v3015 = vld [vmem:[#allocation14 + $0x510] sm:$0xff]
    %v3016 = vld [vmem:[#allocation14 + $0x518] sm:$0xff]
    %v3017 = vld [vmem:[#allocation14 + $0x520] sm:$0xf]
    %v3018 = vld [vmem:[#allocation14 + $0x524] sm:$0xff]
    %v3019 = vld [vmem:[#allocation14 + $0x52c] sm:$0xff]
    %v3020 = vld [vmem:[#allocation14 + $0x534] sm:$0xff]
    %v3021 = vld [vmem:[#allocation14 + $0x53c] sm:$0xf]
    %v3022 = vld [vmem:[#allocation14 + $0x540] sm:$0xff]
    %v3023 = vld [vmem:[#allocation14 + $0x548] sm:$0xff]
    %v3024 = vld [vmem:[#allocation14 + $0x550] sm:$0xff]
    %v3025 = vld [vmem:[#allocation14 + $0x558] sm:$0xf]
    %v3026 = vld [vmem:[#allocation14 + $0x55c] sm:$0xff]
    %v3027 = vld [vmem:[#allocation14 + $0x564] sm:$0xff]
    %v3028 = vld [vmem:[#allocation14 + $0x56c] sm:$0xff]
    %v3029 = vld [vmem:[#allocation14 + $0x574] sm:$0xf]
    %v3030 = vld [vmem:[#allocation14 + $0x578] sm:$0xff]
    %v3031 = vld [vmem:[#allocation14 + $0x580] sm:$0xff]
    %v3032 = vld [vmem:[#allocation14 + $0x588] sm:$0xff]
    %v3033 = vld [vmem:[#allocation14 + $0x590] sm:$0xf]
    %v3034 = vld [vmem:[#allocation14 + $0x594] sm:$0xff]
    %v3035 = vld [vmem:[#allocation14 + $0x59c] sm:$0xff]
    %v3036 = vld [vmem:[#allocation14 + $0x5a4] sm:$0xff]
    %v3037 = vld [vmem:[#allocation14 + $0x5ac] sm:$0xf]
    %v3038 = vld [vmem:[#allocation14 + $0x5b0] sm:$0xff]
    %v3039 = vld [vmem:[#allocation14 + $0x5b8] sm:$0xff]
    %v3040 = vld [vmem:[#allocation14 + $0x5c0] sm:$0xff]
    %v3041 = vld [vmem:[#allocation14 + $0x5c8] sm:$0xf]
    %v3042 = vld [vmem:[#allocation14 + $0x5cc] sm:$0xff]
    %v3043 = vld [vmem:[#allocation14 + $0x5d4] sm:$0xff]
    %v3044 = vld [vmem:[#allocation14 + $0x5dc] sm:$0xff]
    %v3045 = vld [vmem:[#allocation14 + $0x5e4] sm:$0xf]
    %v3046 = vld [vmem:[#allocation14 + $0x5e8] sm:$0xff]
    %v3047 = vld [vmem:[#allocation14 + $0x5f0] sm:$0xff]
    %v3048 = vld [vmem:[#allocation14 + $0x5f8] sm:$0xff]
    %v3049 = vld [vmem:[#allocation14 + $0x600] sm:$0xf]
    %v3050 = vld [vmem:[#allocation14 + $0x604] sm:$0xff]
    %v3051 = vld [vmem:[#allocation14 + $0x60c] sm:$0xff]
    %v3052 = vld [vmem:[#allocation14 + $0x614] sm:$0xff]
    %v3053 = vld [vmem:[#allocation14 + $0x61c] sm:$0xf]
    %v3054 = vld [vmem:[#allocation14 + $0x620] sm:$0xff]
    %v3055 = vld [vmem:[#allocation14 + $0x628] sm:$0xff]
    %v3056 = vld [vmem:[#allocation14 + $0x630] sm:$0xff]
    %v3057 = vld [vmem:[#allocation14 + $0x638] sm:$0xf]
    %v3058 = vld [vmem:[#allocation14 + $0x63c] sm:$0xff]
    %v3059 = vld [vmem:[#allocation14 + $0x644] sm:$0xff]
    %v3060 = vld [vmem:[#allocation14 + $0x64c] sm:$0xff]
    %v3061 = vld [vmem:[#allocation14 + $0x654] sm:$0xf]
    %v3062 = vld [vmem:[#allocation14 + $0x658] sm:$0xff]
    %v3063 = vld [vmem:[#allocation14 + $0x660] sm:$0xff]
    %v3064 = vld [vmem:[#allocation14 + $0x668] sm:$0xff]
    %v3065 = vld [vmem:[#allocation14 + $0x670] sm:$0xf]
    %v3066 = vld [vmem:[#allocation14 + $0x674] sm:$0xff]
    %v3067 = vld [vmem:[#allocation14 + $0x67c] sm:$0xff]
    %v3068 = vld [vmem:[#allocation14 + $0x684] sm:$0xff]
    %v3069 = vld [vmem:[#allocation14 + $0x68c] sm:$0xf]
    %v3070 = vld [vmem:[#allocation14 + $0x690] sm:$0xff]
    %v3071 = vld [vmem:[#allocation14 + $0x698] sm:$0xff]
    %v3072 = vld [vmem:[#allocation14 + $0x6a0] sm:$0xff]
    %v3073 = vld [vmem:[#allocation14 + $0x6a8] sm:$0xf]
    %v3074 = vld [vmem:[#allocation14 + $0x6ac] sm:$0xff]
    %v3075 = vld [vmem:[#allocation14 + $0x6b4] sm:$0xff]
    %v3076 = vld [vmem:[#allocation14 + $0x6bc] sm:$0xff]
    %v3077 = vld [vmem:[#allocation14 + $0x6c4] sm:$0xf]
    %v3078 = vld [vmem:[#allocation14 + $0x6c8] sm:$0xff]
    %v3079 = vld [vmem:[#allocation14 + $0x6d0] sm:$0xff]
    %v3080 = vld [vmem:[#allocation14 + $0x6d8] sm:$0xff]
    %v3081 = vld [vmem:[#allocation14 + $0x6e0] sm:$0xf]
    %v3082 = vld [vmem:[#allocation14 + $0x6e4] sm:$0xff]
    %v3083 = vld [vmem:[#allocation14 + $0x6ec] sm:$0xff]
    %v3084 = vld [vmem:[#allocation14 + $0x6f4] sm:$0xff]
    %v3085 = vld [vmem:[#allocation14 + $0x6fc] sm:$0xf]
    %v3086 = vld [vmem:[#allocation14 + $0x700] sm:$0xff]
    %v3087 = vld [vmem:[#allocation14 + $0x708] sm:$0xff]
    %v3088 = vld [vmem:[#allocation14 + $0x710] sm:$0xff]
    %v3089 = vld [vmem:[#allocation14 + $0x718] sm:$0xf]
    %v3090 = vld [vmem:[#allocation14 + $0x71c] sm:$0xff]
    %v3091 = vld [vmem:[#allocation14 + $0x724] sm:$0xff]
    %v3092 = vld [vmem:[#allocation14 + $0x72c] sm:$0xff]
    %v3093 = vld [vmem:[#allocation14 + $0x734] sm:$0xf]
    %v3094 = vld [vmem:[#allocation14 + $0x738] sm:$0xff]
    %v3095 = vld [vmem:[#allocation14 + $0x740] sm:$0xff]
    %v3096 = vld [vmem:[#allocation14 + $0x748] sm:$0xff]
    %v3097 = vld [vmem:[#allocation14 + $0x750] sm:$0xf]
    %v3098 = vld [vmem:[#allocation14 + $0x754] sm:$0xff]
    %v3099 = vld [vmem:[#allocation14 + $0x75c] sm:$0xff]
    %v3100 = vld [vmem:[#allocation14 + $0x764] sm:$0xff]
    %v3101 = vld [vmem:[#allocation14 + $0x76c] sm:$0xf]
    %v3102 = vld [vmem:[#allocation14 + $0x770] sm:$0xff]
    %v3103 = vld [vmem:[#allocation14 + $0x778] sm:$0xff]
    %v3104 = vld [vmem:[#allocation14 + $0x780] sm:$0xff]
    %v3105 = vld [vmem:[#allocation14 + $0x788] sm:$0xf]
    %v3106 = vld [vmem:[#allocation14 + $0x78c] sm:$0xff]
    %v3107 = vld [vmem:[#allocation14 + $0x794] sm:$0xff]
    %v3108 = vld [vmem:[#allocation14 + $0x79c] sm:$0xff]
    %v3109 = vld [vmem:[#allocation14 + $0x7a4] sm:$0xf]
    %v3110 = vld [vmem:[#allocation14 + $0x7a8] sm:$0xff]
    %v3111 = vld [vmem:[#allocation14 + $0x7b0] sm:$0xff]
    %v3112 = vld [vmem:[#allocation14 + $0x7b8] sm:$0xff]
    %v3113 = vld [vmem:[#allocation14 + $0x7c0] sm:$0xf]
    %v3114 = vld [vmem:[#allocation14 + $0x7c4] sm:$0xff]
    %v3115 = vld [vmem:[#allocation14 + $0x7cc] sm:$0xff]
    %v3116 = vld [vmem:[#allocation14 + $0x7d4] sm:$0xff]
    %v3117 = vld [vmem:[#allocation14 + $0x7dc] sm:$0xf]
    %v3118 = vld [vmem:[#allocation14 + $0x7e0] sm:$0xff]
    %v3119 = vld [vmem:[#allocation14 + $0x7e8] sm:$0xff]
    %v3120 = vld [vmem:[#allocation14 + $0x7f0] sm:$0xff]
    %v3121 = vld [vmem:[#allocation14 + $0x7f8] sm:$0xf]
    %v3122 = vld [vmem:[#allocation14 + $0x7fc] sm:$0xff]
    %v3123 = vld [vmem:[#allocation14 + $0x804] sm:$0xff]
    %v3124 = vld [vmem:[#allocation14 + $0x80c] sm:$0xff]
    %v3125 = vld [vmem:[#allocation14 + $0x814] sm:$0xf]
    %v3126 = vld [vmem:[#allocation14 + $0x818] sm:$0xff]
    %v3127 = vld [vmem:[#allocation14 + $0x820] sm:$0xff]
    %v3128 = vld [vmem:[#allocation14 + $0x828] sm:$0xff]
    %v3129 = vld [vmem:[#allocation14 + $0x830] sm:$0xf]
    %v3130 = vld [vmem:[#allocation14 + $0x834] sm:$0xff]
    %v3131 = vld [vmem:[#allocation14 + $0x83c] sm:$0xff]
    %v3132 = vld [vmem:[#allocation14 + $0x844] sm:$0xff]
    %v3133 = vld [vmem:[#allocation14 + $0x84c] sm:$0xf]
    %v3134 = vld [vmem:[#allocation14 + $0x850] sm:$0xff]
    %v3135 = vld [vmem:[#allocation14 + $0x858] sm:$0xff]
    %v3136 = vld [vmem:[#allocation14 + $0x860] sm:$0xff]
    %v3137 = vld [vmem:[#allocation14 + $0x868] sm:$0xf]
    %v3138 = vld [vmem:[#allocation14 + $0x86c] sm:$0xff]
    %v3139 = vld [vmem:[#allocation14 + $0x874] sm:$0xff]
    %v3140 = vld [vmem:[#allocation14 + $0x87c] sm:$0xff]
    %v3141 = vld [vmem:[#allocation14 + $0x884] sm:$0xf]
    %v3142 = vld [vmem:[#allocation14 + $0x888] sm:$0xff]
    %v3143 = vld [vmem:[#allocation14 + $0x890] sm:$0xff]
    %v3144 = vld [vmem:[#allocation14 + $0x898] sm:$0xff]
    %v3145 = vld [vmem:[#allocation14 + $0x8a0] sm:$0xf]
    %v3146 = vld [vmem:[#allocation14 + $0x8a4] sm:$0xff]
    %v3147 = vld [vmem:[#allocation14 + $0x8ac] sm:$0xff]
    %v3148 = vld [vmem:[#allocation14 + $0x8b4] sm:$0xff]
    %v3149 = vld [vmem:[#allocation14 + $0x8bc] sm:$0xf]
    %v3150 = vld [vmem:[#allocation14 + $0x8c0] sm:$0xff]
    %v3151 = vld [vmem:[#allocation14 + $0x8c8] sm:$0xff]
    %v3152 = vld [vmem:[#allocation14 + $0x8d0] sm:$0xff]
    %v3153 = vld [vmem:[#allocation14 + $0x8d8] sm:$0xf]
    %v3154 = vld [vmem:[#allocation14 + $0x8dc] sm:$0xff]
    %v3155 = vld [vmem:[#allocation14 + $0x8e4] sm:$0xff]
    %v3156 = vld [vmem:[#allocation14 + $0x8ec] sm:$0xff]
    %v3157 = vld [vmem:[#allocation14 + $0x8f4] sm:$0xf]
    %v3158 = vld [vmem:[#allocation14 + $0x8f8] sm:$0xff]
    %v3159 = vld [vmem:[#allocation14 + $0x900] sm:$0xff]
    %v3160 = vld [vmem:[#allocation14 + $0x908] sm:$0xff]
    %v3161 = vld [vmem:[#allocation14 + $0x910] sm:$0xf]
    %v3162 = vld [vmem:[#allocation14 + $0x914] sm:$0xff]
    %v3163 = vld [vmem:[#allocation14 + $0x91c] sm:$0xff]
    %v3164 = vld [vmem:[#allocation14 + $0x924] sm:$0xff]
    %v3165 = vld [vmem:[#allocation14 + $0x92c] sm:$0xf]
    %v3166 = vld [vmem:[#allocation14 + $0x930] sm:$0xff]
    %v3167 = vld [vmem:[#allocation14 + $0x938] sm:$0xff]
    %v3168 = vld [vmem:[#allocation14 + $0x940] sm:$0xff]
    %v3169 = vld [vmem:[#allocation14 + $0x948] sm:$0xf]
    %v3170 = vld [vmem:[#allocation14 + $0x94c] sm:$0xff]
    %v3171 = vld [vmem:[#allocation14 + $0x954] sm:$0xff]
    %v3172 = vld [vmem:[#allocation14 + $0x95c] sm:$0xff]
    %v3173 = vld [vmem:[#allocation14 + $0x964] sm:$0xf]
    %v3174 = vld [vmem:[#allocation14 + $0x968] sm:$0xff]
    %v3175 = vld [vmem:[#allocation14 + $0x970] sm:$0xff]
    %v3176 = vld [vmem:[#allocation14 + $0x978] sm:$0xff]
    %v3177 = vld [vmem:[#allocation14 + $0x980] sm:$0xf]
    %v3178 = vld [vmem:[#allocation14 + $0x984] sm:$0xff]
    %v3179 = vld [vmem:[#allocation14 + $0x98c] sm:$0xff]
    %v3180 = vld [vmem:[#allocation14 + $0x994] sm:$0xff]
    %v3181 = vld [vmem:[#allocation14 + $0x99c] sm:$0xf]
    %v3182 = vld [vmem:[#allocation14 + $0x9a0] sm:$0xff]
    %v3183 = vld [vmem:[#allocation14 + $0x9a8] sm:$0xff]
    %v3184 = vld [vmem:[#allocation14 + $0x9b0] sm:$0xff]
    %v3185 = vld [vmem:[#allocation14 + $0x9b8] sm:$0xf]
    %v3186 = vld [vmem:[#allocation14 + $0x9bc] sm:$0xff]
    %v3187 = vld [vmem:[#allocation14 + $0x9c4] sm:$0xff]
    %v3188 = vld [vmem:[#allocation14 + $0x9cc] sm:$0xff]
    %v3189 = vld [vmem:[#allocation14 + $0x9d4] sm:$0xf]
    %v3190 = vld [vmem:[#allocation14 + $0x9d8] sm:$0xff]
    %v3191 = vld [vmem:[#allocation14 + $0x9e0] sm:$0xff]
    %v3192 = vld [vmem:[#allocation14 + $0x9e8] sm:$0xff]
    %v3193 = vld [vmem:[#allocation14 + $0x9f0] sm:$0xf]
    %v3194 = vld [vmem:[#allocation14 + $0x9f4] sm:$0xff]
    %v3195 = vld [vmem:[#allocation14 + $0x9fc] sm:$0xff]
    %v3196 = vld [vmem:[#allocation14 + $0xa04] sm:$0xff]
    %v3197 = vld [vmem:[#allocation14 + $0xa0c] sm:$0xf]
    %v3198 = vld [vmem:[#allocation14 + $0xa10] sm:$0xff]
    %v3199 = vld [vmem:[#allocation14 + $0xa18] sm:$0xff]
    %v3200 = vld [vmem:[#allocation14 + $0xa20] sm:$0xff]
    %v3201 = vld [vmem:[#allocation14 + $0xa28] sm:$0xf]
    %v3202 = vld [vmem:[#allocation14 + $0xa2c] sm:$0xff]
    %v3203 = vld [vmem:[#allocation14 + $0xa34] sm:$0xff]
    %v3204 = vld [vmem:[#allocation14 + $0xa3c] sm:$0xff]
    %v3205 = vld [vmem:[#allocation14 + $0xa44] sm:$0xf]
    %v3206 = vld [vmem:[#allocation14 + $0xa48] sm:$0xff]
    %v3207 = vld [vmem:[#allocation14 + $0xa50] sm:$0xff]
    %v3208 = vld [vmem:[#allocation14 + $0xa58] sm:$0xff]
    %v3209 = vld [vmem:[#allocation14 + $0xa60] sm:$0xf]
    %v3210 = vld [vmem:[#allocation14 + $0xa64] sm:$0xff]
    %v3211 = vld [vmem:[#allocation14 + $0xa6c] sm:$0xff]
    %v3212 = vld [vmem:[#allocation14 + $0xa74] sm:$0xff]
    %v3213 = vld [vmem:[#allocation14 + $0xa7c] sm:$0xf]
    %v3214 = vld [vmem:[#allocation14 + $0xa80] sm:$0xff]
    %v3215 = vld [vmem:[#allocation14 + $0xa88] sm:$0xff]
    %v3216 = vld [vmem:[#allocation14 + $0xa90] sm:$0xff]
    %v3217 = vld [vmem:[#allocation14 + $0xa98] sm:$0xf]
    %v3218 = vld [vmem:[#allocation14 + $0xa9c] sm:$0xff]
    %v3219 = vld [vmem:[#allocation14 + $0xaa4] sm:$0xff]
    %v3220 = vld [vmem:[#allocation14 + $0xaac] sm:$0xff]
    %v3221 = vld [vmem:[#allocation14 + $0xab4] sm:$0xf]
    %v3222 = vld [vmem:[#allocation14 + $0xab8] sm:$0xff]
    %v3223 = vld [vmem:[#allocation14 + $0xac0] sm:$0xff]
    %v3224 = vld [vmem:[#allocation14 + $0xac8] sm:$0xff]
    %v3225 = vld [vmem:[#allocation14 + $0xad0] sm:$0xf]
    %v3226 = vld [vmem:[#allocation14 + $0xad4] sm:$0xff]
    %v3227 = vld [vmem:[#allocation14 + $0xadc] sm:$0xff]
    %v3228 = vld [vmem:[#allocation14 + $0xae4] sm:$0xff]
    %v3229 = vld [vmem:[#allocation14 + $0xaec] sm:$0xf]
    %v3230 = vld [vmem:[#allocation14 + $0xaf0] sm:$0xff]
    %v3231 = vld [vmem:[#allocation14 + $0xaf8] sm:$0xff]
    %v3232 = vld [vmem:[#allocation14 + $0xb00] sm:$0xff]
    %v3233 = vld [vmem:[#allocation14 + $0xb08] sm:$0xf]
    %v3234 = vld [vmem:[#allocation14 + $0xb0c] sm:$0xff]
    %v3235 = vld [vmem:[#allocation14 + $0xb14] sm:$0xff]
    %v3236 = vld [vmem:[#allocation14 + $0xb1c] sm:$0xff]
    %v3237 = vld [vmem:[#allocation14 + $0xb24] sm:$0xf]
    %v3238 = vld [vmem:[#allocation14 + $0xb28] sm:$0xff]
    %v3239 = vld [vmem:[#allocation14 + $0xb30] sm:$0xff]
    %v3240 = vld [vmem:[#allocation14 + $0xb38] sm:$0xff]
    %v3241 = vld [vmem:[#allocation14 + $0xb40] sm:$0xf]
    %v3242 = vld [vmem:[#allocation14 + $0xb44] sm:$0xff]
    %v3243 = vld [vmem:[#allocation14 + $0xb4c] sm:$0xff]
    %v3244 = vld [vmem:[#allocation14 + $0xb54] sm:$0xff]
    %v3245 = vld [vmem:[#allocation14 + $0xb5c] sm:$0xf]
    %v3246 = vld [vmem:[#allocation14 + $0xb60] sm:$0xff]
    %v3247 = vld [vmem:[#allocation14 + $0xb68] sm:$0xff]
    %v3248 = vld [vmem:[#allocation14 + $0xb70] sm:$0xff]
    %v3249 = vld [vmem:[#allocation14 + $0xb78] sm:$0xf]
    %v3250 = vld [vmem:[#allocation14 + $0xb7c] sm:$0xff]
    %v3251 = vld [vmem:[#allocation14 + $0xb84] sm:$0xff]
    %v3252 = vld [vmem:[#allocation14 + $0xb8c] sm:$0xff]
    %v3253 = vld [vmem:[#allocation14 + $0xb94] sm:$0xf]
    %v3254 = vld [vmem:[#allocation14 + $0xb98] sm:$0xff]
    %v3255 = vld [vmem:[#allocation14 + $0xba0] sm:$0xff]
    %v3256 = vld [vmem:[#allocation14 + $0xba8] sm:$0xff]
    %v3257 = vld [vmem:[#allocation14 + $0xbb0] sm:$0xf]
    %v3258 = vld [vmem:[#allocation14 + $0xbb4] sm:$0xff]
    %v3259 = vld [vmem:[#allocation14 + $0xbbc] sm:$0xff]
    %v3260 = vld [vmem:[#allocation14 + $0xbc4] sm:$0xff]
    %v3261 = vld [vmem:[#allocation14 + $0xbcc] sm:$0xf]
    %v3262 = vld [vmem:[#allocation14 + $0xbd0] sm:$0xff]
    %v3263 = vld [vmem:[#allocation14 + $0xbd8] sm:$0xff]
    %v3264 = vld [vmem:[#allocation14 + $0xbe0] sm:$0xff]
    %v3265 = vld [vmem:[#allocation14 + $0xbe8] sm:$0xf]
    %v3266 = vld [vmem:[#allocation14 + $0xbec] sm:$0xff]
    %v3267 = vld [vmem:[#allocation14 + $0xbf4] sm:$0xff]
    %v3268 = vld [vmem:[#allocation14 + $0xbfc] sm:$0xff]
    %v3269 = vld [vmem:[#allocation14 + $0xc04] sm:$0xf]
    %v3270 = vld [vmem:[#allocation14 + $0xc08] sm:$0xff]
    %v3271 = vld [vmem:[#allocation14 + $0xc10] sm:$0xff]
    %v3272 = vld [vmem:[#allocation14 + $0xc18] sm:$0xff]
    %v3273 = vld [vmem:[#allocation14 + $0xc20] sm:$0xf]
    %v3274 = vld [vmem:[#allocation14 + $0xc24] sm:$0xff]
    %v3275 = vld [vmem:[#allocation14 + $0xc2c] sm:$0xff]
    %v3276 = vld [vmem:[#allocation14 + $0xc34] sm:$0xff]
    %v3277 = vld [vmem:[#allocation14 + $0xc3c] sm:$0xf]
    %v3278 = vld [vmem:[#allocation14 + $0xc40] sm:$0xff]
    %v3279 = vld [vmem:[#allocation14 + $0xc48] sm:$0xff]
    %v3280 = vld [vmem:[#allocation14 + $0xc50] sm:$0xff]
    %v3281 = vld [vmem:[#allocation14 + $0xc58] sm:$0xf]
    %v3282 = vld [vmem:[#allocation14 + $0xc5c] sm:$0xff]
    %v3283 = vld [vmem:[#allocation14 + $0xc64] sm:$0xff]
    %v3284 = vld [vmem:[#allocation14 + $0xc6c] sm:$0xff]
    %v3285 = vld [vmem:[#allocation14 + $0xc74] sm:$0xf]
    %v3286 = vld [vmem:[#allocation14 + $0xc78] sm:$0xff]
    %v3287 = vld [vmem:[#allocation14 + $0xc80] sm:$0xff]
    %v3288 = vld [vmem:[#allocation14 + $0xc88] sm:$0xff]
    %v3289 = vld [vmem:[#allocation14 + $0xc90] sm:$0xf]
    %v3290 = vld [vmem:[#allocation14 + $0xc94] sm:$0xff]
    %v3291 = vld [vmem:[#allocation14 + $0xc9c] sm:$0xff]
    %v3292 = vld [vmem:[#allocation14 + $0xca4] sm:$0xff]
    %v3293 = vld [vmem:[#allocation14 + $0xcac] sm:$0xf]
    %v3294 = vld [vmem:[#allocation14 + $0xcb0] sm:$0xff]
    %v3295 = vld [vmem:[#allocation14 + $0xcb8] sm:$0xff]
    %v3296 = vld [vmem:[#allocation14 + $0xcc0] sm:$0xff]
    %v3297 = vld [vmem:[#allocation14 + $0xcc8] sm:$0xf]
    %v3298 = vld [vmem:[#allocation14 + $0xccc] sm:$0xff]
    %v3299 = vld [vmem:[#allocation14 + $0xcd4] sm:$0xff]
    %v3300 = vld [vmem:[#allocation14 + $0xcdc] sm:$0xff]
    %v3301 = vld [vmem:[#allocation14 + $0xce4] sm:$0xf]
    %v3302 = vld [vmem:[#allocation14 + $0xce8] sm:$0xff]
    %v3303 = vld [vmem:[#allocation14 + $0xcf0] sm:$0xff]
    %v3304 = vld [vmem:[#allocation14 + $0xcf8] sm:$0xff]
    %v3305 = vld [vmem:[#allocation14 + $0xd00] sm:$0xf]
    %v3306 = vld [vmem:[#allocation14 + $0xd04] sm:$0xff]
    %v3307 = vld [vmem:[#allocation14 + $0xd0c] sm:$0xff]
    %v3308 = vld [vmem:[#allocation14 + $0xd14] sm:$0xff]
    %v3309 = vld [vmem:[#allocation14 + $0xd1c] sm:$0xf]
    %v3310 = vld [vmem:[#allocation14 + $0xd20] sm:$0xff]
    %v3311 = vld [vmem:[#allocation14 + $0xd28] sm:$0xff]
    %v3312 = vld [vmem:[#allocation14 + $0xd30] sm:$0xff]
    %v3313 = vld [vmem:[#allocation14 + $0xd38] sm:$0xf]
    %v3314 = vld [vmem:[#allocation14 + $0xd3c] sm:$0xff]
    %v3315 = vld [vmem:[#allocation14 + $0xd44] sm:$0xff]
    %v3316 = vld [vmem:[#allocation14 + $0xd4c] sm:$0xff]
    %v3317 = vld [vmem:[#allocation14 + $0xd54] sm:$0xf]
    %v3318 = vld [vmem:[#allocation14 + $0xd58] sm:$0xff]
    %v3319 = vld [vmem:[#allocation14 + $0xd60] sm:$0xff]
    %v3320 = vld [vmem:[#allocation14 + $0xd68] sm:$0xff]
    %v3321 = vld [vmem:[#allocation14 + $0xd70] sm:$0xf]
    %v3322 = vld [vmem:[#allocation14 + $0xd74] sm:$0xff]
    %v3323 = vld [vmem:[#allocation14 + $0xd7c] sm:$0xff]
    %v3324 = vld [vmem:[#allocation14 + $0xd84] sm:$0xff]
    %v3325 = vld [vmem:[#allocation14 + $0xd8c] sm:$0xf]
    %v3326 = vld [vmem:[#allocation14 + $0xd90] sm:$0xff]
    %v3327 = vld [vmem:[#allocation14 + $0xd98] sm:$0xff]
    %v3328 = vld [vmem:[#allocation14 + $0xda0] sm:$0xff]
    %v3329 = vld [vmem:[#allocation14 + $0xda8] sm:$0xf]
    %v3330 = vld [vmem:[#allocation14 + $0xdac] sm:$0xff]
    %v3331 = vld [vmem:[#allocation14 + $0xdb4] sm:$0xff]
    %v3332 = vld [vmem:[#allocation14 + $0xdbc] sm:$0xff]
    %v3333 = vld [vmem:[#allocation14 + $0xdc4] sm:$0xf]
    %v3334 = vld [vmem:[#allocation14 + $0xdc8] sm:$0xff]
    %v3335 = vld [vmem:[#allocation14 + $0xdd0] sm:$0xff]
    %v3336 = vld [vmem:[#allocation14 + $0xdd8] sm:$0xff]
    %v3337 = vld [vmem:[#allocation14 + $0xde0] sm:$0xf]
    %v3338 = vld [vmem:[#allocation14 + $0xde4] sm:$0xff]
    %v3339 = vld [vmem:[#allocation14 + $0xdec] sm:$0xff]
    %v3340 = vld [vmem:[#allocation14 + $0xdf4] sm:$0xff]
    %v3341 = vld [vmem:[#allocation14 + $0xdfc] sm:$0xf]
    %v3342 = vld [vmem:[#allocation16] sm:$0xff]
    %v3344 = vperm.slane %v3342, 0
    %v3345 = vperm.slane %v3342, 1
    %v3346 = vperm.slane %v3342, 2
    %v3347 = vperm.slane %v3342, 3
    %v3348 = vperm.slane %v3342, 4
    %v3349 = vperm.slane %v3342, 5
    %v3350 = vperm.slane %v3342, 6
    %v3870 = vunpack.c.l.b16 %v2830
    %v3871 = vunpack.c.h.b16 %v2830
    %v3872 = vunpack.c.l.b16 %v2831
    %v3873 = vunpack.c.h.b16 %v2831
    %v3874 = vunpack.c.l.b16 %v2832
    %v3875 = vunpack.c.h.b16 %v2832
    %v3876 = vunpack.c.l.b16 %v2833
    %v3877 = vunpack.c.l.b16 %v2834
    %v3878 = vunpack.c.h.b16 %v2834
    %v3879 = vunpack.c.l.b16 %v2835
    %v3880 = vunpack.c.h.b16 %v2835
    %v3881 = vunpack.c.l.b16 %v2836
    %v3882 = vunpack.c.h.b16 %v2836
    %v3883 = vunpack.c.l.b16 %v2837
    %v3884 = vunpack.c.l.b16 %v2838
    %v3885 = vunpack.c.h.b16 %v2838
    %v3886 = vunpack.c.l.b16 %v2839
    %v3887 = vunpack.c.h.b16 %v2839
    %v3888 = vunpack.c.l.b16 %v2840
    %v3889 = vunpack.c.h.b16 %v2840
    %v3890 = vunpack.c.l.b16 %v2841
    %v3891 = vunpack.c.l.b16 %v2842
    %v3892 = vunpack.c.h.b16 %v2842
    %v3893 = vunpack.c.l.b16 %v2843
    %v3894 = vunpack.c.h.b16 %v2843
    %v3895 = vunpack.c.l.b16 %v2844
    %v3896 = vunpack.c.h.b16 %v2844
    %v3897 = vunpack.c.l.b16 %v2845
    %v3898 = vunpack.c.l.b16 %v2846
    %v3899 = vunpack.c.h.b16 %v2846
    %v3900 = vunpack.c.l.b16 %v2847
    %v3901 = vunpack.c.h.b16 %v2847
    %v3902 = vunpack.c.l.b16 %v2848
    %v3903 = vunpack.c.h.b16 %v2848
    %v3904 = vunpack.c.l.b16 %v2849
    %v3905 = vunpack.c.l.b16 %v2850
    %v3906 = vunpack.c.h.b16 %v2850
    %v3907 = vunpack.c.l.b16 %v2851
    %v3908 = vunpack.c.h.b16 %v2851
    %v3909 = vunpack.c.l.b16 %v2852
    %v3910 = vunpack.c.h.b16 %v2852
    %v3911 = vunpack.c.l.b16 %v2853
    %v3912 = vunpack.c.l.b16 %v2854
    %v3913 = vunpack.c.h.b16 %v2854
    %v3914 = vunpack.c.l.b16 %v2855
    %v3915 = vunpack.c.h.b16 %v2855
    %v3916 = vunpack.c.l.b16 %v2856
    %v3917 = vunpack.c.h.b16 %v2856
    %v3918 = vunpack.c.l.b16 %v2857
    %v3919 = vunpack.c.l.b16 %v2858
    %v3920 = vunpack.c.h.b16 %v2858
    %v3921 = vunpack.c.l.b16 %v2859
    %v3922 = vunpack.c.h.b16 %v2859
    %v3923 = vunpack.c.l.b16 %v2860
    %v3924 = vunpack.c.h.b16 %v2860
    %v3925 = vunpack.c.l.b16 %v2861
    %v3926 = vunpack.c.l.b16 %v2862
    %v3927 = vunpack.c.h.b16 %v2862
    %v3928 = vunpack.c.l.b16 %v2863
    %v3929 = vunpack.c.h.b16 %v2863
    %v3930 = vunpack.c.l.b16 %v2864
    %v3931 = vunpack.c.h.b16 %v2864
    %v3932 = vunpack.c.l.b16 %v2865
    %v3933 = vunpack.c.l.b16 %v2866
    %v3934 = vunpack.c.h.b16 %v2866
    %v3935 = vunpack.c.l.b16 %v2867
    %v3936 = vunpack.c.h.b16 %v2867
    %v3937 = vunpack.c.l.b16 %v2868
    %v3938 = vunpack.c.h.b16 %v2868
    %v3939 = vunpack.c.l.b16 %v2869
    %v3940 = vunpack.c.l.b16 %v2870
    %v3941 = vunpack.c.h.b16 %v2870
    %v3942 = vunpack.c.l.b16 %v2871
    %v3943 = vunpack.c.h.b16 %v2871
    %v3944 = vunpack.c.l.b16 %v2872
    %v3945 = vunpack.c.h.b16 %v2872
    %v3946 = vunpack.c.l.b16 %v2873
    %v3947 = vunpack.c.l.b16 %v2874
    %v3948 = vunpack.c.h.b16 %v2874
    %v3949 = vunpack.c.l.b16 %v2875
    %v3950 = vunpack.c.h.b16 %v2875
    %v3951 = vunpack.c.l.b16 %v2876
    %v3952 = vunpack.c.h.b16 %v2876
    %v3953 = vunpack.c.l.b16 %v2877
    %v3954 = vunpack.c.l.b16 %v2878
    %v3955 = vunpack.c.h.b16 %v2878
    %v3956 = vunpack.c.l.b16 %v2879
    %v3957 = vunpack.c.h.b16 %v2879
    %v3958 = vunpack.c.l.b16 %v2880
    %v3959 = vunpack.c.h.b16 %v2880
    %v3960 = vunpack.c.l.b16 %v2881
    %v3961 = vunpack.c.l.b16 %v2882
    %v3962 = vunpack.c.h.b16 %v2882
    %v3963 = vunpack.c.l.b16 %v2883
    %v3964 = vunpack.c.h.b16 %v2883
    %v3965 = vunpack.c.l.b16 %v2884
    %v3966 = vunpack.c.h.b16 %v2884
    %v3967 = vunpack.c.l.b16 %v2885
    %v3968 = vunpack.c.l.b16 %v2886
    %v3969 = vunpack.c.h.b16 %v2886
    %v3970 = vunpack.c.l.b16 %v2887
    %v3971 = vunpack.c.h.b16 %v2887
    %v3972 = vunpack.c.l.b16 %v2888
    %v3973 = vunpack.c.h.b16 %v2888
    %v3974 = vunpack.c.l.b16 %v2889
    %v3975 = vunpack.c.l.b16 %v2890
    %v3976 = vunpack.c.h.b16 %v2890
    %v3977 = vunpack.c.l.b16 %v2891
    %v3978 = vunpack.c.h.b16 %v2891
    %v3979 = vunpack.c.l.b16 %v2892
    %v3980 = vunpack.c.h.b16 %v2892
    %v3981 = vunpack.c.l.b16 %v2893
    %v3982 = vunpack.c.l.b16 %v2894
    %v3983 = vunpack.c.h.b16 %v2894
    %v3984 = vunpack.c.l.b16 %v2895
    %v3985 = vunpack.c.h.b16 %v2895
    %v3986 = vunpack.c.l.b16 %v2896
    %v3987 = vunpack.c.h.b16 %v2896
    %v3988 = vunpack.c.l.b16 %v2897
    %v3989 = vunpack.c.l.b16 %v2898
    %v3990 = vunpack.c.h.b16 %v2898
    %v3991 = vunpack.c.l.b16 %v2899
    %v3992 = vunpack.c.h.b16 %v2899
    %v3993 = vunpack.c.l.b16 %v2900
    %v3994 = vunpack.c.h.b16 %v2900
    %v3995 = vunpack.c.l.b16 %v2901
    %v3996 = vunpack.c.l.b16 %v2902
    %v3997 = vunpack.c.h.b16 %v2902
    %v3998 = vunpack.c.l.b16 %v2903
    %v3999 = vunpack.c.h.b16 %v2903
    %v4000 = vunpack.c.l.b16 %v2904
    %v4001 = vunpack.c.h.b16 %v2904
    %v4002 = vunpack.c.l.b16 %v2905
    %v4003 = vunpack.c.l.b16 %v2906
    %v4004 = vunpack.c.h.b16 %v2906
    %v4005 = vunpack.c.l.b16 %v2907
    %v4006 = vunpack.c.h.b16 %v2907
    %v4007 = vunpack.c.l.b16 %v2908
    %v4008 = vunpack.c.h.b16 %v2908
    %v4009 = vunpack.c.l.b16 %v2909
    %v4010 = vunpack.c.l.b16 %v2910
    %v4011 = vunpack.c.h.b16 %v2910
    %v4012 = vunpack.c.l.b16 %v2911
    %v4013 = vunpack.c.h.b16 %v2911
    %v4014 = vunpack.c.l.b16 %v2912
    %v4015 = vunpack.c.h.b16 %v2912
    %v4016 = vunpack.c.l.b16 %v2913
    %v4017 = vunpack.c.l.b16 %v2914
    %v4018 = vunpack.c.h.b16 %v2914
    %v4019 = vunpack.c.l.b16 %v2915
    %v4020 = vunpack.c.h.b16 %v2915
    %v4021 = vunpack.c.l.b16 %v2916
    %v4022 = vunpack.c.h.b16 %v2916
    %v4023 = vunpack.c.l.b16 %v2917
    %v4024 = vunpack.c.l.b16 %v2918
    %v4025 = vunpack.c.h.b16 %v2918
    %v4026 = vunpack.c.l.b16 %v2919
    %v4027 = vunpack.c.h.b16 %v2919
    %v4028 = vunpack.c.l.b16 %v2920
    %v4029 = vunpack.c.h.b16 %v2920
    %v4030 = vunpack.c.l.b16 %v2921
    %v4031 = vunpack.c.l.b16 %v2922
    %v4032 = vunpack.c.h.b16 %v2922
    %v4033 = vunpack.c.l.b16 %v2923
    %v4034 = vunpack.c.h.b16 %v2923
    %v4035 = vunpack.c.l.b16 %v2924
    %v4036 = vunpack.c.h.b16 %v2924
    %v4037 = vunpack.c.l.b16 %v2925
    %v4038 = vunpack.c.l.b16 %v2926
    %v4039 = vunpack.c.h.b16 %v2926
    %v4040 = vunpack.c.l.b16 %v2927
    %v4041 = vunpack.c.h.b16 %v2927
    %v4042 = vunpack.c.l.b16 %v2928
    %v4043 = vunpack.c.h.b16 %v2928
    %v4044 = vunpack.c.l.b16 %v2929
    %v4045 = vunpack.c.l.b16 %v2930
    %v4046 = vunpack.c.h.b16 %v2930
    %v4047 = vunpack.c.l.b16 %v2931
    %v4048 = vunpack.c.h.b16 %v2931
    %v4049 = vunpack.c.l.b16 %v2932
    %v4050 = vunpack.c.h.b16 %v2932
    %v4051 = vunpack.c.l.b16 %v2933
    %v4052 = vunpack.c.l.b16 %v2934
    %v4053 = vunpack.c.h.b16 %v2934
    %v4054 = vunpack.c.l.b16 %v2935
    %v4055 = vunpack.c.h.b16 %v2935
    %v4056 = vunpack.c.l.b16 %v2936
    %v4057 = vunpack.c.h.b16 %v2936
    %v4058 = vunpack.c.l.b16 %v2937
    %v4059 = vunpack.c.l.b16 %v2938
    %v4060 = vunpack.c.h.b16 %v2938
    %v4061 = vunpack.c.l.b16 %v2939
    %v4062 = vunpack.c.h.b16 %v2939
    %v4063 = vunpack.c.l.b16 %v2940
    %v4064 = vunpack.c.h.b16 %v2940
    %v4065 = vunpack.c.l.b16 %v2941
    %v4066 = vunpack.c.l.b16 %v2942
    %v4067 = vunpack.c.h.b16 %v2942
    %v4068 = vunpack.c.l.b16 %v2943
    %v4069 = vunpack.c.h.b16 %v2943
    %v4070 = vunpack.c.l.b16 %v2944
    %v4071 = vunpack.c.h.b16 %v2944
    %v4072 = vunpack.c.l.b16 %v2945
    %v4073 = vunpack.c.l.b16 %v2946
    %v4074 = vunpack.c.h.b16 %v2946
    %v4075 = vunpack.c.l.b16 %v2947
    %v4076 = vunpack.c.h.b16 %v2947
    %v4077 = vunpack.c.l.b16 %v2948
    %v4078 = vunpack.c.h.b16 %v2948
    %v4079 = vunpack.c.l.b16 %v2949
    %v4080 = vunpack.c.l.b16 %v2950
    %v4081 = vunpack.c.h.b16 %v2950
    %v4082 = vunpack.c.l.b16 %v2951
    %v4083 = vunpack.c.h.b16 %v2951
    %v4084 = vunpack.c.l.b16 %v2952
    %v4085 = vunpack.c.h.b16 %v2952
    %v4086 = vunpack.c.l.b16 %v2953
    %v4087 = vunpack.c.l.b16 %v2954
    %v4088 = vunpack.c.h.b16 %v2954
    %v4089 = vunpack.c.l.b16 %v2955
    %v4090 = vunpack.c.h.b16 %v2955
    %v4091 = vunpack.c.l.b16 %v2956
    %v4092 = vunpack.c.h.b16 %v2956
    %v4093 = vunpack.c.l.b16 %v2957
    %v4094 = vunpack.c.l.b16 %v2958
    %v4095 = vunpack.c.h.b16 %v2958
    %v4096 = vunpack.c.l.b16 %v2959
    %v4097 = vunpack.c.h.b16 %v2959
    %v4098 = vunpack.c.l.b16 %v2960
    %v4099 = vunpack.c.h.b16 %v2960
    %v4100 = vunpack.c.l.b16 %v2961
    %v4101 = vunpack.c.l.b16 %v2962
    %v4102 = vunpack.c.h.b16 %v2962
    %v4103 = vunpack.c.l.b16 %v2963
    %v4104 = vunpack.c.h.b16 %v2963
    %v4105 = vunpack.c.l.b16 %v2964
    %v4106 = vunpack.c.h.b16 %v2964
    %v4107 = vunpack.c.l.b16 %v2965
    %v4108 = vunpack.c.l.b16 %v2966
    %v4109 = vunpack.c.h.b16 %v2966
    %v4110 = vunpack.c.l.b16 %v2967
    %v4111 = vunpack.c.h.b16 %v2967
    %v4112 = vunpack.c.l.b16 %v2968
    %v4113 = vunpack.c.h.b16 %v2968
    %v4114 = vunpack.c.l.b16 %v2969
    %v4115 = vunpack.c.l.b16 %v2970
    %v4116 = vunpack.c.h.b16 %v2970
    %v4117 = vunpack.c.l.b16 %v2971
    %v4118 = vunpack.c.h.b16 %v2971
    %v4119 = vunpack.c.l.b16 %v2972
    %v4120 = vunpack.c.h.b16 %v2972
    %v4121 = vunpack.c.l.b16 %v2973
    %v4122 = vunpack.c.l.b16 %v2974
    %v4123 = vunpack.c.h.b16 %v2974
    %v4124 = vunpack.c.l.b16 %v2975
    %v4125 = vunpack.c.h.b16 %v2975
    %v4126 = vunpack.c.l.b16 %v2976
    %v4127 = vunpack.c.h.b16 %v2976
    %v4128 = vunpack.c.l.b16 %v2977
    %v4129 = vunpack.c.l.b16 %v2978
    %v4130 = vunpack.c.h.b16 %v2978
    %v4131 = vunpack.c.l.b16 %v2979
    %v4132 = vunpack.c.h.b16 %v2979
    %v4133 = vunpack.c.l.b16 %v2980
    %v4134 = vunpack.c.h.b16 %v2980
    %v4135 = vunpack.c.l.b16 %v2981
    %v4136 = vunpack.c.l.b16 %v2982
    %v4137 = vunpack.c.h.b16 %v2982
    %v4138 = vunpack.c.l.b16 %v2983
    %v4139 = vunpack.c.h.b16 %v2983
    %v4140 = vunpack.c.l.b16 %v2984
    %v4141 = vunpack.c.h.b16 %v2984
    %v4142 = vunpack.c.l.b16 %v2985
    %v4143 = vunpack.c.l.b16 %v2986
    %v4144 = vunpack.c.h.b16 %v2986
    %v4145 = vunpack.c.l.b16 %v2987
    %v4146 = vunpack.c.h.b16 %v2987
    %v4147 = vunpack.c.l.b16 %v2988
    %v4148 = vunpack.c.h.b16 %v2988
    %v4149 = vunpack.c.l.b16 %v2989
    %v4150 = vunpack.c.l.b16 %v2990
    %v4151 = vunpack.c.h.b16 %v2990
    %v4152 = vunpack.c.l.b16 %v2991
    %v4153 = vunpack.c.h.b16 %v2991
    %v4154 = vunpack.c.l.b16 %v2992
    %v4155 = vunpack.c.h.b16 %v2992
    %v4156 = vunpack.c.l.b16 %v2993
    %v4157 = vunpack.c.l.b16 %v2994
    %v4158 = vunpack.c.h.b16 %v2994
    %v4159 = vunpack.c.l.b16 %v2995
    %v4160 = vunpack.c.h.b16 %v2995
    %v4161 = vunpack.c.l.b16 %v2996
    %v4162 = vunpack.c.h.b16 %v2996
    %v4163 = vunpack.c.l.b16 %v2997
    %v4164 = vunpack.c.l.b16 %v2998
    %v4165 = vunpack.c.h.b16 %v2998
    %v4166 = vunpack.c.l.b16 %v2999
    %v4167 = vunpack.c.h.b16 %v2999
    %v4168 = vunpack.c.l.b16 %v3000
    %v4169 = vunpack.c.h.b16 %v3000
    %v4170 = vunpack.c.l.b16 %v3001
    %v4171 = vunpack.c.l.b16 %v3002
    %v4172 = vunpack.c.h.b16 %v3002
    %v4173 = vunpack.c.l.b16 %v3003
    %v4174 = vunpack.c.h.b16 %v3003
    %v4175 = vunpack.c.l.b16 %v3004
    %v4176 = vunpack.c.h.b16 %v3004
    %v4177 = vunpack.c.l.b16 %v3005
    %v4178 = vunpack.c.l.b16 %v3006
    %v4179 = vunpack.c.h.b16 %v3006
    %v4180 = vunpack.c.l.b16 %v3007
    %v4181 = vunpack.c.h.b16 %v3007
    %v4182 = vunpack.c.l.b16 %v3008
    %v4183 = vunpack.c.h.b16 %v3008
    %v4184 = vunpack.c.l.b16 %v3009
    %v4185 = vunpack.c.l.b16 %v3010
    %v4186 = vunpack.c.h.b16 %v3010
    %v4187 = vunpack.c.l.b16 %v3011
    %v4188 = vunpack.c.h.b16 %v3011
    %v4189 = vunpack.c.l.b16 %v3012
    %v4190 = vunpack.c.h.b16 %v3012
    %v4191 = vunpack.c.l.b16 %v3013
    %v4192 = vunpack.c.l.b16 %v3014
    %v4193 = vunpack.c.h.b16 %v3014
    %v4194 = vunpack.c.l.b16 %v3015
    %v4195 = vunpack.c.h.b16 %v3015
    %v4196 = vunpack.c.l.b16 %v3016
    %v4197 = vunpack.c.h.b16 %v3016
    %v4198 = vunpack.c.l.b16 %v3017
    %v4199 = vunpack.c.l.b16 %v3018
    %v4200 = vunpack.c.h.b16 %v3018
    %v4201 = vunpack.c.l.b16 %v3019
    %v4202 = vunpack.c.h.b16 %v3019
    %v4203 = vunpack.c.l.b16 %v3020
    %v4204 = vunpack.c.h.b16 %v3020
    %v4205 = vunpack.c.l.b16 %v3021
    %v4206 = vunpack.c.l.b16 %v3022
    %v4207 = vunpack.c.h.b16 %v3022
    %v4208 = vunpack.c.l.b16 %v3023
    %v4209 = vunpack.c.h.b16 %v3023
    %v4210 = vunpack.c.l.b16 %v3024
    %v4211 = vunpack.c.h.b16 %v3024
    %v4212 = vunpack.c.l.b16 %v3025
    %v4213 = vunpack.c.l.b16 %v3026
    %v4214 = vunpack.c.h.b16 %v3026
    %v4215 = vunpack.c.l.b16 %v3027
    %v4216 = vunpack.c.h.b16 %v3027
    %v4217 = vunpack.c.l.b16 %v3028
    %v4218 = vunpack.c.h.b16 %v3028
    %v4219 = vunpack.c.l.b16 %v3029
    %v4220 = vunpack.c.l.b16 %v3030
    %v4221 = vunpack.c.h.b16 %v3030
    %v4222 = vunpack.c.l.b16 %v3031
    %v4223 = vunpack.c.h.b16 %v3031
    %v4224 = vunpack.c.l.b16 %v3032
    %v4225 = vunpack.c.h.b16 %v3032
    %v4226 = vunpack.c.l.b16 %v3033
    %v4227 = vunpack.c.l.b16 %v3034
    %v4228 = vunpack.c.h.b16 %v3034
    %v4229 = vunpack.c.l.b16 %v3035
    %v4230 = vunpack.c.h.b16 %v3035
    %v4231 = vunpack.c.l.b16 %v3036
    %v4232 = vunpack.c.h.b16 %v3036
    %v4233 = vunpack.c.l.b16 %v3037
    %v4234 = vunpack.c.l.b16 %v3038
    %v4235 = vunpack.c.h.b16 %v3038
    %v4236 = vunpack.c.l.b16 %v3039
    %v4237 = vunpack.c.h.b16 %v3039
    %v4238 = vunpack.c.l.b16 %v3040
    %v4239 = vunpack.c.h.b16 %v3040
    %v4240 = vunpack.c.l.b16 %v3041
    %v4241 = vunpack.c.l.b16 %v3042
    %v4242 = vunpack.c.h.b16 %v3042
    %v4243 = vunpack.c.l.b16 %v3043
    %v4244 = vunpack.c.h.b16 %v3043
    %v4245 = vunpack.c.l.b16 %v3044
    %v4246 = vunpack.c.h.b16 %v3044
    %v4247 = vunpack.c.l.b16 %v3045
    %v4248 = vunpack.c.l.b16 %v3046
    %v4249 = vunpack.c.h.b16 %v3046
    %v4250 = vunpack.c.l.b16 %v3047
    %v4251 = vunpack.c.h.b16 %v3047
    %v4252 = vunpack.c.l.b16 %v3048
    %v4253 = vunpack.c.h.b16 %v3048
    %v4254 = vunpack.c.l.b16 %v3049
    %v4255 = vunpack.c.l.b16 %v3050
    %v4256 = vunpack.c.h.b16 %v3050
    %v4257 = vunpack.c.l.b16 %v3051
    %v4258 = vunpack.c.h.b16 %v3051
    %v4259 = vunpack.c.l.b16 %v3052
    %v4260 = vunpack.c.h.b16 %v3052
    %v4261 = vunpack.c.l.b16 %v3053
    %v4262 = vunpack.c.l.b16 %v3054
    %v4263 = vunpack.c.h.b16 %v3054
    %v4264 = vunpack.c.l.b16 %v3055
    %v4265 = vunpack.c.h.b16 %v3055
    %v4266 = vunpack.c.l.b16 %v3056
    %v4267 = vunpack.c.h.b16 %v3056
    %v4268 = vunpack.c.l.b16 %v3057
    %v4269 = vunpack.c.l.b16 %v3058
    %v4270 = vunpack.c.h.b16 %v3058
    %v4271 = vunpack.c.l.b16 %v3059
    %v4272 = vunpack.c.h.b16 %v3059
    %v4273 = vunpack.c.l.b16 %v3060
    %v4274 = vunpack.c.h.b16 %v3060
    %v4275 = vunpack.c.l.b16 %v3061
    %v4276 = vunpack.c.l.b16 %v3062
    %v4277 = vunpack.c.h.b16 %v3062
    %v4278 = vunpack.c.l.b16 %v3063
    %v4279 = vunpack.c.h.b16 %v3063
    %v4280 = vunpack.c.l.b16 %v3064
    %v4281 = vunpack.c.h.b16 %v3064
    %v4282 = vunpack.c.l.b16 %v3065
    %v4283 = vunpack.c.l.b16 %v3066
    %v4284 = vunpack.c.h.b16 %v3066
    %v4285 = vunpack.c.l.b16 %v3067
    %v4286 = vunpack.c.h.b16 %v3067
    %v4287 = vunpack.c.l.b16 %v3068
    %v4288 = vunpack.c.h.b16 %v3068
    %v4289 = vunpack.c.l.b16 %v3069
    %v4290 = vunpack.c.l.b16 %v3070
    %v4291 = vunpack.c.h.b16 %v3070
    %v4292 = vunpack.c.l.b16 %v3071
    %v4293 = vunpack.c.h.b16 %v3071
    %v4294 = vunpack.c.l.b16 %v3072
    %v4295 = vunpack.c.h.b16 %v3072
    %v4296 = vunpack.c.l.b16 %v3073
    %v4297 = vunpack.c.l.b16 %v3074
    %v4298 = vunpack.c.h.b16 %v3074
    %v4299 = vunpack.c.l.b16 %v3075
    %v4300 = vunpack.c.h.b16 %v3075
    %v4301 = vunpack.c.l.b16 %v3076
    %v4302 = vunpack.c.h.b16 %v3076
    %v4303 = vunpack.c.l.b16 %v3077
    %v4304 = vunpack.c.l.b16 %v3078
    %v4305 = vunpack.c.h.b16 %v3078
    %v4306 = vunpack.c.l.b16 %v3079
    %v4307 = vunpack.c.h.b16 %v3079
    %v4308 = vunpack.c.l.b16 %v3080
    %v4309 = vunpack.c.h.b16 %v3080
    %v4310 = vunpack.c.l.b16 %v3081
    %v4311 = vunpack.c.l.b16 %v3082
    %v4312 = vunpack.c.h.b16 %v3082
    %v4313 = vunpack.c.l.b16 %v3083
    %v4314 = vunpack.c.h.b16 %v3083
    %v4315 = vunpack.c.l.b16 %v3084
    %v4316 = vunpack.c.h.b16 %v3084
    %v4317 = vunpack.c.l.b16 %v3085
    %v4318 = vunpack.c.l.b16 %v3086
    %v4319 = vunpack.c.h.b16 %v3086
    %v4320 = vunpack.c.l.b16 %v3087
    %v4321 = vunpack.c.h.b16 %v3087
    %v4322 = vunpack.c.l.b16 %v3088
    %v4323 = vunpack.c.h.b16 %v3088
    %v4324 = vunpack.c.l.b16 %v3089
    %v4325 = vunpack.c.l.b16 %v3090
    %v4326 = vunpack.c.h.b16 %v3090
    %v4327 = vunpack.c.l.b16 %v3091
    %v4328 = vunpack.c.h.b16 %v3091
    %v4329 = vunpack.c.l.b16 %v3092
    %v4330 = vunpack.c.h.b16 %v3092
    %v4331 = vunpack.c.l.b16 %v3093
    %v4332 = vunpack.c.l.b16 %v3094
    %v4333 = vunpack.c.h.b16 %v3094
    %v4334 = vunpack.c.l.b16 %v3095
    %v4335 = vunpack.c.h.b16 %v3095
    %v4336 = vunpack.c.l.b16 %v3096
    %v4337 = vunpack.c.h.b16 %v3096
    %v4338 = vunpack.c.l.b16 %v3097
    %v4339 = vunpack.c.l.b16 %v3098
    %v4340 = vunpack.c.h.b16 %v3098
    %v4341 = vunpack.c.l.b16 %v3099
    %v4342 = vunpack.c.h.b16 %v3099
    %v4343 = vunpack.c.l.b16 %v3100
    %v4344 = vunpack.c.h.b16 %v3100
    %v4345 = vunpack.c.l.b16 %v3101
    %v4346 = vunpack.c.l.b16 %v3102
    %v4347 = vunpack.c.h.b16 %v3102
    %v4348 = vunpack.c.l.b16 %v3103
    %v4349 = vunpack.c.h.b16 %v3103
    %v4350 = vunpack.c.l.b16 %v3104
    %v4351 = vunpack.c.h.b16 %v3104
    %v4352 = vunpack.c.l.b16 %v3105
    %v4353 = vunpack.c.l.b16 %v3106
    %v4354 = vunpack.c.h.b16 %v3106
    %v4355 = vunpack.c.l.b16 %v3107
    %v4356 = vunpack.c.h.b16 %v3107
    %v4357 = vunpack.c.l.b16 %v3108
    %v4358 = vunpack.c.h.b16 %v3108
    %v4359 = vunpack.c.l.b16 %v3109
    %v4360 = vunpack.c.l.b16 %v3110
    %v4361 = vunpack.c.h.b16 %v3110
    %v4362 = vunpack.c.l.b16 %v3111
    %v4363 = vunpack.c.h.b16 %v3111
    %v4364 = vunpack.c.l.b16 %v3112
    %v4365 = vunpack.c.h.b16 %v3112
    %v4366 = vunpack.c.l.b16 %v3113
    %v4367 = vunpack.c.l.b16 %v3114
    %v4368 = vunpack.c.h.b16 %v3114
    %v4369 = vunpack.c.l.b16 %v3115
    %v4370 = vunpack.c.h.b16 %v3115
    %v4371 = vunpack.c.l.b16 %v3116
    %v4372 = vunpack.c.h.b16 %v3116
    %v4373 = vunpack.c.l.b16 %v3117
    %v4374 = vunpack.c.l.b16 %v3118
    %v4375 = vunpack.c.h.b16 %v3118
    %v4376 = vunpack.c.l.b16 %v3119
    %v4377 = vunpack.c.h.b16 %v3119
    %v4378 = vunpack.c.l.b16 %v3120
    %v4379 = vunpack.c.h.b16 %v3120
    %v4380 = vunpack.c.l.b16 %v3121
    %v4381 = vunpack.c.l.b16 %v3122
    %v4382 = vunpack.c.h.b16 %v3122
    %v4383 = vunpack.c.l.b16 %v3123
    %v4384 = vunpack.c.h.b16 %v3123
    %v4385 = vunpack.c.l.b16 %v3124
    %v4386 = vunpack.c.h.b16 %v3124
    %v4387 = vunpack.c.l.b16 %v3125
    %v4388 = vunpack.c.l.b16 %v3126
    %v4389 = vunpack.c.h.b16 %v3126
    %v4390 = vunpack.c.l.b16 %v3127
    %v4391 = vunpack.c.h.b16 %v3127
    %v4392 = vunpack.c.l.b16 %v3128
    %v4393 = vunpack.c.h.b16 %v3128
    %v4394 = vunpack.c.l.b16 %v3129
    %v4395 = vunpack.c.l.b16 %v3130
    %v4396 = vunpack.c.h.b16 %v3130
    %v4397 = vunpack.c.l.b16 %v3131
    %v4398 = vunpack.c.h.b16 %v3131
    %v4399 = vunpack.c.l.b16 %v3132
    %v4400 = vunpack.c.h.b16 %v3132
    %v4401 = vunpack.c.l.b16 %v3133
    %v4402 = vunpack.c.l.b16 %v3134
    %v4403 = vunpack.c.h.b16 %v3134
    %v4404 = vunpack.c.l.b16 %v3135
    %v4405 = vunpack.c.h.b16 %v3135
    %v4406 = vunpack.c.l.b16 %v3136
    %v4407 = vunpack.c.h.b16 %v3136
    %v4408 = vunpack.c.l.b16 %v3137
    %v4409 = vunpack.c.l.b16 %v3138
    %v4410 = vunpack.c.h.b16 %v3138
    %v4411 = vunpack.c.l.b16 %v3139
    %v4412 = vunpack.c.h.b16 %v3139
    %v4413 = vunpack.c.l.b16 %v3140
    %v4414 = vunpack.c.h.b16 %v3140
    %v4415 = vunpack.c.l.b16 %v3141
    %v4416 = vunpack.c.l.b16 %v3142
    %v4417 = vunpack.c.h.b16 %v3142
    %v4418 = vunpack.c.l.b16 %v3143
    %v4419 = vunpack.c.h.b16 %v3143
    %v4420 = vunpack.c.l.b16 %v3144
    %v4421 = vunpack.c.h.b16 %v3144
    %v4422 = vunpack.c.l.b16 %v3145
    %v4423 = vunpack.c.l.b16 %v3146
    %v4424 = vunpack.c.h.b16 %v3146
    %v4425 = vunpack.c.l.b16 %v3147
    %v4426 = vunpack.c.h.b16 %v3147
    %v4427 = vunpack.c.l.b16 %v3148
    %v4428 = vunpack.c.h.b16 %v3148
    %v4429 = vunpack.c.l.b16 %v3149
    %v4430 = vunpack.c.l.b16 %v3150
    %v4431 = vunpack.c.h.b16 %v3150
    %v4432 = vunpack.c.l.b16 %v3151
    %v4433 = vunpack.c.h.b16 %v3151
    %v4434 = vunpack.c.l.b16 %v3152
    %v4435 = vunpack.c.h.b16 %v3152
    %v4436 = vunpack.c.l.b16 %v3153
    %v4437 = vunpack.c.l.b16 %v3154
    %v4438 = vunpack.c.h.b16 %v3154
    %v4439 = vunpack.c.l.b16 %v3155
    %v4440 = vunpack.c.h.b16 %v3155
    %v4441 = vunpack.c.l.b16 %v3156
    %v4442 = vunpack.c.h.b16 %v3156
    %v4443 = vunpack.c.l.b16 %v3157
    %v4444 = vunpack.c.l.b16 %v3158
    %v4445 = vunpack.c.h.b16 %v3158
    %v4446 = vunpack.c.l.b16 %v3159
    %v4447 = vunpack.c.h.b16 %v3159
    %v4448 = vunpack.c.l.b16 %v3160
    %v4449 = vunpack.c.h.b16 %v3160
    %v4450 = vunpack.c.l.b16 %v3161
    %v4451 = vunpack.c.l.b16 %v3162
    %v4452 = vunpack.c.h.b16 %v3162
    %v4453 = vunpack.c.l.b16 %v3163
    %v4454 = vunpack.c.h.b16 %v3163
    %v4455 = vunpack.c.l.b16 %v3164
    %v4456 = vunpack.c.h.b16 %v3164
    %v4457 = vunpack.c.l.b16 %v3165
    %v4458 = vunpack.c.l.b16 %v3166
    %v4459 = vunpack.c.h.b16 %v3166
    %v4460 = vunpack.c.l.b16 %v3167
    %v4461 = vunpack.c.h.b16 %v3167
    %v4462 = vunpack.c.l.b16 %v3168
    %v4463 = vunpack.c.h.b16 %v3168
    %v4464 = vunpack.c.l.b16 %v3169
    %v4465 = vunpack.c.l.b16 %v3170
    %v4466 = vunpack.c.h.b16 %v3170
    %v4467 = vunpack.c.l.b16 %v3171
    %v4468 = vunpack.c.h.b16 %v3171
    %v4469 = vunpack.c.l.b16 %v3172
    %v4470 = vunpack.c.h.b16 %v3172
    %v4471 = vunpack.c.l.b16 %v3173
    %v4472 = vunpack.c.l.b16 %v3174
    %v4473 = vunpack.c.h.b16 %v3174
    %v4474 = vunpack.c.l.b16 %v3175
    %v4475 = vunpack.c.h.b16 %v3175
    %v4476 = vunpack.c.l.b16 %v3176
    %v4477 = vunpack.c.h.b16 %v3176
    %v4478 = vunpack.c.l.b16 %v3177
    %v4479 = vunpack.c.l.b16 %v3178
    %v4480 = vunpack.c.h.b16 %v3178
    %v4481 = vunpack.c.l.b16 %v3179
    %v4482 = vunpack.c.h.b16 %v3179
    %v4483 = vunpack.c.l.b16 %v3180
    %v4484 = vunpack.c.h.b16 %v3180
    %v4485 = vunpack.c.l.b16 %v3181
    %v4486 = vunpack.c.l.b16 %v3182
    %v4487 = vunpack.c.h.b16 %v3182
    %v4488 = vunpack.c.l.b16 %v3183
    %v4489 = vunpack.c.h.b16 %v3183
    %v4490 = vunpack.c.l.b16 %v3184
    %v4491 = vunpack.c.h.b16 %v3184
    %v4492 = vunpack.c.l.b16 %v3185
    %v4493 = vunpack.c.l.b16 %v3186
    %v4494 = vunpack.c.h.b16 %v3186
    %v4495 = vunpack.c.l.b16 %v3187
    %v4496 = vunpack.c.h.b16 %v3187
    %v4497 = vunpack.c.l.b16 %v3188
    %v4498 = vunpack.c.h.b16 %v3188
    %v4499 = vunpack.c.l.b16 %v3189
    %v4500 = vunpack.c.l.b16 %v3190
    %v4501 = vunpack.c.h.b16 %v3190
    %v4502 = vunpack.c.l.b16 %v3191
    %v4503 = vunpack.c.h.b16 %v3191
    %v4504 = vunpack.c.l.b16 %v3192
    %v4505 = vunpack.c.h.b16 %v3192
    %v4506 = vunpack.c.l.b16 %v3193
    %v4507 = vunpack.c.l.b16 %v3194
    %v4508 = vunpack.c.h.b16 %v3194
    %v4509 = vunpack.c.l.b16 %v3195
    %v4510 = vunpack.c.h.b16 %v3195
    %v4511 = vunpack.c.l.b16 %v3196
    %v4512 = vunpack.c.h.b16 %v3196
    %v4513 = vunpack.c.l.b16 %v3197
    %v4514 = vunpack.c.l.b16 %v3198
    %v4515 = vunpack.c.h.b16 %v3198
    %v4516 = vunpack.c.l.b16 %v3199
    %v4517 = vunpack.c.h.b16 %v3199
    %v4518 = vunpack.c.l.b16 %v3200
    %v4519 = vunpack.c.h.b16 %v3200
    %v4520 = vunpack.c.l.b16 %v3201
    %v4521 = vunpack.c.l.b16 %v3202
    %v4522 = vunpack.c.h.b16 %v3202
    %v4523 = vunpack.c.l.b16 %v3203
    %v4524 = vunpack.c.h.b16 %v3203
    %v4525 = vunpack.c.l.b16 %v3204
    %v4526 = vunpack.c.h.b16 %v3204
    %v4527 = vunpack.c.l.b16 %v3205
    %v4528 = vunpack.c.l.b16 %v3206
    %v4529 = vunpack.c.h.b16 %v3206
    %v4530 = vunpack.c.l.b16 %v3207
    %v4531 = vunpack.c.h.b16 %v3207
    %v4532 = vunpack.c.l.b16 %v3208
    %v4533 = vunpack.c.h.b16 %v3208
    %v4534 = vunpack.c.l.b16 %v3209
    %v4535 = vunpack.c.l.b16 %v3210
    %v4536 = vunpack.c.h.b16 %v3210
    %v4537 = vunpack.c.l.b16 %v3211
    %v4538 = vunpack.c.h.b16 %v3211
    %v4539 = vunpack.c.l.b16 %v3212
    %v4540 = vunpack.c.h.b16 %v3212
    %v4541 = vunpack.c.l.b16 %v3213
    %v4542 = vunpack.c.l.b16 %v3214
    %v4543 = vunpack.c.h.b16 %v3214
    %v4544 = vunpack.c.l.b16 %v3215
    %v4545 = vunpack.c.h.b16 %v3215
    %v4546 = vunpack.c.l.b16 %v3216
    %v4547 = vunpack.c.h.b16 %v3216
    %v4548 = vunpack.c.l.b16 %v3217
    %v4549 = vunpack.c.l.b16 %v3218
    %v4550 = vunpack.c.h.b16 %v3218
    %v4551 = vunpack.c.l.b16 %v3219
    %v4552 = vunpack.c.h.b16 %v3219
    %v4553 = vunpack.c.l.b16 %v3220
    %v4554 = vunpack.c.h.b16 %v3220
    %v4555 = vunpack.c.l.b16 %v3221
    %v4556 = vunpack.c.l.b16 %v3222
    %v4557 = vunpack.c.h.b16 %v3222
    %v4558 = vunpack.c.l.b16 %v3223
    %v4559 = vunpack.c.h.b16 %v3223
    %v4560 = vunpack.c.l.b16 %v3224
    %v4561 = vunpack.c.h.b16 %v3224
    %v4562 = vunpack.c.l.b16 %v3225
    %v4563 = vunpack.c.l.b16 %v3226
    %v4564 = vunpack.c.h.b16 %v3226
    %v4565 = vunpack.c.l.b16 %v3227
    %v4566 = vunpack.c.h.b16 %v3227
    %v4567 = vunpack.c.l.b16 %v3228
    %v4568 = vunpack.c.h.b16 %v3228
    %v4569 = vunpack.c.l.b16 %v3229
    %v4570 = vunpack.c.l.b16 %v3230
    %v4571 = vunpack.c.h.b16 %v3230
    %v4572 = vunpack.c.l.b16 %v3231
    %v4573 = vunpack.c.h.b16 %v3231
    %v4574 = vunpack.c.l.b16 %v3232
    %v4575 = vunpack.c.h.b16 %v3232
    %v4576 = vunpack.c.l.b16 %v3233
    %v4577 = vunpack.c.l.b16 %v3234
    %v4578 = vunpack.c.h.b16 %v3234
    %v4579 = vunpack.c.l.b16 %v3235
    %v4580 = vunpack.c.h.b16 %v3235
    %v4581 = vunpack.c.l.b16 %v3236
    %v4582 = vunpack.c.h.b16 %v3236
    %v4583 = vunpack.c.l.b16 %v3237
    %v4584 = vunpack.c.l.b16 %v3238
    %v4585 = vunpack.c.h.b16 %v3238
    %v4586 = vunpack.c.l.b16 %v3239
    %v4587 = vunpack.c.h.b16 %v3239
    %v4588 = vunpack.c.l.b16 %v3240
    %v4589 = vunpack.c.h.b16 %v3240
    %v4590 = vunpack.c.l.b16 %v3241
    %v4591 = vunpack.c.l.b16 %v3242
    %v4592 = vunpack.c.h.b16 %v3242
    %v4593 = vunpack.c.l.b16 %v3243
    %v4594 = vunpack.c.h.b16 %v3243
    %v4595 = vunpack.c.l.b16 %v3244
    %v4596 = vunpack.c.h.b16 %v3244
    %v4597 = vunpack.c.l.b16 %v3245
    %v4598 = vunpack.c.l.b16 %v3246
    %v4599 = vunpack.c.h.b16 %v3246
    %v4600 = vunpack.c.l.b16 %v3247
    %v4601 = vunpack.c.h.b16 %v3247
    %v4602 = vunpack.c.l.b16 %v3248
    %v4603 = vunpack.c.h.b16 %v3248
    %v4604 = vunpack.c.l.b16 %v3249
    %v4605 = vunpack.c.l.b16 %v3250
    %v4606 = vunpack.c.h.b16 %v3250
    %v4607 = vunpack.c.l.b16 %v3251
    %v4608 = vunpack.c.h.b16 %v3251
    %v4609 = vunpack.c.l.b16 %v3252
    %v4610 = vunpack.c.h.b16 %v3252
    %v4611 = vunpack.c.l.b16 %v3253
    %v4612 = vunpack.c.l.b16 %v3254
    %v4613 = vunpack.c.h.b16 %v3254
    %v4614 = vunpack.c.l.b16 %v3255
    %v4615 = vunpack.c.h.b16 %v3255
    %v4616 = vunpack.c.l.b16 %v3256
    %v4617 = vunpack.c.h.b16 %v3256
    %v4618 = vunpack.c.l.b16 %v3257
    %v4619 = vunpack.c.l.b16 %v3258
    %v4620 = vunpack.c.h.b16 %v3258
    %v4621 = vunpack.c.l.b16 %v3259
    %v4622 = vunpack.c.h.b16 %v3259
    %v4623 = vunpack.c.l.b16 %v3260
    %v4624 = vunpack.c.h.b16 %v3260
    %v4625 = vunpack.c.l.b16 %v3261
    %v4626 = vunpack.c.l.b16 %v3262
    %v4627 = vunpack.c.h.b16 %v3262
    %v4628 = vunpack.c.l.b16 %v3263
    %v4629 = vunpack.c.h.b16 %v3263
    %v4630 = vunpack.c.l.b16 %v3264
    %v4631 = vunpack.c.h.b16 %v3264
    %v4632 = vunpack.c.l.b16 %v3265
    %v4633 = vunpack.c.l.b16 %v3266
    %v4634 = vunpack.c.h.b16 %v3266
    %v4635 = vunpack.c.l.b16 %v3267
    %v4636 = vunpack.c.h.b16 %v3267
    %v4637 = vunpack.c.l.b16 %v3268
    %v4638 = vunpack.c.h.b16 %v3268
    %v4639 = vunpack.c.l.b16 %v3269
    %v4640 = vunpack.c.l.b16 %v3270
    %v4641 = vunpack.c.h.b16 %v3270
    %v4642 = vunpack.c.l.b16 %v3271
    %v4643 = vunpack.c.h.b16 %v3271
    %v4644 = vunpack.c.l.b16 %v3272
    %v4645 = vunpack.c.h.b16 %v3272
    %v4646 = vunpack.c.l.b16 %v3273
    %v4647 = vunpack.c.l.b16 %v3274
    %v4648 = vunpack.c.h.b16 %v3274
    %v4649 = vunpack.c.l.b16 %v3275
    %v4650 = vunpack.c.h.b16 %v3275
    %v4651 = vunpack.c.l.b16 %v3276
    %v4652 = vunpack.c.h.b16 %v3276
    %v4653 = vunpack.c.l.b16 %v3277
    %v4654 = vunpack.c.l.b16 %v3278
    %v4655 = vunpack.c.h.b16 %v3278
    %v4656 = vunpack.c.l.b16 %v3279
    %v4657 = vunpack.c.h.b16 %v3279
    %v4658 = vunpack.c.l.b16 %v3280
    %v4659 = vunpack.c.h.b16 %v3280
    %v4660 = vunpack.c.l.b16 %v3281
    %v4661 = vunpack.c.l.b16 %v3282
    %v4662 = vunpack.c.h.b16 %v3282
    %v4663 = vunpack.c.l.b16 %v3283
    %v4664 = vunpack.c.h.b16 %v3283
    %v4665 = vunpack.c.l.b16 %v3284
    %v4666 = vunpack.c.h.b16 %v3284
    %v4667 = vunpack.c.l.b16 %v3285
    %v4668 = vunpack.c.l.b16 %v3286
    %v4669 = vunpack.c.h.b16 %v3286
    %v4670 = vunpack.c.l.b16 %v3287
    %v4671 = vunpack.c.h.b16 %v3287
    %v4672 = vunpack.c.l.b16 %v3288
    %v4673 = vunpack.c.h.b16 %v3288
    %v4674 = vunpack.c.l.b16 %v3289
    %v4675 = vunpack.c.l.b16 %v3290
    %v4676 = vunpack.c.h.b16 %v3290
    %v4677 = vunpack.c.l.b16 %v3291
    %v4678 = vunpack.c.h.b16 %v3291
    %v4679 = vunpack.c.l.b16 %v3292
    %v4680 = vunpack.c.h.b16 %v3292
    %v4681 = vunpack.c.l.b16 %v3293
    %v4682 = vunpack.c.l.b16 %v3294
    %v4683 = vunpack.c.h.b16 %v3294
    %v4684 = vunpack.c.l.b16 %v3295
    %v4685 = vunpack.c.h.b16 %v3295
    %v4686 = vunpack.c.l.b16 %v3296
    %v4687 = vunpack.c.h.b16 %v3296
    %v4688 = vunpack.c.l.b16 %v3297
    %v4689 = vunpack.c.l.b16 %v3298
    %v4690 = vunpack.c.h.b16 %v3298
    %v4691 = vunpack.c.l.b16 %v3299
    %v4692 = vunpack.c.h.b16 %v3299
    %v4693 = vunpack.c.l.b16 %v3300
    %v4694 = vunpack.c.h.b16 %v3300
    %v4695 = vunpack.c.l.b16 %v3301
    %v4696 = vunpack.c.l.b16 %v3302
    %v4697 = vunpack.c.h.b16 %v3302
    %v4698 = vunpack.c.l.b16 %v3303
    %v4699 = vunpack.c.h.b16 %v3303
    %v4700 = vunpack.c.l.b16 %v3304
    %v4701 = vunpack.c.h.b16 %v3304
    %v4702 = vunpack.c.l.b16 %v3305
    %v4703 = vunpack.c.l.b16 %v3306
    %v4704 = vunpack.c.h.b16 %v3306
    %v4705 = vunpack.c.l.b16 %v3307
    %v4706 = vunpack.c.h.b16 %v3307
    %v4707 = vunpack.c.l.b16 %v3308
    %v4708 = vunpack.c.h.b16 %v3308
    %v4709 = vunpack.c.l.b16 %v3309
    %v4710 = vunpack.c.l.b16 %v3310
    %v4711 = vunpack.c.h.b16 %v3310
    %v4712 = vunpack.c.l.b16 %v3311
    %v4713 = vunpack.c.h.b16 %v3311
    %v4714 = vunpack.c.l.b16 %v3312
    %v4715 = vunpack.c.h.b16 %v3312
    %v4716 = vunpack.c.l.b16 %v3313
    %v4717 = vunpack.c.l.b16 %v3314
    %v4718 = vunpack.c.h.b16 %v3314
    %v4719 = vunpack.c.l.b16 %v3315
    %v4720 = vunpack.c.h.b16 %v3315
    %v4721 = vunpack.c.l.b16 %v3316
    %v4722 = vunpack.c.h.b16 %v3316
    %v4723 = vunpack.c.l.b16 %v3317
    %v4724 = vunpack.c.l.b16 %v3318
    %v4725 = vunpack.c.h.b16 %v3318
    %v4726 = vunpack.c.l.b16 %v3319
    %v4727 = vunpack.c.h.b16 %v3319
    %v4728 = vunpack.c.l.b16 %v3320
    %v4729 = vunpack.c.h.b16 %v3320
    %v4730 = vunpack.c.l.b16 %v3321
    %v4731 = vunpack.c.l.b16 %v3322
    %v4732 = vunpack.c.h.b16 %v3322
    %v4733 = vunpack.c.l.b16 %v3323
    %v4734 = vunpack.c.h.b16 %v3323
    %v4735 = vunpack.c.l.b16 %v3324
    %v4736 = vunpack.c.h.b16 %v3324
    %v4737 = vunpack.c.l.b16 %v3325
    %v4738 = vunpack.c.l.b16 %v3326
    %v4739 = vunpack.c.h.b16 %v3326
    %v4740 = vunpack.c.l.b16 %v3327
    %v4741 = vunpack.c.h.b16 %v3327
    %v4742 = vunpack.c.l.b16 %v3328
    %v4743 = vunpack.c.h.b16 %v3328
    %v4744 = vunpack.c.l.b16 %v3329
    %v4745 = vunpack.c.l.b16 %v3330
    %v4746 = vunpack.c.h.b16 %v3330
    %v4747 = vunpack.c.l.b16 %v3331
    %v4748 = vunpack.c.h.b16 %v3331
    %v4749 = vunpack.c.l.b16 %v3332
    %v4750 = vunpack.c.h.b16 %v3332
    %v4751 = vunpack.c.l.b16 %v3333
    %v4752 = vunpack.c.l.b16 %v3334
    %v4753 = vunpack.c.h.b16 %v3334
    %v4754 = vunpack.c.l.b16 %v3335
    %v4755 = vunpack.c.h.b16 %v3335
    %v4756 = vunpack.c.l.b16 %v3336
    %v4757 = vunpack.c.h.b16 %v3336
    %v4758 = vunpack.c.l.b16 %v3337
    %v4759 = vunpack.c.l.b16 %v3338
    %v4760 = vunpack.c.h.b16 %v3338
    %v4761 = vunpack.c.l.b16 %v3339
    %v4762 = vunpack.c.h.b16 %v3339
    %v4763 = vunpack.c.l.b16 %v3340
    %v4764 = vunpack.c.h.b16 %v3340
    %v4765 = vunpack.c.l.b16 %v3341
    %v4766 = vpack.c.b16 %v3877, %v3870
    %v4767 = vpack.c.b16 %v3878, %v3871
    %v4768 = vpack.c.b16 %v3879, %v3872
    %v4769 = vpack.c.b16 %v3880, %v3873
    %v4770 = vpack.c.b16 %v3881, %v3874
    %v4771 = vpack.c.b16 %v3882, %v3875
    %v4772 = vpack.c.b16 %v3883, %v3876
    %v4773 = vpack.c.b16 %v3891, %v3884
    %v4774 = vpack.c.b16 %v3892, %v3885
    %v4775 = vpack.c.b16 %v3893, %v3886
    %v4776 = vpack.c.b16 %v3894, %v3887
    %v4777 = vpack.c.b16 %v3895, %v3888
    %v4778 = vpack.c.b16 %v3896, %v3889
    %v4779 = vpack.c.b16 %v3897, %v3890
    %v4780 = vpack.c.b16 %v3905, %v3898
    %v4781 = vpack.c.b16 %v3906, %v3899
    %v4782 = vpack.c.b16 %v3907, %v3900
    %v4783 = vpack.c.b16 %v3908, %v3901
    %v4784 = vpack.c.b16 %v3909, %v3902
    %v4785 = vpack.c.b16 %v3910, %v3903
    %v4786 = vpack.c.b16 %v3911, %v3904
    %v4787 = vpack.c.b16 %v3919, %v3912
    %v4788 = vpack.c.b16 %v3920, %v3913
    %v4789 = vpack.c.b16 %v3921, %v3914
    %v4790 = vpack.c.b16 %v3922, %v3915
    %v4791 = vpack.c.b16 %v3923, %v3916
    %v4792 = vpack.c.b16 %v3924, %v3917
    %v4793 = vpack.c.b16 %v3925, %v3918
    %v4794 = vpack.c.b16 %v3933, %v3926
    %v4795 = vpack.c.b16 %v3934, %v3927
    %v4796 = vpack.c.b16 %v3935, %v3928
    %v4797 = vpack.c.b16 %v3936, %v3929
    %v4798 = vpack.c.b16 %v3937, %v3930
    %v4799 = vpack.c.b16 %v3938, %v3931
    %v4800 = vpack.c.b16 %v3939, %v3932
    %v4801 = vpack.c.b16 %v3947, %v3940
    %v4802 = vpack.c.b16 %v3948, %v3941
    %v4803 = vpack.c.b16 %v3949, %v3942
    %v4804 = vpack.c.b16 %v3950, %v3943
    %v4805 = vpack.c.b16 %v3951, %v3944
    %v4806 = vpack.c.b16 %v3952, %v3945
    %v4807 = vpack.c.b16 %v3953, %v3946
    %v4808 = vpack.c.b16 %v3961, %v3954
    %v4809 = vpack.c.b16 %v3962, %v3955
    %v4810 = vpack.c.b16 %v3963, %v3956
    %v4811 = vpack.c.b16 %v3964, %v3957
    %v4812 = vpack.c.b16 %v3965, %v3958
    %v4813 = vpack.c.b16 %v3966, %v3959
    %v4814 = vpack.c.b16 %v3967, %v3960
    %v4815 = vpack.c.b16 %v3975, %v3968
    %v4816 = vpack.c.b16 %v3976, %v3969
    %v4817 = vpack.c.b16 %v3977, %v3970
    %v4818 = vpack.c.b16 %v3978, %v3971
    %v4819 = vpack.c.b16 %v3979, %v3972
    %v4820 = vpack.c.b16 %v3980, %v3973
    %v4821 = vpack.c.b16 %v3981, %v3974
    %v4822 = vpack.c.b16 %v3989, %v3982
    %v4823 = vpack.c.b16 %v3990, %v3983
    %v4824 = vpack.c.b16 %v3991, %v3984
    %v4825 = vpack.c.b16 %v3992, %v3985
    %v4826 = vpack.c.b16 %v3993, %v3986
    %v4827 = vpack.c.b16 %v3994, %v3987
    %v4828 = vpack.c.b16 %v3995, %v3988
    %v4829 = vpack.c.b16 %v4003, %v3996
    %v4830 = vpack.c.b16 %v4004, %v3997
    %v4831 = vpack.c.b16 %v4005, %v3998
    %v4832 = vpack.c.b16 %v4006, %v3999
    %v4833 = vpack.c.b16 %v4007, %v4000
    %v4834 = vpack.c.b16 %v4008, %v4001
    %v4835 = vpack.c.b16 %v4009, %v4002
    %v4836 = vpack.c.b16 %v4017, %v4010
    %v4837 = vpack.c.b16 %v4018, %v4011
    %v4838 = vpack.c.b16 %v4019, %v4012
    %v4839 = vpack.c.b16 %v4020, %v4013
    %v4840 = vpack.c.b16 %v4021, %v4014
    %v4841 = vpack.c.b16 %v4022, %v4015
    %v4842 = vpack.c.b16 %v4023, %v4016
    %v4843 = vpack.c.b16 %v4031, %v4024
    %v4844 = vpack.c.b16 %v4032, %v4025
    %v4845 = vpack.c.b16 %v4033, %v4026
    %v4846 = vpack.c.b16 %v4034, %v4027
    %v4847 = vpack.c.b16 %v4035, %v4028
    %v4848 = vpack.c.b16 %v4036, %v4029
    %v4849 = vpack.c.b16 %v4037, %v4030
    %v4850 = vpack.c.b16 %v4045, %v4038
    %v4851 = vpack.c.b16 %v4046, %v4039
    %v4852 = vpack.c.b16 %v4047, %v4040
    %v4853 = vpack.c.b16 %v4048, %v4041
    %v4854 = vpack.c.b16 %v4049, %v4042
    %v4855 = vpack.c.b16 %v4050, %v4043
    %v4856 = vpack.c.b16 %v4051, %v4044
    %v4857 = vpack.c.b16 %v4059, %v4052
    %v4858 = vpack.c.b16 %v4060, %v4053
    %v4859 = vpack.c.b16 %v4061, %v4054
    %v4860 = vpack.c.b16 %v4062, %v4055
    %v4861 = vpack.c.b16 %v4063, %v4056
    %v4862 = vpack.c.b16 %v4064, %v4057
    %v4863 = vpack.c.b16 %v4065, %v4058
    %v4864 = vpack.c.b16 %v4073, %v4066
    %v4865 = vpack.c.b16 %v4074, %v4067
    %v4866 = vpack.c.b16 %v4075, %v4068
    %v4867 = vpack.c.b16 %v4076, %v4069
    %v4868 = vpack.c.b16 %v4077, %v4070
    %v4869 = vpack.c.b16 %v4078, %v4071
    %v4870 = vpack.c.b16 %v4079, %v4072
    %v4871 = vpack.c.b16 %v4087, %v4080
    %v4872 = vpack.c.b16 %v4088, %v4081
    %v4873 = vpack.c.b16 %v4089, %v4082
    %v4874 = vpack.c.b16 %v4090, %v4083
    %v4875 = vpack.c.b16 %v4091, %v4084
    %v4876 = vpack.c.b16 %v4092, %v4085
    %v4877 = vpack.c.b16 %v4093, %v4086
    %v4878 = vpack.c.b16 %v4101, %v4094
    %v4879 = vpack.c.b16 %v4102, %v4095
    %v4880 = vpack.c.b16 %v4103, %v4096
    %v4881 = vpack.c.b16 %v4104, %v4097
    %v4882 = vpack.c.b16 %v4105, %v4098
    %v4883 = vpack.c.b16 %v4106, %v4099
    %v4884 = vpack.c.b16 %v4107, %v4100
    %v4885 = vpack.c.b16 %v4115, %v4108
    %v4886 = vpack.c.b16 %v4116, %v4109
    %v4887 = vpack.c.b16 %v4117, %v4110
    %v4888 = vpack.c.b16 %v4118, %v4111
    %v4889 = vpack.c.b16 %v4119, %v4112
    %v4890 = vpack.c.b16 %v4120, %v4113
    %v4891 = vpack.c.b16 %v4121, %v4114
    %v4892 = vpack.c.b16 %v4129, %v4122
    %v4893 = vpack.c.b16 %v4130, %v4123
    %v4894 = vpack.c.b16 %v4131, %v4124
    %v4895 = vpack.c.b16 %v4132, %v4125
    %v4896 = vpack.c.b16 %v4133, %v4126
    %v4897 = vpack.c.b16 %v4134, %v4127
    %v4898 = vpack.c.b16 %v4135, %v4128
    %v4899 = vpack.c.b16 %v4143, %v4136
    %v4900 = vpack.c.b16 %v4144, %v4137
    %v4901 = vpack.c.b16 %v4145, %v4138
    %v4902 = vpack.c.b16 %v4146, %v4139
    %v4903 = vpack.c.b16 %v4147, %v4140
    %v4904 = vpack.c.b16 %v4148, %v4141
    %v4905 = vpack.c.b16 %v4149, %v4142
    %v4906 = vpack.c.b16 %v4157, %v4150
    %v4907 = vpack.c.b16 %v4158, %v4151
    %v4908 = vpack.c.b16 %v4159, %v4152
    %v4909 = vpack.c.b16 %v4160, %v4153
    %v4910 = vpack.c.b16 %v4161, %v4154
    %v4911 = vpack.c.b16 %v4162, %v4155
    %v4912 = vpack.c.b16 %v4163, %v4156
    %v4913 = vpack.c.b16 %v4171, %v4164
    %v4914 = vpack.c.b16 %v4172, %v4165
    %v4915 = vpack.c.b16 %v4173, %v4166
    %v4916 = vpack.c.b16 %v4174, %v4167
    %v4917 = vpack.c.b16 %v4175, %v4168
    %v4918 = vpack.c.b16 %v4176, %v4169
    %v4919 = vpack.c.b16 %v4177, %v4170
    %v4920 = vpack.c.b16 %v4185, %v4178
    %v4921 = vpack.c.b16 %v4186, %v4179
    %v4922 = vpack.c.b16 %v4187, %v4180
    %v4923 = vpack.c.b16 %v4188, %v4181
    %v4924 = vpack.c.b16 %v4189, %v4182
    %v4925 = vpack.c.b16 %v4190, %v4183
    %v4926 = vpack.c.b16 %v4191, %v4184
    %v4927 = vpack.c.b16 %v4199, %v4192
    %v4928 = vpack.c.b16 %v4200, %v4193
    %v4929 = vpack.c.b16 %v4201, %v4194
    %v4930 = vpack.c.b16 %v4202, %v4195
    %v4931 = vpack.c.b16 %v4203, %v4196
    %v4932 = vpack.c.b16 %v4204, %v4197
    %v4933 = vpack.c.b16 %v4205, %v4198
    %v4934 = vpack.c.b16 %v4213, %v4206
    %v4935 = vpack.c.b16 %v4214, %v4207
    %v4936 = vpack.c.b16 %v4215, %v4208
    %v4937 = vpack.c.b16 %v4216, %v4209
    %v4938 = vpack.c.b16 %v4217, %v4210
    %v4939 = vpack.c.b16 %v4218, %v4211
    %v4940 = vpack.c.b16 %v4219, %v4212
    %v4941 = vpack.c.b16 %v4227, %v4220
    %v4942 = vpack.c.b16 %v4228, %v4221
    %v4943 = vpack.c.b16 %v4229, %v4222
    %v4944 = vpack.c.b16 %v4230, %v4223
    %v4945 = vpack.c.b16 %v4231, %v4224
    %v4946 = vpack.c.b16 %v4232, %v4225
    %v4947 = vpack.c.b16 %v4233, %v4226
    %v4948 = vpack.c.b16 %v4241, %v4234
    %v4949 = vpack.c.b16 %v4242, %v4235
    %v4950 = vpack.c.b16 %v4243, %v4236
    %v4951 = vpack.c.b16 %v4244, %v4237
    %v4952 = vpack.c.b16 %v4245, %v4238
    %v4953 = vpack.c.b16 %v4246, %v4239
    %v4954 = vpack.c.b16 %v4247, %v4240
    %v4955 = vpack.c.b16 %v4255, %v4248
    %v4956 = vpack.c.b16 %v4256, %v4249
    %v4957 = vpack.c.b16 %v4257, %v4250
    %v4958 = vpack.c.b16 %v4258, %v4251
    %v4959 = vpack.c.b16 %v4259, %v4252
    %v4960 = vpack.c.b16 %v4260, %v4253
    %v4961 = vpack.c.b16 %v4261, %v4254
    %v4962 = vpack.c.b16 %v4269, %v4262
    %v4963 = vpack.c.b16 %v4270, %v4263
    %v4964 = vpack.c.b16 %v4271, %v4264
    %v4965 = vpack.c.b16 %v4272, %v4265
    %v4966 = vpack.c.b16 %v4273, %v4266
    %v4967 = vpack.c.b16 %v4274, %v4267
    %v4968 = vpack.c.b16 %v4275, %v4268
    %v4969 = vpack.c.b16 %v4283, %v4276
    %v4970 = vpack.c.b16 %v4284, %v4277
    %v4971 = vpack.c.b16 %v4285, %v4278
    %v4972 = vpack.c.b16 %v4286, %v4279
    %v4973 = vpack.c.b16 %v4287, %v4280
    %v4974 = vpack.c.b16 %v4288, %v4281
    %v4975 = vpack.c.b16 %v4289, %v4282
    %v4976 = vpack.c.b16 %v4297, %v4290
    %v4977 = vpack.c.b16 %v4298, %v4291
    %v4978 = vpack.c.b16 %v4299, %v4292
    %v4979 = vpack.c.b16 %v4300, %v4293
    %v4980 = vpack.c.b16 %v4301, %v4294
    %v4981 = vpack.c.b16 %v4302, %v4295
    %v4982 = vpack.c.b16 %v4303, %v4296
    %v4983 = vpack.c.b16 %v4311, %v4304
    %v4984 = vpack.c.b16 %v4312, %v4305
    %v4985 = vpack.c.b16 %v4313, %v4306
    %v4986 = vpack.c.b16 %v4314, %v4307
    %v4987 = vpack.c.b16 %v4315, %v4308
    %v4988 = vpack.c.b16 %v4316, %v4309
    %v4989 = vpack.c.b16 %v4317, %v4310
    %v4990 = vpack.c.b16 %v4325, %v4318
    %v4991 = vpack.c.b16 %v4326, %v4319
    %v4992 = vpack.c.b16 %v4327, %v4320
    %v4993 = vpack.c.b16 %v4328, %v4321
    %v4994 = vpack.c.b16 %v4329, %v4322
    %v4995 = vpack.c.b16 %v4330, %v4323
    %v4996 = vpack.c.b16 %v4331, %v4324
    %v4997 = vpack.c.b16 %v4339, %v4332
    %v4998 = vpack.c.b16 %v4340, %v4333
    %v4999 = vpack.c.b16 %v4341, %v4334
    %v5000 = vpack.c.b16 %v4342, %v4335
    %v5001 = vpack.c.b16 %v4343, %v4336
    %v5002 = vpack.c.b16 %v4344, %v4337
    %v5003 = vpack.c.b16 %v4345, %v4338
    %v5004 = vpack.c.b16 %v4353, %v4346
    %v5005 = vpack.c.b16 %v4354, %v4347
    %v5006 = vpack.c.b16 %v4355, %v4348
    %v5007 = vpack.c.b16 %v4356, %v4349
    %v5008 = vpack.c.b16 %v4357, %v4350
    %v5009 = vpack.c.b16 %v4358, %v4351
    %v5010 = vpack.c.b16 %v4359, %v4352
    %v5011 = vpack.c.b16 %v4367, %v4360
    %v5012 = vpack.c.b16 %v4368, %v4361
    %v5013 = vpack.c.b16 %v4369, %v4362
    %v5014 = vpack.c.b16 %v4370, %v4363
    %v5015 = vpack.c.b16 %v4371, %v4364
    %v5016 = vpack.c.b16 %v4372, %v4365
    %v5017 = vpack.c.b16 %v4373, %v4366
    %v5018 = vpack.c.b16 %v4381, %v4374
    %v5019 = vpack.c.b16 %v4382, %v4375
    %v5020 = vpack.c.b16 %v4383, %v4376
    %v5021 = vpack.c.b16 %v4384, %v4377
    %v5022 = vpack.c.b16 %v4385, %v4378
    %v5023 = vpack.c.b16 %v4386, %v4379
    %v5024 = vpack.c.b16 %v4387, %v4380
    %v5025 = vpack.c.b16 %v4395, %v4388
    %v5026 = vpack.c.b16 %v4396, %v4389
    %v5027 = vpack.c.b16 %v4397, %v4390
    %v5028 = vpack.c.b16 %v4398, %v4391
    %v5029 = vpack.c.b16 %v4399, %v4392
    %v5030 = vpack.c.b16 %v4400, %v4393
    %v5031 = vpack.c.b16 %v4401, %v4394
    %v5032 = vpack.c.b16 %v4409, %v4402
    %v5033 = vpack.c.b16 %v4410, %v4403
    %v5034 = vpack.c.b16 %v4411, %v4404
    %v5035 = vpack.c.b16 %v4412, %v4405
    %v5036 = vpack.c.b16 %v4413, %v4406
    %v5037 = vpack.c.b16 %v4414, %v4407
    %v5038 = vpack.c.b16 %v4415, %v4408
    %v5039 = vpack.c.b16 %v4423, %v4416
    %v5040 = vpack.c.b16 %v4424, %v4417
    %v5041 = vpack.c.b16 %v4425, %v4418
    %v5042 = vpack.c.b16 %v4426, %v4419
    %v5043 = vpack.c.b16 %v4427, %v4420
    %v5044 = vpack.c.b16 %v4428, %v4421
    %v5045 = vpack.c.b16 %v4429, %v4422
    %v5046 = vpack.c.b16 %v4437, %v4430
    %v5047 = vpack.c.b16 %v4438, %v4431
    %v5048 = vpack.c.b16 %v4439, %v4432
    %v5049 = vpack.c.b16 %v4440, %v4433
    %v5050 = vpack.c.b16 %v4441, %v4434
    %v5051 = vpack.c.b16 %v4442, %v4435
    %v5052 = vpack.c.b16 %v4443, %v4436
    %v5053 = vpack.c.b16 %v4451, %v4444
    %v5054 = vpack.c.b16 %v4452, %v4445
    %v5055 = vpack.c.b16 %v4453, %v4446
    %v5056 = vpack.c.b16 %v4454, %v4447
    %v5057 = vpack.c.b16 %v4455, %v4448
    %v5058 = vpack.c.b16 %v4456, %v4449
    %v5059 = vpack.c.b16 %v4457, %v4450
    %v5060 = vpack.c.b16 %v4465, %v4458
    %v5061 = vpack.c.b16 %v4466, %v4459
    %v5062 = vpack.c.b16 %v4467, %v4460
    %v5063 = vpack.c.b16 %v4468, %v4461
    %v5064 = vpack.c.b16 %v4469, %v4462
    %v5065 = vpack.c.b16 %v4470, %v4463
    %v5066 = vpack.c.b16 %v4471, %v4464
    %v5067 = vpack.c.b16 %v4479, %v4472
    %v5068 = vpack.c.b16 %v4480, %v4473
    %v5069 = vpack.c.b16 %v4481, %v4474
    %v5070 = vpack.c.b16 %v4482, %v4475
    %v5071 = vpack.c.b16 %v4483, %v4476
    %v5072 = vpack.c.b16 %v4484, %v4477
    %v5073 = vpack.c.b16 %v4485, %v4478
    %v5074 = vpack.c.b16 %v4493, %v4486
    %v5075 = vpack.c.b16 %v4494, %v4487
    %v5076 = vpack.c.b16 %v4495, %v4488
    %v5077 = vpack.c.b16 %v4496, %v4489
    %v5078 = vpack.c.b16 %v4497, %v4490
    %v5079 = vpack.c.b16 %v4498, %v4491
    %v5080 = vpack.c.b16 %v4499, %v4492
    %v5081 = vpack.c.b16 %v4507, %v4500
    %v5082 = vpack.c.b16 %v4508, %v4501
    %v5083 = vpack.c.b16 %v4509, %v4502
    %v5084 = vpack.c.b16 %v4510, %v4503
    %v5085 = vpack.c.b16 %v4511, %v4504
    %v5086 = vpack.c.b16 %v4512, %v4505
    %v5087 = vpack.c.b16 %v4513, %v4506
    %v5088 = vpack.c.b16 %v4521, %v4514
    %v5089 = vpack.c.b16 %v4522, %v4515
    %v5090 = vpack.c.b16 %v4523, %v4516
    %v5091 = vpack.c.b16 %v4524, %v4517
    %v5092 = vpack.c.b16 %v4525, %v4518
    %v5093 = vpack.c.b16 %v4526, %v4519
    %v5094 = vpack.c.b16 %v4527, %v4520
    %v5095 = vpack.c.b16 %v4535, %v4528
    %v5096 = vpack.c.b16 %v4536, %v4529
    %v5097 = vpack.c.b16 %v4537, %v4530
    %v5098 = vpack.c.b16 %v4538, %v4531
    %v5099 = vpack.c.b16 %v4539, %v4532
    %v5100 = vpack.c.b16 %v4540, %v4533
    %v5101 = vpack.c.b16 %v4541, %v4534
    %v5102 = vpack.c.b16 %v4549, %v4542
    %v5103 = vpack.c.b16 %v4550, %v4543
    %v5104 = vpack.c.b16 %v4551, %v4544
    %v5105 = vpack.c.b16 %v4552, %v4545
    %v5106 = vpack.c.b16 %v4553, %v4546
    %v5107 = vpack.c.b16 %v4554, %v4547
    %v5108 = vpack.c.b16 %v4555, %v4548
    %v5109 = vpack.c.b16 %v4563, %v4556
    %v5110 = vpack.c.b16 %v4564, %v4557
    %v5111 = vpack.c.b16 %v4565, %v4558
    %v5112 = vpack.c.b16 %v4566, %v4559
    %v5113 = vpack.c.b16 %v4567, %v4560
    %v5114 = vpack.c.b16 %v4568, %v4561
    %v5115 = vpack.c.b16 %v4569, %v4562
    %v5116 = vpack.c.b16 %v4577, %v4570
    %v5117 = vpack.c.b16 %v4578, %v4571
    %v5118 = vpack.c.b16 %v4579, %v4572
    %v5119 = vpack.c.b16 %v4580, %v4573
    %v5120 = vpack.c.b16 %v4581, %v4574
    %v5121 = vpack.c.b16 %v4582, %v4575
    %v5122 = vpack.c.b16 %v4583, %v4576
    %v5123 = vpack.c.b16 %v4591, %v4584
    %v5124 = vpack.c.b16 %v4592, %v4585
    %v5125 = vpack.c.b16 %v4593, %v4586
    %v5126 = vpack.c.b16 %v4594, %v4587
    %v5127 = vpack.c.b16 %v4595, %v4588
    %v5128 = vpack.c.b16 %v4596, %v4589
    %v5129 = vpack.c.b16 %v4597, %v4590
    %v5130 = vpack.c.b16 %v4605, %v4598
    %v5131 = vpack.c.b16 %v4606, %v4599
    %v5132 = vpack.c.b16 %v4607, %v4600
    %v5133 = vpack.c.b16 %v4608, %v4601
    %v5134 = vpack.c.b16 %v4609, %v4602
    %v5135 = vpack.c.b16 %v4610, %v4603
    %v5136 = vpack.c.b16 %v4611, %v4604
    %v5137 = vpack.c.b16 %v4619, %v4612
    %v5138 = vpack.c.b16 %v4620, %v4613
    %v5139 = vpack.c.b16 %v4621, %v4614
    %v5140 = vpack.c.b16 %v4622, %v4615
    %v5141 = vpack.c.b16 %v4623, %v4616
    %v5142 = vpack.c.b16 %v4624, %v4617
    %v5143 = vpack.c.b16 %v4625, %v4618
    %v5144 = vpack.c.b16 %v4633, %v4626
    %v5145 = vpack.c.b16 %v4634, %v4627
    %v5146 = vpack.c.b16 %v4635, %v4628
    %v5147 = vpack.c.b16 %v4636, %v4629
    %v5148 = vpack.c.b16 %v4637, %v4630
    %v5149 = vpack.c.b16 %v4638, %v4631
    %v5150 = vpack.c.b16 %v4639, %v4632
    %v5151 = vpack.c.b16 %v4647, %v4640
    %v5152 = vpack.c.b16 %v4648, %v4641
    %v5153 = vpack.c.b16 %v4649, %v4642
    %v5154 = vpack.c.b16 %v4650, %v4643
    %v5155 = vpack.c.b16 %v4651, %v4644
    %v5156 = vpack.c.b16 %v4652, %v4645
    %v5157 = vpack.c.b16 %v4653, %v4646
    %v5158 = vpack.c.b16 %v4661, %v4654
    %v5159 = vpack.c.b16 %v4662, %v4655
    %v5160 = vpack.c.b16 %v4663, %v4656
    %v5161 = vpack.c.b16 %v4664, %v4657
    %v5162 = vpack.c.b16 %v4665, %v4658
    %v5163 = vpack.c.b16 %v4666, %v4659
    %v5164 = vpack.c.b16 %v4667, %v4660
    %v5165 = vpack.c.b16 %v4675, %v4668
    %v5166 = vpack.c.b16 %v4676, %v4669
    %v5167 = vpack.c.b16 %v4677, %v4670
    %v5168 = vpack.c.b16 %v4678, %v4671
    %v5169 = vpack.c.b16 %v4679, %v4672
    %v5170 = vpack.c.b16 %v4680, %v4673
    %v5171 = vpack.c.b16 %v4681, %v4674
    %v5172 = vpack.c.b16 %v4689, %v4682
    %v5173 = vpack.c.b16 %v4690, %v4683
    %v5174 = vpack.c.b16 %v4691, %v4684
    %v5175 = vpack.c.b16 %v4692, %v4685
    %v5176 = vpack.c.b16 %v4693, %v4686
    %v5177 = vpack.c.b16 %v4694, %v4687
    %v5178 = vpack.c.b16 %v4695, %v4688
    %v5179 = vpack.c.b16 %v4703, %v4696
    %v5180 = vpack.c.b16 %v4704, %v4697
    %v5181 = vpack.c.b16 %v4705, %v4698
    %v5182 = vpack.c.b16 %v4706, %v4699
    %v5183 = vpack.c.b16 %v4707, %v4700
    %v5184 = vpack.c.b16 %v4708, %v4701
    %v5185 = vpack.c.b16 %v4709, %v4702
    %v5186 = vpack.c.b16 %v4717, %v4710
    %v5187 = vpack.c.b16 %v4718, %v4711
    %v5188 = vpack.c.b16 %v4719, %v4712
    %v5189 = vpack.c.b16 %v4720, %v4713
    %v5190 = vpack.c.b16 %v4721, %v4714
    %v5191 = vpack.c.b16 %v4722, %v4715
    %v5192 = vpack.c.b16 %v4723, %v4716
    %v5193 = vpack.c.b16 %v4731, %v4724
    %v5194 = vpack.c.b16 %v4732, %v4725
    %v5195 = vpack.c.b16 %v4733, %v4726
    %v5196 = vpack.c.b16 %v4734, %v4727
    %v5197 = vpack.c.b16 %v4735, %v4728
    %v5198 = vpack.c.b16 %v4736, %v4729
    %v5199 = vpack.c.b16 %v4737, %v4730
    %v5200 = vpack.c.b16 %v4745, %v4738
    %v5201 = vpack.c.b16 %v4746, %v4739
    %v5202 = vpack.c.b16 %v4747, %v4740
    %v5203 = vpack.c.b16 %v4748, %v4741
    %v5204 = vpack.c.b16 %v4749, %v4742
    %v5205 = vpack.c.b16 %v4750, %v4743
    %v5206 = vpack.c.b16 %v4751, %v4744
    %v5207 = vpack.c.b16 %v4759, %v4752
    %v5208 = vpack.c.b16 %v4760, %v4753
    %v5209 = vpack.c.b16 %v4761, %v4754
    %v5210 = vpack.c.b16 %v4762, %v4755
    %v5211 = vpack.c.b16 %v4763, %v4756
    %v5212 = vpack.c.b16 %v4764, %v4757
    %v5213 = vpack.c.b16 %v4765, %v4758
    %5662 = vmatpush.bf16.msra.mxu0 %v4815
    %5663 = vmatpush.bf16.msra.mxu0 %v4808
    %5664 = vmatpush.bf16.msra.mxu0 %v4801
    %5665 = vmatpush.bf16.msra.mxu0 %v4794
    %5666 = vmatpush.bf16.msra.mxu0 %v4787
    %5667 = vmatpush.bf16.msra.mxu0 %v4780
    %5668 = vmatpush.bf16.msra.mxu0 %v4773
    %5669 = vmatpush.bf16.msra.mxu0 %v4766
    %5670 = vmatmul.bf16.gmra.mxu0 %v2822
    %v5671 = vpop.f32.mrf.mxu0
    %v5672 = vadd.f32 %v3344, %v5671
    %v5673 = vpop.f32.mrf.mxu0
    %5674 = vdwg.mxu0
    %5675 = vmatpush.bf16.msra.mxu0 %v4871
    %5676 = vmatpush.bf16.msra.mxu0 %v4864
    %5677 = vmatpush.bf16.msra.mxu0 %v4857
    %5678 = vmatpush.bf16.msra.mxu0 %v4850
    %5679 = vmatpush.bf16.msra.mxu0 %v4843
    %5680 = vmatpush.bf16.msra.mxu0 %v4836
    %5681 = vmatpush.bf16.msra.mxu0 %v4829
    %5682 = vmatpush.bf16.msra.mxu0 %v4822
    %5683 = vmatmul.bf16.gmra.mxu0 %v2823
    %v5684 = vpop.f32.mrf.mxu0
    %v5685 = vadd.f32 %v5672, %v5684
    %v5686 = vpop.f32.mrf.mxu0
    %5687 = vdwg.mxu0
    %5688 = vmatpush.bf16.msra.mxu0 %v4927
    %5689 = vmatpush.bf16.msra.mxu0 %v4920
    %5690 = vmatpush.bf16.msra.mxu0 %v4913
    %5691 = vmatpush.bf16.msra.mxu0 %v4906
    %5692 = vmatpush.bf16.msra.mxu0 %v4899
    %5693 = vmatpush.bf16.msra.mxu0 %v4892
    %5694 = vmatpush.bf16.msra.mxu0 %v4885
    %5695 = vmatpush.bf16.msra.mxu0 %v4878
    %5696 = vmatmul.bf16.gmra.mxu0 %v2824
    %v5697 = vpop.f32.mrf.mxu0
    %v5698 = vadd.f32 %v5685, %v5697
    %v5699 = vpop.f32.mrf.mxu0
    %5700 = vdwg.mxu0
    %5701 = vmatpush.bf16.msra.mxu0 %v4983
    %5702 = vmatpush.bf16.msra.mxu0 %v4976
    %5703 = vmatpush.bf16.msra.mxu0 %v4969
    %5704 = vmatpush.bf16.msra.mxu0 %v4962
    %5705 = vmatpush.bf16.msra.mxu0 %v4955
    %5706 = vmatpush.bf16.msra.mxu0 %v4948
    %5707 = vmatpush.bf16.msra.mxu0 %v4941
    %5708 = vmatpush.bf16.msra.mxu0 %v4934
    %5709 = vmatmul.bf16.gmra.mxu0 %v2825
    %v5710 = vpop.f32.mrf.mxu0
    %v5711 = vadd.f32 %v5698, %v5710
    %v5712 = vpop.f32.mrf.mxu0
    %5713 = vdwg.mxu0
    %5714 = vmatpush.bf16.msra.mxu0 %v5039
    %5715 = vmatpush.bf16.msra.mxu0 %v5032
    %5716 = vmatpush.bf16.msra.mxu0 %v5025
    %5717 = vmatpush.bf16.msra.mxu0 %v5018
    %5718 = vmatpush.bf16.msra.mxu0 %v5011
    %5719 = vmatpush.bf16.msra.mxu0 %v5004
    %5720 = vmatpush.bf16.msra.mxu0 %v4997
    %5721 = vmatpush.bf16.msra.mxu0 %v4990
    %5722 = vmatmul.bf16.gmra.mxu0 %v2826
    %v5723 = vpop.f32.mrf.mxu0
    %v5724 = vadd.f32 %v5711, %v5723
    %v5725 = vpop.f32.mrf.mxu0
    %5726 = vdwg.mxu0
    %5727 = vmatpush.bf16.msra.mxu0 %v5095
    %5728 = vmatpush.bf16.msra.mxu0 %v5088
    %5729 = vmatpush.bf16.msra.mxu0 %v5081
    %5730 = vmatpush.bf16.msra.mxu0 %v5074
    %5731 = vmatpush.bf16.msra.mxu0 %v5067
    %5732 = vmatpush.bf16.msra.mxu0 %v5060
    %5733 = vmatpush.bf16.msra.mxu0 %v5053
    %5734 = vmatpush.bf16.msra.mxu0 %v5046
    %5735 = vmatmul.bf16.gmra.mxu0 %v2827
    %v5736 = vpop.f32.mrf.mxu0
    %v5737 = vadd.f32 %v5724, %v5736
    %v5738 = vpop.f32.mrf.mxu0
    %5739 = vdwg.mxu0
    %5740 = vmatpush.bf16.msra.mxu0 %v5151
    %5741 = vmatpush.bf16.msra.mxu0 %v5144
    %5742 = vmatpush.bf16.msra.mxu0 %v5137
    %5743 = vmatpush.bf16.msra.mxu0 %v5130
    %5744 = vmatpush.bf16.msra.mxu0 %v5123
    %5745 = vmatpush.bf16.msra.mxu0 %v5116
    %5746 = vmatpush.bf16.msra.mxu0 %v5109
    %5747 = vmatpush.bf16.msra.mxu0 %v5102
    %5748 = vmatmul.bf16.gmra.mxu0 %v2828
    %v5749 = vpop.f32.mrf.mxu0
    %v5750 = vadd.f32 %v5737, %v5749
    %v5751 = vpop.f32.mrf.mxu0
    %5752 = vdwg.mxu0
    %5753 = vmatpush.bf16.msra.mxu0 %v5207
    %5754 = vmatpush.bf16.msra.mxu0 %v5200
    %5755 = vmatpush.bf16.msra.mxu0 %v5193
    %5756 = vmatpush.bf16.msra.mxu0 %v5186
    %5757 = vmatpush.bf16.msra.mxu0 %v5179
    %5758 = vmatpush.bf16.msra.mxu0 %v5172
    %5759 = vmatpush.bf16.msra.mxu0 %v5165
    %5760 = vmatpush.bf16.msra.mxu0 %v5158
    %5761 = vmatmul.bf16.gmra.mxu0 %v2829
    %v5762 = vpop.f32.mrf.mxu0
    %v5763 = vadd.f32 %v5750, %v5762
    %v5764 = vpop.f32.mrf.mxu0
    %5765 = vdwg.mxu0
    %5766 = vmatpush.bf16.msra.mxu0 %v4816
    %5767 = vmatpush.bf16.msra.mxu0 %v4809
    %5768 = vmatpush.bf16.msra.mxu0 %v4802
    %5769 = vmatpush.bf16.msra.mxu0 %v4795
    %5770 = vmatpush.bf16.msra.mxu0 %v4788
    %5771 = vmatpush.bf16.msra.mxu0 %v4781
    %5772 = vmatpush.bf16.msra.mxu0 %v4774
    %5773 = vmatpush.bf16.msra.mxu0 %v4767
    %5774 = vmatmul.bf16.gmra.mxu0 %v2822
    %v5775 = vpop.f32.mrf.mxu0
    %v5776 = vadd.f32 %v3345, %v5775
    %v5777 = vpop.f32.mrf.mxu0
    %5778 = vdwg.mxu0
    %5779 = vmatpush.bf16.msra.mxu0 %v4872
    %5780 = vmatpush.bf16.msra.mxu0 %v4865
    %5781 = vmatpush.bf16.msra.mxu0 %v4858
    %5782 = vmatpush.bf16.msra.mxu0 %v4851
    %5783 = vmatpush.bf16.msra.mxu0 %v4844
    %5784 = vmatpush.bf16.msra.mxu0 %v4837
    %5785 = vmatpush.bf16.msra.mxu0 %v4830
    %5786 = vmatpush.bf16.msra.mxu0 %v4823
    %5787 = vmatmul.bf16.gmra.mxu0 %v2823
    %v5788 = vpop.f32.mrf.mxu0
    %v5789 = vadd.f32 %v5776, %v5788
    %v5790 = vpop.f32.mrf.mxu0
    %5791 = vdwg.mxu0
    %5792 = vmatpush.bf16.msra.mxu0 %v4928
    %5793 = vmatpush.bf16.msra.mxu0 %v4921
    %5794 = vmatpush.bf16.msra.mxu0 %v4914
    %5795 = vmatpush.bf16.msra.mxu0 %v4907
    %5796 = vmatpush.bf16.msra.mxu0 %v4900
    %5797 = vmatpush.bf16.msra.mxu0 %v4893
    %5798 = vmatpush.bf16.msra.mxu0 %v4886
    %5799 = vmatpush.bf16.msra.mxu0 %v4879
    %5800 = vmatmul.bf16.gmra.mxu0 %v2824
    %v5801 = vpop.f32.mrf.mxu0
    %v5802 = vadd.f32 %v5789, %v5801
    %v5803 = vpop.f32.mrf.mxu0
    %5804 = vdwg.mxu0
    %5805 = vmatpush.bf16.msra.mxu0 %v4984
    %5806 = vmatpush.bf16.msra.mxu0 %v4977
    %5807 = vmatpush.bf16.msra.mxu0 %v4970
    %5808 = vmatpush.bf16.msra.mxu0 %v4963
    %5809 = vmatpush.bf16.msra.mxu0 %v4956
    %5810 = vmatpush.bf16.msra.mxu0 %v4949
    %5811 = vmatpush.bf16.msra.mxu0 %v4942
    %5812 = vmatpush.bf16.msra.mxu0 %v4935
    %5813 = vmatmul.bf16.gmra.mxu0 %v2825
    %v5814 = vpop.f32.mrf.mxu0
    %v5815 = vadd.f32 %v5802, %v5814
    %v5816 = vpop.f32.mrf.mxu0
    %5817 = vdwg.mxu0
    %5818 = vmatpush.bf16.msra.mxu0 %v5040
    %5819 = vmatpush.bf16.msra.mxu0 %v5033
    %5820 = vmatpush.bf16.msra.mxu0 %v5026
    %5821 = vmatpush.bf16.msra.mxu0 %v5019
    %5822 = vmatpush.bf16.msra.mxu0 %v5012
    %5823 = vmatpush.bf16.msra.mxu0 %v5005
    %5824 = vmatpush.bf16.msra.mxu0 %v4998
    %5825 = vmatpush.bf16.msra.mxu0 %v4991
    %5826 = vmatmul.bf16.gmra.mxu0 %v2826
    %v5827 = vpop.f32.mrf.mxu0
    %v5828 = vadd.f32 %v5815, %v5827
    %v5829 = vpop.f32.mrf.mxu0
    %5830 = vdwg.mxu0
    %5831 = vmatpush.bf16.msra.mxu0 %v5096
    %5832 = vmatpush.bf16.msra.mxu0 %v5089
    %5833 = vmatpush.bf16.msra.mxu0 %v5082
    %5834 = vmatpush.bf16.msra.mxu0 %v5075
    %5835 = vmatpush.bf16.msra.mxu0 %v5068
    %5836 = vmatpush.bf16.msra.mxu0 %v5061
    %5837 = vmatpush.bf16.msra.mxu0 %v5054
    %5838 = vmatpush.bf16.msra.mxu0 %v5047
    %5839 = vmatmul.bf16.gmra.mxu0 %v2827
    %v5840 = vpop.f32.mrf.mxu0
    %v5841 = vadd.f32 %v5828, %v5840
    %v5842 = vpop.f32.mrf.mxu0
    %5843 = vdwg.mxu0
    %5844 = vmatpush.bf16.msra.mxu0 %v5152
    %5845 = vmatpush.bf16.msra.mxu0 %v5145
    %5846 = vmatpush.bf16.msra.mxu0 %v5138
    %5847 = vmatpush.bf16.msra.mxu0 %v5131
    %5848 = vmatpush.bf16.msra.mxu0 %v5124
    %5849 = vmatpush.bf16.msra.mxu0 %v5117
    %5850 = vmatpush.bf16.msra.mxu0 %v5110
    %5851 = vmatpush.bf16.msra.mxu0 %v5103
    %5852 = vmatmul.bf16.gmra.mxu0 %v2828
    %v5853 = vpop.f32.mrf.mxu0
    %v5854 = vadd.f32 %v5841, %v5853
    %v5855 = vpop.f32.mrf.mxu0
    %5856 = vdwg.mxu0
    %5857 = vmatpush.bf16.msra.mxu0 %v5208
    %5858 = vmatpush.bf16.msra.mxu0 %v5201
    %5859 = vmatpush.bf16.msra.mxu0 %v5194
    %5860 = vmatpush.bf16.msra.mxu0 %v5187
    %5861 = vmatpush.bf16.msra.mxu0 %v5180
    %5862 = vmatpush.bf16.msra.mxu0 %v5173
    %5863 = vmatpush.bf16.msra.mxu0 %v5166
    %5864 = vmatpush.bf16.msra.mxu0 %v5159
    %5865 = vmatmul.bf16.gmra.mxu0 %v2829
    %v5866 = vpop.f32.mrf.mxu0
    %v5867 = vadd.f32 %v5854, %v5866
    %v5868 = vpop.f32.mrf.mxu0
    %5869 = vdwg.mxu0
    %5870 = vmatpush.bf16.msra.mxu0 %v4817
    %5871 = vmatpush.bf16.msra.mxu0 %v4810
    %5872 = vmatpush.bf16.msra.mxu0 %v4803
    %5873 = vmatpush.bf16.msra.mxu0 %v4796
    %5874 = vmatpush.bf16.msra.mxu0 %v4789
    %5875 = vmatpush.bf16.msra.mxu0 %v4782
    %5876 = vmatpush.bf16.msra.mxu0 %v4775
    %5877 = vmatpush.bf16.msra.mxu0 %v4768
    %5878 = vmatmul.bf16.gmra.mxu0 %v2822
    %v5879 = vpop.f32.mrf.mxu0
    %v5880 = vadd.f32 %v3346, %v5879
    %v5881 = vpop.f32.mrf.mxu0
    %5882 = vdwg.mxu0
    %5883 = vmatpush.bf16.msra.mxu0 %v4873
    %5884 = vmatpush.bf16.msra.mxu0 %v4866
    %5885 = vmatpush.bf16.msra.mxu0 %v4859
    %5886 = vmatpush.bf16.msra.mxu0 %v4852
    %5887 = vmatpush.bf16.msra.mxu0 %v4845
    %5888 = vmatpush.bf16.msra.mxu0 %v4838
    %5889 = vmatpush.bf16.msra.mxu0 %v4831
    %5890 = vmatpush.bf16.msra.mxu0 %v4824
    %5891 = vmatmul.bf16.gmra.mxu0 %v2823
    %v5892 = vpop.f32.mrf.mxu0
    %v5893 = vadd.f32 %v5880, %v5892
    %v5894 = vpop.f32.mrf.mxu0
    %5895 = vdwg.mxu0
    %5896 = vmatpush.bf16.msra.mxu0 %v4929
    %5897 = vmatpush.bf16.msra.mxu0 %v4922
    %5898 = vmatpush.bf16.msra.mxu0 %v4915
    %5899 = vmatpush.bf16.msra.mxu0 %v4908
    %5900 = vmatpush.bf16.msra.mxu0 %v4901
    %5901 = vmatpush.bf16.msra.mxu0 %v4894
    %5902 = vmatpush.bf16.msra.mxu0 %v4887
    %5903 = vmatpush.bf16.msra.mxu0 %v4880
    %5904 = vmatmul.bf16.gmra.mxu0 %v2824
    %v5905 = vpop.f32.mrf.mxu0
    %v5906 = vadd.f32 %v5893, %v5905
    %v5907 = vpop.f32.mrf.mxu0
    %5908 = vdwg.mxu0
    %5909 = vmatpush.bf16.msra.mxu0 %v4985
    %5910 = vmatpush.bf16.msra.mxu0 %v4978
    %5911 = vmatpush.bf16.msra.mxu0 %v4971
    %5912 = vmatpush.bf16.msra.mxu0 %v4964
    %5913 = vmatpush.bf16.msra.mxu0 %v4957
    %5914 = vmatpush.bf16.msra.mxu0 %v4950
    %5915 = vmatpush.bf16.msra.mxu0 %v4943
    %5916 = vmatpush.bf16.msra.mxu0 %v4936
    %5917 = vmatmul.bf16.gmra.mxu0 %v2825
    %v5918 = vpop.f32.mrf.mxu0
    %v5919 = vadd.f32 %v5906, %v5918
    %v5920 = vpop.f32.mrf.mxu0
    %5921 = vdwg.mxu0
    %5922 = vmatpush.bf16.msra.mxu0 %v5041
    %5923 = vmatpush.bf16.msra.mxu0 %v5034
    %5924 = vmatpush.bf16.msra.mxu0 %v5027
    %5925 = vmatpush.bf16.msra.mxu0 %v5020
    %5926 = vmatpush.bf16.msra.mxu0 %v5013
    %5927 = vmatpush.bf16.msra.mxu0 %v5006
    %5928 = vmatpush.bf16.msra.mxu0 %v4999
    %5929 = vmatpush.bf16.msra.mxu0 %v4992
    %5930 = vmatmul.bf16.gmra.mxu0 %v2826
    %v5931 = vpop.f32.mrf.mxu0
    %v5932 = vadd.f32 %v5919, %v5931
    %v5933 = vpop.f32.mrf.mxu0
    %5934 = vdwg.mxu0
    %5935 = vmatpush.bf16.msra.mxu0 %v5097
    %5936 = vmatpush.bf16.msra.mxu0 %v5090
    %5937 = vmatpush.bf16.msra.mxu0 %v5083
    %5938 = vmatpush.bf16.msra.mxu0 %v5076
    %5939 = vmatpush.bf16.msra.mxu0 %v5069
    %5940 = vmatpush.bf16.msra.mxu0 %v5062
    %5941 = vmatpush.bf16.msra.mxu0 %v5055
    %5942 = vmatpush.bf16.msra.mxu0 %v5048
    %5943 = vmatmul.bf16.gmra.mxu0 %v2827
    %v5944 = vpop.f32.mrf.mxu0
    %v5945 = vadd.f32 %v5932, %v5944
    %v5946 = vpop.f32.mrf.mxu0
    %5947 = vdwg.mxu0
    %5948 = vmatpush.bf16.msra.mxu0 %v5153
    %5949 = vmatpush.bf16.msra.mxu0 %v5146
    %5950 = vmatpush.bf16.msra.mxu0 %v5139
    %5951 = vmatpush.bf16.msra.mxu0 %v5132
    %5952 = vmatpush.bf16.msra.mxu0 %v5125
    %5953 = vmatpush.bf16.msra.mxu0 %v5118
    %5954 = vmatpush.bf16.msra.mxu0 %v5111
    %5955 = vmatpush.bf16.msra.mxu0 %v5104
    %5956 = vmatmul.bf16.gmra.mxu0 %v2828
    %v5957 = vpop.f32.mrf.mxu0
    %v5958 = vadd.f32 %v5945, %v5957
    %v5959 = vpop.f32.mrf.mxu0
    %5960 = vdwg.mxu0
    %5961 = vmatpush.bf16.msra.mxu0 %v5209
    %5962 = vmatpush.bf16.msra.mxu0 %v5202
    %5963 = vmatpush.bf16.msra.mxu0 %v5195
    %5964 = vmatpush.bf16.msra.mxu0 %v5188
    %5965 = vmatpush.bf16.msra.mxu0 %v5181
    %5966 = vmatpush.bf16.msra.mxu0 %v5174
    %5967 = vmatpush.bf16.msra.mxu0 %v5167
    %5968 = vmatpush.bf16.msra.mxu0 %v5160
    %5969 = vmatmul.bf16.gmra.mxu0 %v2829
    %v5970 = vpop.f32.mrf.mxu0
    %v5971 = vadd.f32 %v5958, %v5970
    %v5972 = vpop.f32.mrf.mxu0
    %5973 = vdwg.mxu0
    %5974 = vmatpush.bf16.msra.mxu0 %v4818
    %5975 = vmatpush.bf16.msra.mxu0 %v4811
    %5976 = vmatpush.bf16.msra.mxu0 %v4804
    %5977 = vmatpush.bf16.msra.mxu0 %v4797
    %5978 = vmatpush.bf16.msra.mxu0 %v4790
    %5979 = vmatpush.bf16.msra.mxu0 %v4783
    %5980 = vmatpush.bf16.msra.mxu0 %v4776
    %5981 = vmatpush.bf16.msra.mxu0 %v4769
    %5982 = vmatmul.bf16.gmra.mxu0 %v2822
    %v5983 = vpop.f32.mrf.mxu0
    %v5984 = vadd.f32 %v3347, %v5983
    %v5985 = vpop.f32.mrf.mxu0
    %5986 = vdwg.mxu0
    %5987 = vmatpush.bf16.msra.mxu0 %v4874
    %5988 = vmatpush.bf16.msra.mxu0 %v4867
    %5989 = vmatpush.bf16.msra.mxu0 %v4860
    %5990 = vmatpush.bf16.msra.mxu0 %v4853
    %5991 = vmatpush.bf16.msra.mxu0 %v4846
    %5992 = vmatpush.bf16.msra.mxu0 %v4839
    %5993 = vmatpush.bf16.msra.mxu0 %v4832
    %5994 = vmatpush.bf16.msra.mxu0 %v4825
    %5995 = vmatmul.bf16.gmra.mxu0 %v2823
    %v5996 = vpop.f32.mrf.mxu0
    %v5997 = vadd.f32 %v5984, %v5996
    %v5998 = vpop.f32.mrf.mxu0
    %5999 = vdwg.mxu0
    %6000 = vmatpush.bf16.msra.mxu0 %v4930
    %6001 = vmatpush.bf16.msra.mxu0 %v4923
    %6002 = vmatpush.bf16.msra.mxu0 %v4916
    %6003 = vmatpush.bf16.msra.mxu0 %v4909
    %6004 = vmatpush.bf16.msra.mxu0 %v4902
    %6005 = vmatpush.bf16.msra.mxu0 %v4895
    %6006 = vmatpush.bf16.msra.mxu0 %v4888
    %6007 = vmatpush.bf16.msra.mxu0 %v4881
    %6008 = vmatmul.bf16.gmra.mxu0 %v2824
    %v6009 = vpop.f32.mrf.mxu0
    %v6010 = vadd.f32 %v5997, %v6009
    %v6011 = vpop.f32.mrf.mxu0
    %6012 = vdwg.mxu0
    %6013 = vmatpush.bf16.msra.mxu0 %v4986
    %6014 = vmatpush.bf16.msra.mxu0 %v4979
    %6015 = vmatpush.bf16.msra.mxu0 %v4972
    %6016 = vmatpush.bf16.msra.mxu0 %v4965
    %6017 = vmatpush.bf16.msra.mxu0 %v4958
    %6018 = vmatpush.bf16.msra.mxu0 %v4951
    %6019 = vmatpush.bf16.msra.mxu0 %v4944
    %6020 = vmatpush.bf16.msra.mxu0 %v4937
    %6021 = vmatmul.bf16.gmra.mxu0 %v2825
    %v6022 = vpop.f32.mrf.mxu0
    %v6023 = vadd.f32 %v6010, %v6022
    %v6024 = vpop.f32.mrf.mxu0
    %6025 = vdwg.mxu0
    %6026 = vmatpush.bf16.msra.mxu0 %v5042
    %6027 = vmatpush.bf16.msra.mxu0 %v5035
    %6028 = vmatpush.bf16.msra.mxu0 %v5028
    %6029 = vmatpush.bf16.msra.mxu0 %v5021
    %6030 = vmatpush.bf16.msra.mxu0 %v5014
    %6031 = vmatpush.bf16.msra.mxu0 %v5007
    %6032 = vmatpush.bf16.msra.mxu0 %v5000
    %6033 = vmatpush.bf16.msra.mxu0 %v4993
    %6034 = vmatmul.bf16.gmra.mxu0 %v2826
    %v6035 = vpop.f32.mrf.mxu0
    %v6036 = vadd.f32 %v6023, %v6035
    %v6037 = vpop.f32.mrf.mxu0
    %6038 = vdwg.mxu0
    %6039 = vmatpush.bf16.msra.mxu0 %v5098
    %6040 = vmatpush.bf16.msra.mxu0 %v5091
    %6041 = vmatpush.bf16.msra.mxu0 %v5084
    %6042 = vmatpush.bf16.msra.mxu0 %v5077
    %6043 = vmatpush.bf16.msra.mxu0 %v5070
    %6044 = vmatpush.bf16.msra.mxu0 %v5063
    %6045 = vmatpush.bf16.msra.mxu0 %v5056
    %6046 = vmatpush.bf16.msra.mxu0 %v5049
    %6047 = vmatmul.bf16.gmra.mxu0 %v2827
    %v6048 = vpop.f32.mrf.mxu0
    %v6049 = vadd.f32 %v6036, %v6048
    %v6050 = vpop.f32.mrf.mxu0
    %6051 = vdwg.mxu0
    %6052 = vmatpush.bf16.msra.mxu0 %v5154
    %6053 = vmatpush.bf16.msra.mxu0 %v5147
    %6054 = vmatpush.bf16.msra.mxu0 %v5140
    %6055 = vmatpush.bf16.msra.mxu0 %v5133
    %6056 = vmatpush.bf16.msra.mxu0 %v5126
    %6057 = vmatpush.bf16.msra.mxu0 %v5119
    %6058 = vmatpush.bf16.msra.mxu0 %v5112
    %6059 = vmatpush.bf16.msra.mxu0 %v5105
    %6060 = vmatmul.bf16.gmra.mxu0 %v2828
    %v6061 = vpop.f32.mrf.mxu0
    %v6062 = vadd.f32 %v6049, %v6061
    %v6063 = vpop.f32.mrf.mxu0
    %6064 = vdwg.mxu0
    %6065 = vmatpush.bf16.msra.mxu0 %v5210
    %6066 = vmatpush.bf16.msra.mxu0 %v5203
    %6067 = vmatpush.bf16.msra.mxu0 %v5196
    %6068 = vmatpush.bf16.msra.mxu0 %v5189
    %6069 = vmatpush.bf16.msra.mxu0 %v5182
    %6070 = vmatpush.bf16.msra.mxu0 %v5175
    %6071 = vmatpush.bf16.msra.mxu0 %v5168
    %6072 = vmatpush.bf16.msra.mxu0 %v5161
    %6073 = vmatmul.bf16.gmra.mxu0 %v2829
    %v6074 = vpop.f32.mrf.mxu0
    %v6075 = vadd.f32 %v6062, %v6074
    %v6076 = vpop.f32.mrf.mxu0
    %6077 = vdwg.mxu0
    %6078 = vmatpush.bf16.msra.mxu0 %v4819
    %6079 = vmatpush.bf16.msra.mxu0 %v4812
    %6080 = vmatpush.bf16.msra.mxu0 %v4805
    %6081 = vmatpush.bf16.msra.mxu0 %v4798
    %6082 = vmatpush.bf16.msra.mxu0 %v4791
    %6083 = vmatpush.bf16.msra.mxu0 %v4784
    %6084 = vmatpush.bf16.msra.mxu0 %v4777
    %6085 = vmatpush.bf16.msra.mxu0 %v4770
    %6086 = vmatmul.bf16.gmra.mxu0 %v2822
    %v6087 = vpop.f32.mrf.mxu0
    %v6088 = vadd.f32 %v3348, %v6087
    %v6089 = vpop.f32.mrf.mxu0
    %6090 = vdwg.mxu0
    %6091 = vmatpush.bf16.msra.mxu0 %v4875
    %6092 = vmatpush.bf16.msra.mxu0 %v4868
    %6093 = vmatpush.bf16.msra.mxu0 %v4861
    %6094 = vmatpush.bf16.msra.mxu0 %v4854
    %6095 = vmatpush.bf16.msra.mxu0 %v4847
    %6096 = vmatpush.bf16.msra.mxu0 %v4840
    %6097 = vmatpush.bf16.msra.mxu0 %v4833
    %6098 = vmatpush.bf16.msra.mxu0 %v4826
    %6099 = vmatmul.bf16.gmra.mxu0 %v2823
    %v6100 = vpop.f32.mrf.mxu0
    %v6101 = vadd.f32 %v6088, %v6100
    %v6102 = vpop.f32.mrf.mxu0
    %6103 = vdwg.mxu0
    %6104 = vmatpush.bf16.msra.mxu0 %v4931
    %6105 = vmatpush.bf16.msra.mxu0 %v4924
    %6106 = vmatpush.bf16.msra.mxu0 %v4917
    %6107 = vmatpush.bf16.msra.mxu0 %v4910
    %6108 = vmatpush.bf16.msra.mxu0 %v4903
    %6109 = vmatpush.bf16.msra.mxu0 %v4896
    %6110 = vmatpush.bf16.msra.mxu0 %v4889
    %6111 = vmatpush.bf16.msra.mxu0 %v4882
    %6112 = vmatmul.bf16.gmra.mxu0 %v2824
    %v6113 = vpop.f32.mrf.mxu0
    %v6114 = vadd.f32 %v6101, %v6113
    %v6115 = vpop.f32.mrf.mxu0
    %6116 = vdwg.mxu0
    %6117 = vmatpush.bf16.msra.mxu0 %v4987
    %6118 = vmatpush.bf16.msra.mxu0 %v4980
    %6119 = vmatpush.bf16.msra.mxu0 %v4973
    %6120 = vmatpush.bf16.msra.mxu0 %v4966
    %6121 = vmatpush.bf16.msra.mxu0 %v4959
    %6122 = vmatpush.bf16.msra.mxu0 %v4952
    %6123 = vmatpush.bf16.msra.mxu0 %v4945
    %6124 = vmatpush.bf16.msra.mxu0 %v4938
    %6125 = vmatmul.bf16.gmra.mxu0 %v2825
    %v6126 = vpop.f32.mrf.mxu0
    %v6127 = vadd.f32 %v6114, %v6126
    %v6128 = vpop.f32.mrf.mxu0
    %6129 = vdwg.mxu0
    %6130 = vmatpush.bf16.msra.mxu0 %v5043
    %6131 = vmatpush.bf16.msra.mxu0 %v5036
    %6132 = vmatpush.bf16.msra.mxu0 %v5029
    %6133 = vmatpush.bf16.msra.mxu0 %v5022
    %6134 = vmatpush.bf16.msra.mxu0 %v5015
    %6135 = vmatpush.bf16.msra.mxu0 %v5008
    %6136 = vmatpush.bf16.msra.mxu0 %v5001
    %6137 = vmatpush.bf16.msra.mxu0 %v4994
    %6138 = vmatmul.bf16.gmra.mxu0 %v2826
    %v6139 = vpop.f32.mrf.mxu0
    %v6140 = vadd.f32 %v6127, %v6139
    %v6141 = vpop.f32.mrf.mxu0
    %6142 = vdwg.mxu0
    %6143 = vmatpush.bf16.msra.mxu0 %v5099
    %6144 = vmatpush.bf16.msra.mxu0 %v5092
    %6145 = vmatpush.bf16.msra.mxu0 %v5085
    %6146 = vmatpush.bf16.msra.mxu0 %v5078
    %6147 = vmatpush.bf16.msra.mxu0 %v5071
    %6148 = vmatpush.bf16.msra.mxu0 %v5064
    %6149 = vmatpush.bf16.msra.mxu0 %v5057
    %6150 = vmatpush.bf16.msra.mxu0 %v5050
    %6151 = vmatmul.bf16.gmra.mxu0 %v2827
    %v6152 = vpop.f32.mrf.mxu0
    %v6153 = vadd.f32 %v6140, %v6152
    %v6154 = vpop.f32.mrf.mxu0
    %6155 = vdwg.mxu0
    %6156 = vmatpush.bf16.msra.mxu0 %v5155
    %6157 = vmatpush.bf16.msra.mxu0 %v5148
    %6158 = vmatpush.bf16.msra.mxu0 %v5141
    %6159 = vmatpush.bf16.msra.mxu0 %v5134
    %6160 = vmatpush.bf16.msra.mxu0 %v5127
    %6161 = vmatpush.bf16.msra.mxu0 %v5120
    %6162 = vmatpush.bf16.msra.mxu0 %v5113
    %6163 = vmatpush.bf16.msra.mxu0 %v5106
    %6164 = vmatmul.bf16.gmra.mxu0 %v2828
    %v6165 = vpop.f32.mrf.mxu0
    %v6166 = vadd.f32 %v6153, %v6165
    %v6167 = vpop.f32.mrf.mxu0
    %6168 = vdwg.mxu0
    %6169 = vmatpush.bf16.msra.mxu0 %v5211
    %6170 = vmatpush.bf16.msra.mxu0 %v5204
    %6171 = vmatpush.bf16.msra.mxu0 %v5197
    %6172 = vmatpush.bf16.msra.mxu0 %v5190
    %6173 = vmatpush.bf16.msra.mxu0 %v5183
    %6174 = vmatpush.bf16.msra.mxu0 %v5176
    %6175 = vmatpush.bf16.msra.mxu0 %v5169
    %6176 = vmatpush.bf16.msra.mxu0 %v5162
    %6177 = vmatmul.bf16.gmra.mxu0 %v2829
    %v6178 = vpop.f32.mrf.mxu0
    %v6179 = vadd.f32 %v6166, %v6178
    %v6180 = vpop.f32.mrf.mxu0
    %6181 = vdwg.mxu0
    %6182 = vmatpush.bf16.msra.mxu0 %v4820
    %6183 = vmatpush.bf16.msra.mxu0 %v4813
    %6184 = vmatpush.bf16.msra.mxu0 %v4806
    %6185 = vmatpush.bf16.msra.mxu0 %v4799
    %6186 = vmatpush.bf16.msra.mxu0 %v4792
    %6187 = vmatpush.bf16.msra.mxu0 %v4785
    %6188 = vmatpush.bf16.msra.mxu0 %v4778
    %6189 = vmatpush.bf16.msra.mxu0 %v4771
    %6190 = vmatmul.bf16.gmra.mxu0 %v2822
    %v6191 = vpop.f32.mrf.mxu0
    %v6192 = vadd.f32 %v3349, %v6191
    %v6193 = vpop.f32.mrf.mxu0
    %6194 = vdwg.mxu0
    %6195 = vmatpush.bf16.msra.mxu0 %v4876
    %6196 = vmatpush.bf16.msra.mxu0 %v4869
    %6197 = vmatpush.bf16.msra.mxu0 %v4862
    %6198 = vmatpush.bf16.msra.mxu0 %v4855
    %6199 = vmatpush.bf16.msra.mxu0 %v4848
    %6200 = vmatpush.bf16.msra.mxu0 %v4841
    %6201 = vmatpush.bf16.msra.mxu0 %v4834
    %6202 = vmatpush.bf16.msra.mxu0 %v4827
    %6203 = vmatmul.bf16.gmra.mxu0 %v2823
    %v6204 = vpop.f32.mrf.mxu0
    %v6205 = vadd.f32 %v6192, %v6204
    %v6206 = vpop.f32.mrf.mxu0
    %6207 = vdwg.mxu0
    %6208 = vmatpush.bf16.msra.mxu0 %v4932
    %6209 = vmatpush.bf16.msra.mxu0 %v4925
    %6210 = vmatpush.bf16.msra.mxu0 %v4918
    %6211 = vmatpush.bf16.msra.mxu0 %v4911
    %6212 = vmatpush.bf16.msra.mxu0 %v4904
    %6213 = vmatpush.bf16.msra.mxu0 %v4897
    %6214 = vmatpush.bf16.msra.mxu0 %v4890
    %6215 = vmatpush.bf16.msra.mxu0 %v4883
    %6216 = vmatmul.bf16.gmra.mxu0 %v2824
    %v6217 = vpop.f32.mrf.mxu0
    %v6218 = vadd.f32 %v6205, %v6217
    %v6219 = vpop.f32.mrf.mxu0
    %6220 = vdwg.mxu0
    %6221 = vmatpush.bf16.msra.mxu0 %v4988
    %6222 = vmatpush.bf16.msra.mxu0 %v4981
    %6223 = vmatpush.bf16.msra.mxu0 %v4974
    %6224 = vmatpush.bf16.msra.mxu0 %v4967
    %6225 = vmatpush.bf16.msra.mxu0 %v4960
    %6226 = vmatpush.bf16.msra.mxu0 %v4953
    %6227 = vmatpush.bf16.msra.mxu0 %v4946
    %6228 = vmatpush.bf16.msra.mxu0 %v4939
    %6229 = vmatmul.bf16.gmra.mxu0 %v2825
    %v6230 = vpop.f32.mrf.mxu0
    %v6231 = vadd.f32 %v6218, %v6230
    %v6232 = vpop.f32.mrf.mxu0
    %6233 = vdwg.mxu0
    %6234 = vmatpush.bf16.msra.mxu0 %v5044
    %6235 = vmatpush.bf16.msra.mxu0 %v5037
    %6236 = vmatpush.bf16.msra.mxu0 %v5030
    %6237 = vmatpush.bf16.msra.mxu0 %v5023
    %6238 = vmatpush.bf16.msra.mxu0 %v5016
    %6239 = vmatpush.bf16.msra.mxu0 %v5009
    %6240 = vmatpush.bf16.msra.mxu0 %v5002
    %6241 = vmatpush.bf16.msra.mxu0 %v4995
    %6242 = vmatmul.bf16.gmra.mxu0 %v2826
    %v6243 = vpop.f32.mrf.mxu0
    %v6244 = vadd.f32 %v6231, %v6243
    %v6245 = vpop.f32.mrf.mxu0
    %6246 = vdwg.mxu0
    %6247 = vmatpush.bf16.msra.mxu0 %v5100
    %6248 = vmatpush.bf16.msra.mxu0 %v5093
    %6249 = vmatpush.bf16.msra.mxu0 %v5086
    %6250 = vmatpush.bf16.msra.mxu0 %v5079
    %6251 = vmatpush.bf16.msra.mxu0 %v5072
    %6252 = vmatpush.bf16.msra.mxu0 %v5065
    %6253 = vmatpush.bf16.msra.mxu0 %v5058
    %6254 = vmatpush.bf16.msra.mxu0 %v5051
    %6255 = vmatmul.bf16.gmra.mxu0 %v2827
    %v6256 = vpop.f32.mrf.mxu0
    %v6257 = vadd.f32 %v6244, %v6256
    %v6258 = vpop.f32.mrf.mxu0
    %6259 = vdwg.mxu0
    %6260 = vmatpush.bf16.msra.mxu0 %v5156
    %6261 = vmatpush.bf16.msra.mxu0 %v5149
    %6262 = vmatpush.bf16.msra.mxu0 %v5142
    %6263 = vmatpush.bf16.msra.mxu0 %v5135
    %6264 = vmatpush.bf16.msra.mxu0 %v5128
    %6265 = vmatpush.bf16.msra.mxu0 %v5121
    %6266 = vmatpush.bf16.msra.mxu0 %v5114
    %6267 = vmatpush.bf16.msra.mxu0 %v5107
    %6268 = vmatmul.bf16.gmra.mxu0 %v2828
    %v6269 = vpop.f32.mrf.mxu0
    %v6270 = vadd.f32 %v6257, %v6269
    %v6271 = vpop.f32.mrf.mxu0
    %6272 = vdwg.mxu0
    %6273 = vmatpush.bf16.msra.mxu0 %v5212
    %6274 = vmatpush.bf16.msra.mxu0 %v5205
    %6275 = vmatpush.bf16.msra.mxu0 %v5198
    %6276 = vmatpush.bf16.msra.mxu0 %v5191
    %6277 = vmatpush.bf16.msra.mxu0 %v5184
    %6278 = vmatpush.bf16.msra.mxu0 %v5177
    %6279 = vmatpush.bf16.msra.mxu0 %v5170
    %6280 = vmatpush.bf16.msra.mxu0 %v5163
    %6281 = vmatmul.bf16.gmra.mxu0 %v2829
    %v6282 = vpop.f32.mrf.mxu0
    %v6283 = vadd.f32 %v6270, %v6282
    %v6284 = vpop.f32.mrf.mxu0
    %6285 = vdwg.mxu0
    %6286 = vmatpush.bf16.msra.mxu0 %v4821
    %6287 = vmatpush.bf16.msra.mxu0 %v4814
    %6288 = vmatpush.bf16.msra.mxu0 %v4807
    %6289 = vmatpush.bf16.msra.mxu0 %v4800
    %6290 = vmatpush.bf16.msra.mxu0 %v4793
    %6291 = vmatpush.bf16.msra.mxu0 %v4786
    %6292 = vmatpush.bf16.msra.mxu0 %v4779
    %6293 = vmatpush.bf16.msra.mxu0 %v4772
    %6294 = vmatmul.bf16.gmra.mxu0 %v2822
    %v6295 = vpop.f32.mrf.mxu0
    %v6296 = vadd.f32 %v3350, %v6295
    %v6297 = vpop.f32.mrf.mxu0
    %6298 = vdwg.mxu0
    %6299 = vmatpush.bf16.msra.mxu0 %v4877
    %6300 = vmatpush.bf16.msra.mxu0 %v4870
    %6301 = vmatpush.bf16.msra.mxu0 %v4863
    %6302 = vmatpush.bf16.msra.mxu0 %v4856
    %6303 = vmatpush.bf16.msra.mxu0 %v4849
    %6304 = vmatpush.bf16.msra.mxu0 %v4842
    %6305 = vmatpush.bf16.msra.mxu0 %v4835
    %6306 = vmatpush.bf16.msra.mxu0 %v4828
    %6307 = vmatmul.bf16.gmra.mxu0 %v2823
    %v6308 = vpop.f32.mrf.mxu0
    %v6309 = vadd.f32 %v6296, %v6308
    %v6310 = vpop.f32.mrf.mxu0
    %6311 = vdwg.mxu0
    %6312 = vmatpush.bf16.msra.mxu0 %v4933
    %6313 = vmatpush.bf16.msra.mxu0 %v4926
    %6314 = vmatpush.bf16.msra.mxu0 %v4919
    %6315 = vmatpush.bf16.msra.mxu0 %v4912
    %6316 = vmatpush.bf16.msra.mxu0 %v4905
    %6317 = vmatpush.bf16.msra.mxu0 %v4898
    %6318 = vmatpush.bf16.msra.mxu0 %v4891
    %6319 = vmatpush.bf16.msra.mxu0 %v4884
    %6320 = vmatmul.bf16.gmra.mxu0 %v2824
    %v6321 = vpop.f32.mrf.mxu0
    %v6322 = vadd.f32 %v6309, %v6321
    %v6323 = vpop.f32.mrf.mxu0
    %6324 = vdwg.mxu0
    %6325 = vmatpush.bf16.msra.mxu0 %v4989
    %6326 = vmatpush.bf16.msra.mxu0 %v4982
    %6327 = vmatpush.bf16.msra.mxu0 %v4975
    %6328 = vmatpush.bf16.msra.mxu0 %v4968
    %6329 = vmatpush.bf16.msra.mxu0 %v4961
    %6330 = vmatpush.bf16.msra.mxu0 %v4954
    %6331 = vmatpush.bf16.msra.mxu0 %v4947
    %6332 = vmatpush.bf16.msra.mxu0 %v4940
    %6333 = vmatmul.bf16.gmra.mxu0 %v2825
    %v6334 = vpop.f32.mrf.mxu0
    %v6335 = vadd.f32 %v6322, %v6334
    %v6336 = vpop.f32.mrf.mxu0
    %6337 = vdwg.mxu0
    %6338 = vmatpush.bf16.msra.mxu0 %v5045
    %6339 = vmatpush.bf16.msra.mxu0 %v5038
    %6340 = vmatpush.bf16.msra.mxu0 %v5031
    %6341 = vmatpush.bf16.msra.mxu0 %v5024
    %6342 = vmatpush.bf16.msra.mxu0 %v5017
    %6343 = vmatpush.bf16.msra.mxu0 %v5010
    %6344 = vmatpush.bf16.msra.mxu0 %v5003
    %6345 = vmatpush.bf16.msra.mxu0 %v4996
    %6346 = vmatmul.bf16.gmra.mxu0 %v2826
    %v6347 = vpop.f32.mrf.mxu0
    %v6348 = vadd.f32 %v6335, %v6347
    %v6349 = vpop.f32.mrf.mxu0
    %6350 = vdwg.mxu0
    %6351 = vmatpush.bf16.msra.mxu0 %v5101
    %6352 = vmatpush.bf16.msra.mxu0 %v5094
    %6353 = vmatpush.bf16.msra.mxu0 %v5087
    %6354 = vmatpush.bf16.msra.mxu0 %v5080
    %6355 = vmatpush.bf16.msra.mxu0 %v5073
    %6356 = vmatpush.bf16.msra.mxu0 %v5066
    %6357 = vmatpush.bf16.msra.mxu0 %v5059
    %6358 = vmatpush.bf16.msra.mxu0 %v5052
    %6359 = vmatmul.bf16.gmra.mxu0 %v2827
    %v6360 = vpop.f32.mrf.mxu0
    %v6361 = vadd.f32 %v6348, %v6360
    %v6362 = vpop.f32.mrf.mxu0
    %6363 = vdwg.mxu0
    %6364 = vmatpush.bf16.msra.mxu0 %v5157
    %6365 = vmatpush.bf16.msra.mxu0 %v5150
    %6366 = vmatpush.bf16.msra.mxu0 %v5143
    %6367 = vmatpush.bf16.msra.mxu0 %v5136
    %6368 = vmatpush.bf16.msra.mxu0 %v5129
    %6369 = vmatpush.bf16.msra.mxu0 %v5122
    %6370 = vmatpush.bf16.msra.mxu0 %v5115
    %6371 = vmatpush.bf16.msra.mxu0 %v5108
    %6372 = vmatmul.bf16.gmra.mxu0 %v2828
    %v6373 = vpop.f32.mrf.mxu0
    %v6374 = vadd.f32 %v6361, %v6373
    %v6375 = vpop.f32.mrf.mxu0
    %6376 = vdwg.mxu0
    %6377 = vmatpush.bf16.msra.mxu0 %v5213
    %6378 = vmatpush.bf16.msra.mxu0 %v5206
    %6379 = vmatpush.bf16.msra.mxu0 %v5199
    %6380 = vmatpush.bf16.msra.mxu0 %v5192
    %6381 = vmatpush.bf16.msra.mxu0 %v5185
    %6382 = vmatpush.bf16.msra.mxu0 %v5178
    %6383 = vmatpush.bf16.msra.mxu0 %v5171
    %6384 = vmatpush.bf16.msra.mxu0 %v5164
    %6385 = vmatmul.bf16.gmra.mxu0 %v2829
    %v6386 = vpop.f32.mrf.mxu0
    %v6387 = vadd.f32 %v6374, %v6386
    %v6388 = vpop.f32.mrf.mxu0
    %6389 = vdwg.mxu0
    %v6390 = vtanh.pop %v5763
    %v6391 = vtanh.pop %v5867
    %v6392 = vtanh.pop %v5971
    %v6393 = vtanh.pop %v6075
    %v6394 = vtanh.pop %v6179
    %v6395 = vtanh.pop %v6283
    %v6396 = vtanh.pop %v6387
    %6397 = vst [vmem:[#allocation17] sm:$0xff] %v6390
    %6398 = vst [vmem:[#allocation17 + $0x8] sm:$0xff] %v6391
    %6399 = vst [vmem:[#allocation17 + $0x10] sm:$0xff] %v6392
    %6400 = vst [vmem:[#allocation17 + $0x18] sm:$0xff] %v6393
    %6401 = vst [vmem:[#allocation17 + $0x20] sm:$0xff] %v6394
    %6402 = vst [vmem:[#allocation17 + $0x28] sm:$0xff] %v6395
    %6403 = vst [vmem:[#allocation17 + $0x30] sm:$0xff] %v6396
    // Predicated region
    $region74: #{tpu_custom_call.1} parent=1 // pred_check
      _
    $region75: #{tpu_custom_call.1} parent=1 // pred_check_branch
      %6405 = sbr.rel (0) target = $region77
    $region76: #{tpu_custom_call.1} parent=1 // pred_region
      %6407 = vsyncadd [#allocation4], 0
      %s6409 = sshll.u32 [#allocation17], 4
      %s6410 = int_to_ptr.vmem [resolvable:$true] %s6409
      %s6411 = sshll.u32 %s9, 4
      %s6412 = int_to_ptr.hbm [resolvable:$true] %s6411
      %6414 = dma.vmem_to_hbm [thread:$0]  %s6410, 896, %s6412, [#allocation4]
    $region77: #{tpu_custom_call.1} parent=1 // pred_fallthru
      _
    // Predicated region
    $region78: #{tpu_custom_call.1} parent=1 // pred_check
      _
    $region79: #{tpu_custom_call.1} parent=1 // pred_check_branch
      %6416 = sbr.rel (0) target = $region81
    $region80: #{tpu_custom_call.1} parent=1 // pred_region
      %6418 = dma.done [#allocation4], 896
    $region81: #{tpu_custom_call.1} parent=1 // pred_fallthru
      _
    %6419 = vsyncpa [#allocation3], 1
    %6420 = vsyncpa [#allocation6], 1
    %6421 = vsyncpa [#allocation9], 1
    %6422 = vsyncpa [#allocation12], 1
    %6423 = vsyncpa [#allocation15], 1
    %6424 = vsyncpa [#allocation4], 1

</llo_original>
